<compile_context>
chip_gen: v5e
topology: v5e:2x2
jax: 0.10.0
libtpu: 0.0.40
codegen_flags: <defaults>
</compile_context>

<pallas_src>
import functools

import numpy as np
import jax
import jax.numpy as jnp
from jax.experimental import pallas as pl
from jax.experimental.pallas import tpu as pltpu


# ----------------------------------------------------------------------------
# Fused WIRE kernel
# ----------------------------------------------------------------------------
def _wire_fused_kernel(coords_ref, w1_ref, b1_ref,
                       whr_ref, whi_ref, bhr_ref, bhi_ref,
                       wlr_ref, wli_ref, blr_ref, bli_ref,
                       or_ref, oi_ref,
                       *, first_w0, hidden_w0, s0, n_hidden):
    """Entire WIRE network on one (C, tn) column-tile of coordinates.

    Activations are (channels, tn): N on lanes (dense vregs, unmasked stores).
    Weights stay untransposed (out, in): z^T = W @ x^T + b.
    Gabor for complex z = zr + i*zi:
        exp(1j*w0*z - |s0*z|^2)
          = exp(-w0*zi - s0^2*(zr^2+zi^2)) * (cos(w0*zr) + 1j*sin(w0*zr))
    """
    s0sq = s0 * s0

    # ---- first layer: real Linear(2 -> hidden) + complex Gabor ----
    # K = 2 contraction on the VPU (two broadcast FMAs); the MXU stays free.
    x = coords_ref[...]                                     # (2, tn)
    w1 = w1_ref[...]                                        # (hidden, 2)
    z = (w1[:, 0:1] * x[0:1, :]
         + w1[:, 1:2] * x[1:2, :]
         + b1_ref[...])                                     # (hidden, tn)
    amp = jnp.exp(-s0sq * (z * z))
    wz = first_w0 * z
    hr = amp * jnp.cos(wz)
    hi = amp * jnp.sin(wz)

    # ---- hidden complex Gabor layers (statically unrolled; n_hidden small) ---
    for l in range(n_hidden):
        wr = whr_ref[l]                                     # (hidden, hidden)
        wi = whi_ref[l]
        zr = (jnp.dot(wr, hr, preferred_element_type=jnp.float32)
              - jnp.dot(wi, hi, preferred_element_type=jnp.float32)
              + bhr_ref[l])
        zi = (jnp.dot(wr, hi, preferred_element_type=jnp.float32)
              + jnp.dot(wi, hr, preferred_element_type=jnp.float32)
              + bhi_ref[l])
        amp = jnp.exp(-hidden_w0 * zi - s0sq * (zr * zr + zi * zi))
        wzr = hidden_w0 * zr
        hr = amp * jnp.cos(wzr)
        hi = amp * jnp.sin(wzr)

    # ---- final complex Linear (no activation) ----
    wr = wlr_ref[...]                                       # (out, hidden)
    wi = wli_ref[...]
    or_ref[...] = (jnp.dot(wr, hr, preferred_element_type=jnp.float32)
                   - jnp.dot(wi, hi, preferred_element_type=jnp.float32)
                   + blr_ref[...])
    oi_ref[...] = (jnp.dot(wr, hi, preferred_element_type=jnp.float32)
                   + jnp.dot(wi, hr, preferred_element_type=jnp.float32)
                   + bli_ref[...])


# ----------------------------------------------------------------------------
# pallas_call wrapper
# ----------------------------------------------------------------------------
def wire_forward_fused(coords_t, weights, *, first_w0, hidden_w0, scale,
                       n_hidden, tn):
    (w1, b1, whr, whi, bhr, bhi, wlr, wli, blr, bli) = weights
    cin, n_pad = coords_t.shape
    cout = wlr.shape[0]
    assert n_pad % tn == 0 and tn % 128 == 0

    def full(arr):
        shape = arr.shape
        return pl.BlockSpec(shape, lambda i, _s=shape: (0,) * len(_s))

    kern = functools.partial(_wire_fused_kernel, first_w0=first_w0,
                             hidden_w0=hidden_w0, s0=scale, n_hidden=n_hidden)
    out_re, out_im = pl.pallas_call(
        kern,
        out_shape=(jax.ShapeDtypeStruct((cout, n_pad), jnp.float32),
                   jax.ShapeDtypeStruct((cout, n_pad), jnp.float32)),
        grid_spec=pltpu.PrefetchScalarGridSpec(
            num_scalar_prefetch=0,
            grid=(n_pad // tn,),
            in_specs=[
                pl.BlockSpec((cin, tn), lambda i: (0, i)),   # coords^T tile
                full(w1), full(b1),
                full(whr), full(whi), full(bhr), full(bhi),
                full(wlr), full(wli), full(blr), full(bli),
            ],
            out_specs=[
                pl.BlockSpec((cout, tn), lambda i: (0, i)),
                pl.BlockSpec((cout, tn), lambda i: (0, i)),
            ],
        ),
        compiler_params=pltpu.CompilerParams(
            dimension_semantics=("parallel",)),
    )(coords_t, w1, b1, whr, whi, bhr, bhi, wlr, wli, blr, bli)
    return out_re, out_im


# ----------------------------------------------------------------------------
# Parameter construction + full WIRE forward
# ----------------------------------------------------------------------------
def make_wire_params(key, in_channels, out_channels, hidden_channels,
                     hidden_layers, hidden_w0):
    """Deterministic synthetic params, shapes matching the PyTorch module."""
    hidden = int(hidden_channels / np.sqrt(2))
    params = {}
    keys = jax.random.split(key, 4 + 4 * hidden_layers + 4)
    ki = iter(range(len(keys)))

    # first layer: real Linear(in_channels -> hidden)
    k = 1.0 / np.sqrt(in_channels)
    params["w_first"] = jax.random.uniform(keys[next(ki)], (hidden, in_channels),
                                           jnp.float32, -k, k)
    params["b_first"] = jax.random.uniform(keys[next(ki)], (hidden,),
                                           jnp.float32, -k, k)

    # hidden layers: complex Linear(hidden -> hidden)
    k = 1.0 / np.sqrt(hidden)
    params["hidden"] = []
    for _ in range(hidden_layers):
        wr = jax.random.uniform(keys[next(ki)], (hidden, hidden), jnp.float32, -k, k)
        wi = jax.random.uniform(keys[next(ki)], (hidden, hidden), jnp.float32, -k, k)
        br = jax.random.uniform(keys[next(ki)], (hidden,), jnp.float32, -k, k)
        bi = jax.random.uniform(keys[next(ki)], (hidden,), jnp.float32, -k, k)
        params["hidden"].append((wr, wi, br, bi))

    # final layer: complex Linear(hidden -> out_channels), custom uniform init
    bound = np.sqrt(6.0 / hidden) / hidden_w0
    params["w_last_re"] = jax.random.uniform(keys[next(ki)], (out_channels, hidden),
                                             jnp.float32, -bound, bound)
    params["w_last_im"] = jax.random.uniform(keys[next(ki)], (out_channels, hidden),
                                             jnp.float32, -bound, bound)
    params["b_last_re"] = jax.random.uniform(keys[next(ki)], (out_channels,),
                                             jnp.float32, -k, k)
    params["b_last_im"] = jax.random.uniform(keys[next(ki)], (out_channels,),
                                             jnp.float32, -k, k)
    params["hidden_dim"] = hidden
    return params


def create_coords(s):
    """(s*s, 2) coordinate grid in [-1, 1], matching WIRE/FINER conventions."""
    lin = jnp.linspace(-1.0, 1.0, s, dtype=jnp.float32)
    yy, xx = jnp.meshgrid(lin, lin, indexing="ij")
    return jnp.stack([yy, xx], axis=-1).reshape(s * s, 2)


def _choose_tile(n, max_tile=512):
    """Lane-aligned (multiple of 128) tile; keep grid >= 2 when possible."""
    if n >= 2 * max_tile:
        return max_tile
    half = pl.cdiv(n, 2)
    return max(128, ((half + 127) // 128) * 128)


def wire_forward(params, x_image, *, first_w0, hidden_w0, scale):
    # forward uses only the spatial size of the image (image_size -> H)
    s = x_image.shape[-2]
    coords = create_coords(s)                               # (N, 2) float32
    n = coords.shape[0]
    hidden = params["hidden_dim"]

    tn = _choose_tile(n)
    n_pad = pl.cdiv(n, tn) * tn

    # transposed, padded coordinates: (2, n_pad) with N on the lane axis
    coords_t = jnp.zeros((2, n_pad), jnp.float32).at[:, :n].set(coords.T)

    # stack hidden-layer weights: (L, hidden, hidden) / (L, hidden, 1)
    n_hidden = len(params["hidden"])
    if n_hidden > 0:
        whr = jnp.stack([w for (w, _, _, _) in params["hidden"]])
        whi = jnp.stack([w for (_, w, _, _) in params["hidden"]])
        bhr = jnp.stack([b[:, None] for (_, _, b, _) in params["hidden"]])
        bhi = jnp.stack([b[:, None] for (_, _, _, b) in params["hidden"]])
    else:  # placeholders (unused when n_hidden == 0)
        whr = jnp.zeros((1, hidden, hidden), jnp.float32)
        whi = jnp.zeros((1, hidden, hidden), jnp.float32)
        bhr = jnp.zeros((1, hidden, 1), jnp.float32)
        bhi = jnp.zeros((1, hidden, 1), jnp.float32)

    weights = (params["w_first"], params["b_first"][:, None],
               whr, whi, bhr, bhi,
               params["w_last_re"], params["w_last_im"],
               params["b_last_re"][:, None], params["b_last_im"][:, None])

    out_re, out_im = wire_forward_fused(
        coords_t, weights, first_w0=first_w0, hidden_w0=hidden_w0,
        scale=scale, n_hidden=n_hidden, tn=tn)

    out_re = out_re[:, :n].T                                # (N, out_channels)
    out_im = out_im[:, :n].T
    return jax.lax.complex(out_re, out_im)                  # complex64


# ----------------------------------------------------------------------------
# Pure-JAX reference (for correctness check)
# ----------------------------------------------------------------------------
def wire_reference(params, x_image, *, first_w0, hidden_w0, scale):
    s = x_image.shape[-2]
    coords = create_coords(s)

    def gabor(z, w0, s0):
        return jnp.exp(1j * w0 * z - jnp.square(jnp.abs(s0 * z)))

    z = coords @ params["w_first"].T + params["b_first"]
    h = gabor(z.astype(jnp.complex64), first_w0, scale)
    for (wr, wi, br, bi) in params["hidden"]:
        w = wr + 1j * wi
        b = br + 1j * bi
        h = gabor(h @ w.T + b, hidden_w0, scale)
    w = params["w_last_re"] + 1j * params["w_last_im"]
    b = params["b_last_re"] + 1j * params["b_last_im"]
    return h @ w.T + b


# ----------------------------------------------------------------------------
if __name__ == "__main__":
    key = jax.random.PRNGKey(0)
    k_img, k_par = jax.random.split(key)

    # small, module-consistent configuration
    in_channels = 2          # coordinate dimension fed to the first layer
    out_channels = 3
    hidden_channels = 32     # internally becomes int(32/sqrt(2)) = 22
    hidden_layers = 2
    first_w0 = 20.0
    hidden_w0 = 20.0
    scale = 10.0

    # input image (NCHW) — only its spatial size is used by WIRE.forward
    x_image = jax.random.normal(k_img, (2, 4, 16, 16), dtype=jnp.float32)

    params = make_wire_params(k_par, in_channels, out_channels,
                              hidden_channels, hidden_layers, hidden_w0)

    out = wire_forward(params, x_image, first_w0=first_w0,
                       hidden_w0=hidden_w0, scale=scale)
    out = jax.block_until_ready(out)

    ref = wire_reference(params, x_image, first_w0=first_w0,
                         hidden_w0=hidden_w0, scale=scale)
    ref = jax.block_until_ready(ref)

    assert out.shape == (16 * 16, out_channels), out.shape
    assert out.dtype == jnp.complex64, out.dtype
    np.testing.assert_allclose(np.asarray(out), np.asarray(ref),
                               rtol=2e-4, atol=2e-5)
    print("KERNEL_OK")
</pallas_src>

<mosaic_0001>
module attributes {stable_mosaic.version = 11 : i64} {
  func.func @_wire_fused_kernel(%arg0: i32, %arg1: memref<2x128xf32, #tpu.memory_space<vmem>>, %arg2: memref<22x2xf32, #tpu.memory_space<vmem>>, %arg3: memref<22x1xf32, #tpu.memory_space<vmem>>, %arg4: memref<2x22x22xf32, #tpu.memory_space<vmem>>, %arg5: memref<2x22x22xf32, #tpu.memory_space<vmem>>, %arg6: memref<2x22x1xf32, #tpu.memory_space<vmem>>, %arg7: memref<2x22x1xf32, #tpu.memory_space<vmem>>, %arg8: memref<3x22xf32, #tpu.memory_space<vmem>>, %arg9: memref<3x22xf32, #tpu.memory_space<vmem>>, %arg10: memref<3x1xf32, #tpu.memory_space<vmem>>, %arg11: memref<3x1xf32, #tpu.memory_space<vmem>>, %arg12: memref<3x128xf32, #tpu.memory_space<vmem>>, %arg13: memref<3x128xf32, #tpu.memory_space<vmem>>) attributes {dimension_semantics = [#tpu.dimension_semantics<parallel>], iteration_bounds = array<i64: 2>, scalar_prefetch = 0 : i64, scratch_operands = 0 : i64, tpu.core_type = #tpu.core_type<tc>, window_params = [{transform_indices = @transform_0, window_bounds = array<i64: 2, 128>}, {pipeline_mode = #tpu.pipeline_mode<synchronous>, transform_indices = @transform_1, window_bounds = array<i64: 22, 2>}, {pipeline_mode = #tpu.pipeline_mode<synchronous>, transform_indices = @transform_2, window_bounds = array<i64: 22, 1>}, {pipeline_mode = #tpu.pipeline_mode<synchronous>, transform_indices = @transform_3, window_bounds = array<i64: 2, 22, 22>}, {pipeline_mode = #tpu.pipeline_mode<synchronous>, transform_indices = @transform_4, window_bounds = array<i64: 2, 22, 22>}, {pipeline_mode = #tpu.pipeline_mode<synchronous>, transform_indices = @transform_5, window_bounds = array<i64: 2, 22, 1>}, {pipeline_mode = #tpu.pipeline_mode<synchronous>, transform_indices = @transform_6, window_bounds = array<i64: 2, 22, 1>}, {pipeline_mode = #tpu.pipeline_mode<synchronous>, transform_indices = @transform_7, window_bounds = array<i64: 3, 22>}, {pipeline_mode = #tpu.pipeline_mode<synchronous>, transform_indices = @transform_8, window_bounds = array<i64: 3, 22>}, {pipeline_mode = #tpu.pipeline_mode<synchronous>, transform_indices = @transform_9, window_bounds = array<i64: 3, 1>}, {pipeline_mode = #tpu.pipeline_mode<synchronous>, transform_indices = @transform_10, window_bounds = array<i64: 3, 1>}, {transform_indices = @transform_11, window_bounds = array<i64: 3, 128>}, {transform_indices = @transform_12, window_bounds = array<i64: 3, 128>}]} {
    %c0 = arith.constant 0 : index
    %c0_0 = arith.constant 0 : index
    %0 = vector.load %arg1[%c0, %c0_0] : memref<2x128xf32, #tpu.memory_space<vmem>>, vector<2x128xf32>
    %c0_1 = arith.constant 0 : index
    %c0_2 = arith.constant 0 : index
    %1 = vector.load %arg2[%c0_1, %c0_2] : memref<22x2xf32, #tpu.memory_space<vmem>>, vector<22x2xf32>
    %2 = vector.extract_strided_slice %1 {offsets = [0, 0], sizes = [22, 1], strides = [1, 1]} : vector<22x2xf32> to vector<22x1xf32>
    %3 = vector.extract_strided_slice %0 {offsets = [0, 0], sizes = [1, 128], strides = [1, 1]} : vector<2x128xf32> to vector<1x128xf32>
    %4 = vector.broadcast %2 : vector<22x1xf32> to vector<22x128xf32>
    %5 = vector.broadcast %3 : vector<1x128xf32> to vector<22x128xf32>
    %6 = arith.mulf %4, %5 : vector<22x128xf32>
    %7 = vector.extract_strided_slice %1 {offsets = [0, 1], sizes = [22, 1], strides = [1, 1]} : vector<22x2xf32> to vector<22x1xf32>
    %8 = vector.extract_strided_slice %0 {offsets = [1, 0], sizes = [1, 128], strides = [1, 1]} : vector<2x128xf32> to vector<1x128xf32>
    %9 = vector.broadcast %7 : vector<22x1xf32> to vector<22x128xf32>
    %10 = vector.broadcast %8 : vector<1x128xf32> to vector<22x128xf32>
    %11 = arith.mulf %9, %10 : vector<22x128xf32>
    %12 = arith.addf %6, %11 : vector<22x128xf32>
    %c0_3 = arith.constant 0 : index
    %c0_4 = arith.constant 0 : index
    %13 = vector.load %arg3[%c0_3, %c0_4] : memref<22x1xf32, #tpu.memory_space<vmem>>, vector<22x1xf32>
    %14 = vector.broadcast %13 : vector<22x1xf32> to vector<22x128xf32>
    %15 = arith.addf %12, %14 : vector<22x128xf32>
    %16 = arith.mulf %15, %15 : vector<22x128xf32>
    %cst = arith.constant -1.000000e+02 : f32
    %17 = vector.broadcast %cst : f32 to vector<22x128xf32>
    %18 = arith.mulf %17, %16 : vector<22x128xf32>
    %19 = math.exp %18 : vector<22x128xf32>
    %cst_5 = arith.constant 2.000000e+01 : f32
    %20 = vector.broadcast %cst_5 : f32 to vector<22x128xf32>
    %21 = arith.mulf %20, %15 : vector<22x128xf32>
    %22 = math.cos %21 : vector<22x128xf32>
    %23 = arith.mulf %19, %22 : vector<22x128xf32>
    %24 = math.sin %21 : vector<22x128xf32>
    %25 = arith.mulf %19, %24 : vector<22x128xf32>
    %c0_6 = arith.constant 0 : index
    %c0_7 = arith.constant 0 : index
    %c0_8 = arith.constant 0 : index
    %26 = vector.load %arg4[%c0_6, %c0_7, %c0_8] : memref<2x22x22xf32, #tpu.memory_space<vmem>>, vector<1x22x22xf32>
    %27 = vector.shape_cast %26 : vector<1x22x22xf32> to vector<22x22xf32>
    %c0_9 = arith.constant 0 : index
    %c0_10 = arith.constant 0 : index
    %c0_11 = arith.constant 0 : index
    %28 = vector.load %arg5[%c0_9, %c0_10, %c0_11] : memref<2x22x22xf32, #tpu.memory_space<vmem>>, vector<1x22x22xf32>
    %29 = vector.shape_cast %28 : vector<1x22x22xf32> to vector<22x22xf32>
    %cst_12 = arith.constant dense<0.000000e+00> : vector<22x128xf32>
    %30 = tpu.matmul %27, %23, %cst_12 {dimension_numbers = #tpu.dot_dimension_numbers<[1], [0], [0], [1], [0, 0, 1, 1], [], []>} : vector<22x22xf32>, vector<22x128xf32>, vector<22x128xf32> -> vector<22x128xf32>
    %cst_13 = arith.constant dense<0.000000e+00> : vector<22x128xf32>
    %31 = tpu.matmul %29, %25, %cst_13 {dimension_numbers = #tpu.dot_dimension_numbers<[1], [0], [0], [1], [0, 0, 1, 1], [], []>} : vector<22x22xf32>, vector<22x128xf32>, vector<22x128xf32> -> vector<22x128xf32>
    %32 = arith.subf %30, %31 : vector<22x128xf32>
    %c0_14 = arith.constant 0 : index
    %c0_15 = arith.constant 0 : index
    %c0_16 = arith.constant 0 : index
    %33 = vector.load %arg6[%c0_14, %c0_15, %c0_16] : memref<2x22x1xf32, #tpu.memory_space<vmem>>, vector<1x22x1xf32>
    %34 = vector.shape_cast %33 : vector<1x22x1xf32> to vector<22x1xf32>
    %35 = vector.broadcast %34 : vector<22x1xf32> to vector<22x128xf32>
    %36 = arith.addf %32, %35 : vector<22x128xf32>
    %cst_17 = arith.constant dense<0.000000e+00> : vector<22x128xf32>
    %37 = tpu.matmul %27, %25, %cst_17 {dimension_numbers = #tpu.dot_dimension_numbers<[1], [0], [0], [1], [0, 0, 1, 1], [], []>} : vector<22x22xf32>, vector<22x128xf32>, vector<22x128xf32> -> vector<22x128xf32>
    %cst_18 = arith.constant dense<0.000000e+00> : vector<22x128xf32>
    %38 = tpu.matmul %29, %23, %cst_18 {dimension_numbers = #tpu.dot_dimension_numbers<[1], [0], [0], [1], [0, 0, 1, 1], [], []>} : vector<22x22xf32>, vector<22x128xf32>, vector<22x128xf32> -> vector<22x128xf32>
    %39 = arith.addf %37, %38 : vector<22x128xf32>
    %c0_19 = arith.constant 0 : index
    %c0_20 = arith.constant 0 : index
    %c0_21 = arith.constant 0 : index
    %40 = vector.load %arg7[%c0_19, %c0_20, %c0_21] : memref<2x22x1xf32, #tpu.memory_space<vmem>>, vector<1x22x1xf32>
    %41 = vector.shape_cast %40 : vector<1x22x1xf32> to vector<22x1xf32>
    %42 = vector.broadcast %41 : vector<22x1xf32> to vector<22x128xf32>
    %43 = arith.addf %39, %42 : vector<22x128xf32>
    %cst_22 = arith.constant -2.000000e+01 : f32
    %44 = vector.broadcast %cst_22 : f32 to vector<22x128xf32>
    %45 = arith.mulf %44, %43 : vector<22x128xf32>
    %46 = arith.mulf %36, %36 : vector<22x128xf32>
    %47 = arith.mulf %43, %43 : vector<22x128xf32>
    %48 = arith.addf %46, %47 : vector<22x128xf32>
    %cst_23 = arith.constant 1.000000e+02 : f32
    %49 = vector.broadcast %cst_23 : f32 to vector<22x128xf32>
    %50 = arith.mulf %49, %48 : vector<22x128xf32>
    %51 = arith.subf %45, %50 : vector<22x128xf32>
    %52 = math.exp %51 : vector<22x128xf32>
    %cst_24 = arith.constant 2.000000e+01 : f32
    %53 = vector.broadcast %cst_24 : f32 to vector<22x128xf32>
    %54 = arith.mulf %53, %36 : vector<22x128xf32>
    %55 = math.cos %54 : vector<22x128xf32>
    %56 = arith.mulf %52, %55 : vector<22x128xf32>
    %57 = math.sin %54 : vector<22x128xf32>
    %58 = arith.mulf %52, %57 : vector<22x128xf32>
    %c1 = arith.constant 1 : index
    %c0_25 = arith.constant 0 : index
    %c0_26 = arith.constant 0 : index
    %59 = vector.load %arg4[%c1, %c0_25, %c0_26] : memref<2x22x22xf32, #tpu.memory_space<vmem>>, vector<1x22x22xf32>
    %60 = vector.shape_cast %59 : vector<1x22x22xf32> to vector<22x22xf32>
    %c1_27 = arith.constant 1 : index
    %c0_28 = arith.constant 0 : index
    %c0_29 = arith.constant 0 : index
    %61 = vector.load %arg5[%c1_27, %c0_28, %c0_29] : memref<2x22x22xf32, #tpu.memory_space<vmem>>, vector<1x22x22xf32>
    %62 = vector.shape_cast %61 : vector<1x22x22xf32> to vector<22x22xf32>
    %cst_30 = arith.constant dense<0.000000e+00> : vector<22x128xf32>
    %63 = tpu.matmul %60, %56, %cst_30 {dimension_numbers = #tpu.dot_dimension_numbers<[1], [0], [0], [1], [0, 0, 1, 1], [], []>} : vector<22x22xf32>, vector<22x128xf32>, vector<22x128xf32> -> vector<22x128xf32>
    %cst_31 = arith.constant dense<0.000000e+00> : vector<22x128xf32>
    %64 = tpu.matmul %62, %58, %cst_31 {dimension_numbers = #tpu.dot_dimension_numbers<[1], [0], [0], [1], [0, 0, 1, 1], [], []>} : vector<22x22xf32>, vector<22x128xf32>, vector<22x128xf32> -> vector<22x128xf32>
    %65 = arith.subf %63, %64 : vector<22x128xf32>
    %c1_32 = arith.constant 1 : index
    %c0_33 = arith.constant 0 : index
    %c0_34 = arith.constant 0 : index
    %66 = vector.load %arg6[%c1_32, %c0_33, %c0_34] : memref<2x22x1xf32, #tpu.memory_space<vmem>>, vector<1x22x1xf32>
    %67 = vector.shape_cast %66 : vector<1x22x1xf32> to vector<22x1xf32>
    %68 = vector.broadcast %67 : vector<22x1xf32> to vector<22x128xf32>
    %69 = arith.addf %65, %68 : vector<22x128xf32>
    %cst_35 = arith.constant dense<0.000000e+00> : vector<22x128xf32>
    %70 = tpu.matmul %60, %58, %cst_35 {dimension_numbers = #tpu.dot_dimension_numbers<[1], [0], [0], [1], [0, 0, 1, 1], [], []>} : vector<22x22xf32>, vector<22x128xf32>, vector<22x128xf32> -> vector<22x128xf32>
    %cst_36 = arith.constant dense<0.000000e+00> : vector<22x128xf32>
    %71 = tpu.matmul %62, %56, %cst_36 {dimension_numbers = #tpu.dot_dimension_numbers<[1], [0], [0], [1], [0, 0, 1, 1], [], []>} : vector<22x22xf32>, vector<22x128xf32>, vector<22x128xf32> -> vector<22x128xf32>
    %72 = arith.addf %70, %71 : vector<22x128xf32>
    %c1_37 = arith.constant 1 : index
    %c0_38 = arith.constant 0 : index
    %c0_39 = arith.constant 0 : index
    %73 = vector.load %arg7[%c1_37, %c0_38, %c0_39] : memref<2x22x1xf32, #tpu.memory_space<vmem>>, vector<1x22x1xf32>
    %74 = vector.shape_cast %73 : vector<1x22x1xf32> to vector<22x1xf32>
    %75 = vector.broadcast %74 : vector<22x1xf32> to vector<22x128xf32>
    %76 = arith.addf %72, %75 : vector<22x128xf32>
    %cst_40 = arith.constant -2.000000e+01 : f32
    %77 = vector.broadcast %cst_40 : f32 to vector<22x128xf32>
    %78 = arith.mulf %77, %76 : vector<22x128xf32>
    %79 = arith.mulf %69, %69 : vector<22x128xf32>
    %80 = arith.mulf %76, %76 : vector<22x128xf32>
    %81 = arith.addf %79, %80 : vector<22x128xf32>
    %cst_41 = arith.constant 1.000000e+02 : f32
    %82 = vector.broadcast %cst_41 : f32 to vector<22x128xf32>
    %83 = arith.mulf %82, %81 : vector<22x128xf32>
    %84 = arith.subf %78, %83 : vector<22x128xf32>
    %85 = math.exp %84 : vector<22x128xf32>
    %cst_42 = arith.constant 2.000000e+01 : f32
    %86 = vector.broadcast %cst_42 : f32 to vector<22x128xf32>
    %87 = arith.mulf %86, %69 : vector<22x128xf32>
    %88 = math.cos %87 : vector<22x128xf32>
    %89 = arith.mulf %85, %88 : vector<22x128xf32>
    %90 = math.sin %87 : vector<22x128xf32>
    %91 = arith.mulf %85, %90 : vector<22x128xf32>
    %c0_43 = arith.constant 0 : index
    %c0_44 = arith.constant 0 : index
    %92 = vector.load %arg8[%c0_43, %c0_44] : memref<3x22xf32, #tpu.memory_space<vmem>>, vector<3x22xf32>
    %c0_45 = arith.constant 0 : index
    %c0_46 = arith.constant 0 : index
    %93 = vector.load %arg9[%c0_45, %c0_46] : memref<3x22xf32, #tpu.memory_space<vmem>>, vector<3x22xf32>
    %cst_47 = arith.constant dense<0.000000e+00> : vector<3x128xf32>
    %94 = tpu.matmul %92, %89, %cst_47 {dimension_numbers = #tpu.dot_dimension_numbers<[1], [0], [0], [1], [0, 0, 1, 1], [], []>} : vector<3x22xf32>, vector<22x128xf32>, vector<3x128xf32> -> vector<3x128xf32>
    %cst_48 = arith.constant dense<0.000000e+00> : vector<3x128xf32>
    %95 = tpu.matmul %93, %91, %cst_48 {dimension_numbers = #tpu.dot_dimension_numbers<[1], [0], [0], [1], [0, 0, 1, 1], [], []>} : vector<3x22xf32>, vector<22x128xf32>, vector<3x128xf32> -> vector<3x128xf32>
    %96 = arith.subf %94, %95 : vector<3x128xf32>
    %c0_49 = arith.constant 0 : index
    %c0_50 = arith.constant 0 : index
    %97 = vector.load %arg10[%c0_49, %c0_50] : memref<3x1xf32, #tpu.memory_space<vmem>>, vector<3x1xf32>
    %98 = vector.broadcast %97 : vector<3x1xf32> to vector<3x128xf32>
    %99 = arith.addf %96, %98 : vector<3x128xf32>
    %c0_51 = arith.constant 0 : index
    %c0_52 = arith.constant 0 : index
    %100 = vector.load %arg12[%c0_51, %c0_52] : memref<3x128xf32, #tpu.memory_space<vmem>>, vector<3x128xf32>
    tpu.vector_store %arg12[%c0_51, %c0_52], %99 {strides = array<i32>} : memref<3x128xf32, #tpu.memory_space<vmem>>, vector<3x128xf32>,
    %cst_53 = arith.constant dense<0.000000e+00> : vector<3x128xf32>
    %101 = tpu.matmul %92, %91, %cst_53 {dimension_numbers = #tpu.dot_dimension_numbers<[1], [0], [0], [1], [0, 0, 1, 1], [], []>} : vector<3x22xf32>, vector<22x128xf32>, vector<3x128xf32> -> vector<3x128xf32>
    %cst_54 = arith.constant dense<0.000000e+00> : vector<3x128xf32>
    %102 = tpu.matmul %93, %89, %cst_54 {dimension_numbers = #tpu.dot_dimension_numbers<[1], [0], [0], [1], [0, 0, 1, 1], [], []>} : vector<3x22xf32>, vector<22x128xf32>, vector<3x128xf32> -> vector<3x128xf32>
    %103 = arith.addf %101, %102 : vector<3x128xf32>
    %c0_55 = arith.constant 0 : index
    %c0_56 = arith.constant 0 : index
    %104 = vector.load %arg11[%c0_55, %c0_56] : memref<3x1xf32, #tpu.memory_space<vmem>>, vector<3x1xf32>
    %105 = vector.broadcast %104 : vector<3x1xf32> to vector<3x128xf32>
    %106 = arith.addf %103, %105 : vector<3x128xf32>
    %c0_57 = arith.constant 0 : index
    %c0_58 = arith.constant 0 : index
    %107 = vector.load %arg13[%c0_57, %c0_58] : memref<3x128xf32, #tpu.memory_space<vmem>>, vector<3x128xf32>
    tpu.vector_store %arg13[%c0_57, %c0_58], %106 {strides = array<i32>} : memref<3x128xf32, #tpu.memory_space<vmem>>, vector<3x128xf32>,
    return
  }
  func.func @transform_0(%arg0: i32) -> (i32, i32) {
    %c0_i32 = arith.constant 0 : i32
    %c0_i32_0 = arith.constant 0 : i32
    return %c0_i32, %arg0 : i32, i32
  }
  func.func @transform_1(%arg0: i32) -> (i32, i32) {
    %c0_i32 = arith.constant 0 : i32
    %c0_i32_0 = arith.constant 0 : i32
    %c0_i32_1 = arith.constant 0 : i32
    return %c0_i32, %c0_i32_0 : i32, i32
  }
  func.func @transform_2(%arg0: i32) -> (i32, i32) {
    %c0_i32 = arith.constant 0 : i32
    %c0_i32_0 = arith.constant 0 : i32
    %c0_i32_1 = arith.constant 0 : i32
    return %c0_i32, %c0_i32_0 : i32, i32
  }
  func.func @transform_3(%arg0: i32) -> (i32, i32, i32) {
    %c0_i32 = arith.constant 0 : i32
    %c0_i32_0 = arith.constant 0 : i32
    %c0_i32_1 = arith.constant 0 : i32
    %c0_i32_2 = arith.constant 0 : i32
    return %c0_i32, %c0_i32_0, %c0_i32_1 : i32, i32, i32
  }
  func.func @transform_4(%arg0: i32) -> (i32, i32, i32) {
    %c0_i32 = arith.constant 0 : i32
    %c0_i32_0 = arith.constant 0 : i32
    %c0_i32_1 = arith.constant 0 : i32
    %c0_i32_2 = arith.constant 0 : i32
    return %c0_i32, %c0_i32_0, %c0_i32_1 : i32, i32, i32
  }
  func.func @transform_5(%arg0: i32) -> (i32, i32, i32) {
    %c0_i32 = arith.constant 0 : i32
    %c0_i32_0 = arith.constant 0 : i32
    %c0_i32_1 = arith.constant 0 : i32
    %c0_i32_2 = arith.constant 0 : i32
    return %c0_i32, %c0_i32_0, %c0_i32_1 : i32, i32, i32
  }
  func.func @transform_6(%arg0: i32) -> (i32, i32, i32) {
    %c0_i32 = arith.constant 0 : i32
    %c0_i32_0 = arith.constant 0 : i32
    %c0_i32_1 = arith.constant 0 : i32
    %c0_i32_2 = arith.constant 0 : i32
    return %c0_i32, %c0_i32_0, %c0_i32_1 : i32, i32, i32
  }
  func.func @transform_7(%arg0: i32) -> (i32, i32) {
    %c0_i32 = arith.constant 0 : i32
    %c0_i32_0 = arith.constant 0 : i32
    %c0_i32_1 = arith.constant 0 : i32
    return %c0_i32, %c0_i32_0 : i32, i32
  }
  func.func @transform_8(%arg0: i32) -> (i32, i32) {
    %c0_i32 = arith.constant 0 : i32
    %c0_i32_0 = arith.constant 0 : i32
    %c0_i32_1 = arith.constant 0 : i32
    return %c0_i32, %c0_i32_0 : i32, i32
  }
  func.func @transform_9(%arg0: i32) -> (i32, i32) {
    %c0_i32 = arith.constant 0 : i32
    %c0_i32_0 = arith.constant 0 : i32
    %c0_i32_1 = arith.constant 0 : i32
    return %c0_i32, %c0_i32_0 : i32, i32
  }
  func.func @transform_10(%arg0: i32) -> (i32, i32) {
    %c0_i32 = arith.constant 0 : i32
    %c0_i32_0 = arith.constant 0 : i32
    %c0_i32_1 = arith.constant 0 : i32
    return %c0_i32, %c0_i32_0 : i32, i32
  }
  func.func @transform_11(%arg0: i32) -> (i32, i32) {
    %c0_i32 = arith.constant 0 : i32
    %c0_i32_0 = arith.constant 0 : i32
    return %c0_i32, %arg0 : i32, i32
  }
  func.func @transform_12(%arg0: i32) -> (i32, i32) {
    %c0_i32 = arith.constant 0 : i32
    %c0_i32_0 = arith.constant 0 : i32
    return %c0_i32, %arg0 : i32, i32
  }
}

</mosaic_0001>

<llo_original>
// kernel: tpu_custom_call.1
$region0: #{tpu_custom_call.1}
  #allocation0 [shape = 'u32[]', space=smem, size = 0x4, offset = 0x4, fixed_abs, tag = 'smem constant byte address 0x4 - core index']
  #allocation1 [shape = 'u32[72,128]{1,0:T(1,128)}', space=vmem, size = 0x9000, scoped, tag = 'internal scratch']
  %s0 = inlined_call_operand.vmem [shape: f32[2,256], index: 0, kind: input, shape index: {}]
  %s1 = inlined_call_operand.vmem [shape: f32[22,2], index: 1, kind: input, shape index: {}]
  %s2 = inlined_call_operand.vmem [shape: f32[22,1], index: 2, kind: input, shape index: {}]
  %s3 = inlined_call_operand.vmem [shape: f32[2,22,22], index: 3, kind: input, shape index: {}]
  %s4 = inlined_call_operand.vmem [shape: f32[2,22,22], index: 4, kind: input, shape index: {}]
  %s5 = inlined_call_operand.vmem [shape: f32[2,22,1], index: 5, kind: input, shape index: {}]
  %s6 = inlined_call_operand.vmem [shape: f32[2,22,1], index: 6, kind: input, shape index: {}]
  %s7 = inlined_call_operand.vmem [shape: f32[3,22], index: 7, kind: input, shape index: {}]
  %s8 = inlined_call_operand.vmem [shape: f32[3,22], index: 8, kind: input, shape index: {}]
  %s9 = inlined_call_operand.vmem [shape: f32[3,1], index: 9, kind: input, shape index: {}]
  %s10 = inlined_call_operand.vmem [shape: f32[3,1], index: 10, kind: input, shape index: {}]
  %s11 = inlined_call_operand.hbm [shape: f32[3,256], index: 11, kind: output, shape index: {0}]
  %s12 = inlined_call_operand.hbm [shape: f32[3,256], index: 12, kind: output, shape index: {1}]
  %13 = xla_tuple %s11, %s12
  %s14 = sld [smem:[#allocation0]]
  $region85: #{tpu_custom_call.1} parent=0
    _
  %s16 = ssub.s32 1, %s14
  %s17 = scalar_select 0, %s16, %s14
  $region1: #{tpu_custom_call.1} parent=0
    #allocation2 [shape = 'u8[4096]{0}', space=vmem, size = 0x1000, scoped, tag = 'output window, operand 0']
    #allocation3 [shape = 's32[2]{0}', space=sflag, size = 0x8, scoped, tag = 'scoped memory for tpu_custom_call.1']
    #allocation4 [shape = 'u8[4096]{0}', space=vmem, size = 0x1000, scoped, tag = 'output window, operand 1']
    #allocation5 [shape = 's32[2]{0}', space=sflag, size = 0x8, scoped, tag = 'scoped memory for tpu_custom_call.1']
    %18 = vsyncpa [#allocation3], 0
    %s19 = scalar_lea.sflag [#allocation3], 1
    %20 = vsyncpa %s19, 0
    %21 = vsyncpa [#allocation5], 0
    %s22 = scalar_lea.sflag [#allocation5], 1
    %23 = vsyncpa %s22, 0
    loop: start=0, step=1, limit=4
    $region2: #{tpu_custom_call.1} parent=1 // loop_pre_header
      _
    $region3: #{tpu_custom_call.1} parent=1 // loop_header
      %s25 = sphi 0, %s29
      %p26 = scmp.ge.s32.totalorder %s25, 4
      %s35 = sphi 0, %s37
      %s38 = sphi 0, %s35
      %s39 = sphi 0, %s38
      %s55 = sphi 0, %s39
      %s59 = sphi 0, %s59
      %s61 = sphi 0, %s59
      %s62 = sphi 0, %s61
      %s76 = sphi 0, %s62
      %s80 = sphi 0, %s80
      %s82 = sphi 0, %s80
      %s83 = sphi 0, %s82
      %s97 = sphi 0, %s83
      %s101 = sphi 0, %s101
      %s103 = sphi 0, %s101
      %s104 = sphi 0, %s103
      %s118 = sphi 0, %s104
      %s122 = sphi 0, %s122
      %s124 = sphi 0, %s122
      %s125 = sphi 0, %s124
      %s139 = sphi 0, %s125
      %s143 = sphi 0, %s143
      %s145 = sphi 0, %s143
      %s146 = sphi 0, %s145
      %s160 = sphi 0, %s146
      %s164 = sphi 0, %s164
      %s166 = sphi 0, %s164
      %s167 = sphi 0, %s166
      %s181 = sphi 0, %s167
      %s185 = sphi 0, %s185
      %s187 = sphi 0, %s185
      %s188 = sphi 0, %s187
      %s202 = sphi 0, %s188
      %s206 = sphi 0, %s206
      %s208 = sphi 0, %s206
      %s209 = sphi 0, %s208
      %s223 = sphi 0, %s209
      %s227 = sphi 0, %s227
      %s229 = sphi 0, %s227
      %s230 = sphi 0, %s229
      %s244 = sphi 0, %s230
      %s248 = sphi 0, %s248
      %s250 = sphi 0, %s248
      %s251 = sphi 0, %s250
      %s265 = sphi 0, %s251
      %s271 = sphi 0, %s273
      %s274 = sphi 0, %s271
      %s275 = sphi 0, %s274
      %s291 = sphi 0, %s275
      %s297 = sphi 0, %s299
      %s300 = sphi 0, %s297
      %s301 = sphi 0, %s300
      %s317 = sphi 0, %s301
    $region4: #{tpu_custom_call.1} parent=1 // loop_header_branch
      %28 = sbr.rel (%p26) target = $region8
    $region5: #{tpu_custom_call.1} parent=1 // loop_body
      %s30 = ssub.s32 %s25, 1
      %s31 = ssub.s32 %s25, 2
      %s32 = sadd.s32 %s25, 1
      %s33 = ssub.s32 %s25, %s32
      %p34 = scmp.eq.s32.totalorder %s33, 0
      %s36 = sadd.s32 %s35, 1
      %s37 = scalar_select %p34, %s35, %s36
      %p40 = pneg %p34
      %p41 = scmp.eq.s32.totalorder %s25, 1
      %p42 = por %p40, %p41
      %p43 = scmp.ne.s32.totalorder %s35, %s38
      %p44 = scmp.eq.s32.totalorder %s25, 0
      %p45 = por %p43, %p44
      %p46 = scmp.ne.s32.totalorder %s35, %s38
      %p47 = scmp.eq.s32.totalorder %s30, 1
      %p48 = por %p46, %p47
      %p49 = scmp.ne.s32.totalorder %s38, %s39
      %p50 = scmp.eq.s32.totalorder %s30, 0
      %p51 = por %p49, %p50
      %p52 = scmp.ne.s32.totalorder %s38, %s39
      %p53 = scmp.eq.s32.totalorder %s31, 1
      %p54 = por %p52, %p53
      %p56 = scmp.ne.s32.totalorder %s39, %s55
      %p57 = scmp.eq.s32.totalorder %s31, 0
      %p58 = por %p56, %p57
      %s60 = sadd.s32 %s59, 1
      %p63 = scmp.eq.s32.totalorder %s25, 1
      %p64 = scmp.ne.s32.totalorder %s59, %s61
      %p65 = scmp.eq.s32.totalorder %s25, 0
      %p66 = por %p64, %p65
      %p67 = scmp.ne.s32.totalorder %s59, %s61
      %p68 = scmp.eq.s32.totalorder %s30, 1
      %p69 = por %p67, %p68
      %p70 = scmp.ne.s32.totalorder %s61, %s62
      %p71 = scmp.eq.s32.totalorder %s30, 0
      %p72 = por %p70, %p71
      %p73 = scmp.ne.s32.totalorder %s61, %s62
      %p74 = scmp.eq.s32.totalorder %s31, 1
      %p75 = por %p73, %p74
      %p77 = scmp.ne.s32.totalorder %s62, %s76
      %p78 = scmp.eq.s32.totalorder %s31, 0
      %p79 = por %p77, %p78
      %s81 = sadd.s32 %s80, 1
      %p84 = scmp.eq.s32.totalorder %s25, 1
      %p85 = scmp.ne.s32.totalorder %s80, %s82
      %p86 = scmp.eq.s32.totalorder %s25, 0
      %p87 = por %p85, %p86
      %p88 = scmp.ne.s32.totalorder %s80, %s82
      %p89 = scmp.eq.s32.totalorder %s30, 1
      %p90 = por %p88, %p89
      %p91 = scmp.ne.s32.totalorder %s82, %s83
      %p92 = scmp.eq.s32.totalorder %s30, 0
      %p93 = por %p91, %p92
      %p94 = scmp.ne.s32.totalorder %s82, %s83
      %p95 = scmp.eq.s32.totalorder %s31, 1
      %p96 = por %p94, %p95
      %p98 = scmp.ne.s32.totalorder %s83, %s97
      %p99 = scmp.eq.s32.totalorder %s31, 0
      %p100 = por %p98, %p99
      %s102 = sadd.s32 %s101, 1
      %p105 = scmp.eq.s32.totalorder %s25, 1
      %p106 = scmp.ne.s32.totalorder %s101, %s103
      %p107 = scmp.eq.s32.totalorder %s25, 0
      %p108 = por %p106, %p107
      %p109 = scmp.ne.s32.totalorder %s101, %s103
      %p110 = scmp.eq.s32.totalorder %s30, 1
      %p111 = por %p109, %p110
      %p112 = scmp.ne.s32.totalorder %s103, %s104
      %p113 = scmp.eq.s32.totalorder %s30, 0
      %p114 = por %p112, %p113
      %p115 = scmp.ne.s32.totalorder %s103, %s104
      %p116 = scmp.eq.s32.totalorder %s31, 1
      %p117 = por %p115, %p116
      %p119 = scmp.ne.s32.totalorder %s104, %s118
      %p120 = scmp.eq.s32.totalorder %s31, 0
      %p121 = por %p119, %p120
      %s123 = sadd.s32 %s122, 1
      %p126 = scmp.eq.s32.totalorder %s25, 1
      %p127 = scmp.ne.s32.totalorder %s122, %s124
      %p128 = scmp.eq.s32.totalorder %s25, 0
      %p129 = por %p127, %p128
      %p130 = scmp.ne.s32.totalorder %s122, %s124
      %p131 = scmp.eq.s32.totalorder %s30, 1
      %p132 = por %p130, %p131
      %p133 = scmp.ne.s32.totalorder %s124, %s125
      %p134 = scmp.eq.s32.totalorder %s30, 0
      %p135 = por %p133, %p134
      %p136 = scmp.ne.s32.totalorder %s124, %s125
      %p137 = scmp.eq.s32.totalorder %s31, 1
      %p138 = por %p136, %p137
      %p140 = scmp.ne.s32.totalorder %s125, %s139
      %p141 = scmp.eq.s32.totalorder %s31, 0
      %p142 = por %p140, %p141
      %s144 = sadd.s32 %s143, 1
      %p147 = scmp.eq.s32.totalorder %s25, 1
      %p148 = scmp.ne.s32.totalorder %s143, %s145
      %p149 = scmp.eq.s32.totalorder %s25, 0
      %p150 = por %p148, %p149
      %p151 = scmp.ne.s32.totalorder %s143, %s145
      %p152 = scmp.eq.s32.totalorder %s30, 1
      %p153 = por %p151, %p152
      %p154 = scmp.ne.s32.totalorder %s145, %s146
      %p155 = scmp.eq.s32.totalorder %s30, 0
      %p156 = por %p154, %p155
      %p157 = scmp.ne.s32.totalorder %s145, %s146
      %p158 = scmp.eq.s32.totalorder %s31, 1
      %p159 = por %p157, %p158
      %p161 = scmp.ne.s32.totalorder %s146, %s160
      %p162 = scmp.eq.s32.totalorder %s31, 0
      %p163 = por %p161, %p162
      %s165 = sadd.s32 %s164, 1
      %p168 = scmp.eq.s32.totalorder %s25, 1
      %p169 = scmp.ne.s32.totalorder %s164, %s166
      %p170 = scmp.eq.s32.totalorder %s25, 0
      %p171 = por %p169, %p170
      %p172 = scmp.ne.s32.totalorder %s164, %s166
      %p173 = scmp.eq.s32.totalorder %s30, 1
      %p174 = por %p172, %p173
      %p175 = scmp.ne.s32.totalorder %s166, %s167
      %p176 = scmp.eq.s32.totalorder %s30, 0
      %p177 = por %p175, %p176
      %p178 = scmp.ne.s32.totalorder %s166, %s167
      %p179 = scmp.eq.s32.totalorder %s31, 1
      %p180 = por %p178, %p179
      %p182 = scmp.ne.s32.totalorder %s167, %s181
      %p183 = scmp.eq.s32.totalorder %s31, 0
      %p184 = por %p182, %p183
      %s186 = sadd.s32 %s185, 1
      %p189 = scmp.eq.s32.totalorder %s25, 1
      %p190 = scmp.ne.s32.totalorder %s185, %s187
      %p191 = scmp.eq.s32.totalorder %s25, 0
      %p192 = por %p190, %p191
      %p193 = scmp.ne.s32.totalorder %s185, %s187
      %p194 = scmp.eq.s32.totalorder %s30, 1
      %p195 = por %p193, %p194
      %p196 = scmp.ne.s32.totalorder %s187, %s188
      %p197 = scmp.eq.s32.totalorder %s30, 0
      %p198 = por %p196, %p197
      %p199 = scmp.ne.s32.totalorder %s187, %s188
      %p200 = scmp.eq.s32.totalorder %s31, 1
      %p201 = por %p199, %p200
      %p203 = scmp.ne.s32.totalorder %s188, %s202
      %p204 = scmp.eq.s32.totalorder %s31, 0
      %p205 = por %p203, %p204
      %s207 = sadd.s32 %s206, 1
      %p210 = scmp.eq.s32.totalorder %s25, 1
      %p211 = scmp.ne.s32.totalorder %s206, %s208
      %p212 = scmp.eq.s32.totalorder %s25, 0
      %p213 = por %p211, %p212
      %p214 = scmp.ne.s32.totalorder %s206, %s208
      %p215 = scmp.eq.s32.totalorder %s30, 1
      %p216 = por %p214, %p215
      %p217 = scmp.ne.s32.totalorder %s208, %s209
      %p218 = scmp.eq.s32.totalorder %s30, 0
      %p219 = por %p217, %p218
      %p220 = scmp.ne.s32.totalorder %s208, %s209
      %p221 = scmp.eq.s32.totalorder %s31, 1
      %p222 = por %p220, %p221
      %p224 = scmp.ne.s32.totalorder %s209, %s223
      %p225 = scmp.eq.s32.totalorder %s31, 0
      %p226 = por %p224, %p225
      %s228 = sadd.s32 %s227, 1
      %p231 = scmp.eq.s32.totalorder %s25, 1
      %p232 = scmp.ne.s32.totalorder %s227, %s229
      %p233 = scmp.eq.s32.totalorder %s25, 0
      %p234 = por %p232, %p233
      %p235 = scmp.ne.s32.totalorder %s227, %s229
      %p236 = scmp.eq.s32.totalorder %s30, 1
      %p237 = por %p235, %p236
      %p238 = scmp.ne.s32.totalorder %s229, %s230
      %p239 = scmp.eq.s32.totalorder %s30, 0
      %p240 = por %p238, %p239
      %p241 = scmp.ne.s32.totalorder %s229, %s230
      %p242 = scmp.eq.s32.totalorder %s31, 1
      %p243 = por %p241, %p242
      %p245 = scmp.ne.s32.totalorder %s230, %s244
      %p246 = scmp.eq.s32.totalorder %s31, 0
      %p247 = por %p245, %p246
      %s249 = sadd.s32 %s248, 1
      %p252 = scmp.eq.s32.totalorder %s25, 1
      %p253 = scmp.ne.s32.totalorder %s248, %s250
      %p254 = scmp.eq.s32.totalorder %s25, 0
      %p255 = por %p253, %p254
      %p256 = scmp.ne.s32.totalorder %s248, %s250
      %p257 = scmp.eq.s32.totalorder %s30, 1
      %p258 = por %p256, %p257
      %p259 = scmp.ne.s32.totalorder %s250, %s251
      %p260 = scmp.eq.s32.totalorder %s30, 0
      %p261 = por %p259, %p260
      %p262 = scmp.ne.s32.totalorder %s250, %s251
      %p263 = scmp.eq.s32.totalorder %s31, 1
      %p264 = por %p262, %p263
      %p266 = scmp.ne.s32.totalorder %s251, %s265
      %p267 = scmp.eq.s32.totalorder %s31, 0
      %p268 = por %p266, %p267
      %s269 = ssub.s32 %s25, %s32
      %p270 = scmp.eq.s32.totalorder %s269, 0
      %s272 = sadd.s32 %s271, 1
      %s273 = scalar_select %p270, %s271, %s272
      %p276 = pneg %p270
      %p277 = scmp.eq.s32.totalorder %s25, 1
      %p278 = por %p276, %p277
      %p279 = scmp.ne.s32.totalorder %s271, %s274
      %p280 = scmp.eq.s32.totalorder %s25, 0
      %p281 = por %p279, %p280
      %p282 = scmp.ne.s32.totalorder %s271, %s274
      %p283 = scmp.eq.s32.totalorder %s30, 1
      %p284 = por %p282, %p283
      %p285 = scmp.ne.s32.totalorder %s274, %s275
      %p286 = scmp.eq.s32.totalorder %s30, 0
      %p287 = por %p285, %p286
      %p288 = scmp.ne.s32.totalorder %s274, %s275
      %p289 = scmp.eq.s32.totalorder %s31, 1
      %p290 = por %p288, %p289
      %p292 = scmp.ne.s32.totalorder %s275, %s291
      %p293 = scmp.eq.s32.totalorder %s31, 0
      %p294 = por %p292, %p293
      %s295 = ssub.s32 %s25, %s32
      %p296 = scmp.eq.s32.totalorder %s295, 0
      %s298 = sadd.s32 %s297, 1
      %s299 = scalar_select %p296, %s297, %s298
      %p302 = pneg %p296
      %p303 = scmp.eq.s32.totalorder %s25, 1
      %p304 = por %p302, %p303
      %p305 = scmp.ne.s32.totalorder %s297, %s300
      %p306 = scmp.eq.s32.totalorder %s25, 0
      %p307 = por %p305, %p306
      %p308 = scmp.ne.s32.totalorder %s297, %s300
      %p309 = scmp.eq.s32.totalorder %s30, 1
      %p310 = por %p308, %p309
      %p311 = scmp.ne.s32.totalorder %s300, %s301
      %p312 = scmp.eq.s32.totalorder %s30, 0
      %p313 = por %p311, %p312
      %p314 = scmp.ne.s32.totalorder %s300, %s301
      %p315 = scmp.eq.s32.totalorder %s31, 1
      %p316 = por %p314, %p315
      %p318 = scmp.ne.s32.totalorder %s301, %s317
      %p319 = scmp.eq.s32.totalorder %s31, 0
      %p320 = por %p318, %p319
      %p321 = scmp.le.s32.totalorder 1, %s25
      %p322 = scmp.lt.s32.totalorder %s25, 3
      %p323 = pnand %p321, %p322
      %p324 = pneg %p323
      // Predicated region
      $region9: #{tpu_custom_call.1} parent=5 // pred_check
        _
      $region10: #{tpu_custom_call.1} parent=5 // pred_check_branch
        %326 = sbr.rel (%p323) target = $region12
      $region11: #{tpu_custom_call.1} parent=5 // pred_region
        %s327 = ssub.s32 %s25, 1
        // Predicated region
        $region13: #{tpu_custom_call.1} parent=11 // pred_check
          %p328 = pneg %p72
        $region14: #{tpu_custom_call.1} parent=11 // pred_check_branch
          %330 = sbr.rel (%p328) target = $region16
        $region15: #{tpu_custom_call.1} parent=11 // pred_region
          _
        $region16: #{tpu_custom_call.1} parent=11 // pred_fallthru
          _
        // Predicated region
        $region17: #{tpu_custom_call.1} parent=11 // pred_check
          %p331 = pneg %p93
        $region18: #{tpu_custom_call.1} parent=11 // pred_check_branch
          %333 = sbr.rel (%p331) target = $region20
        $region19: #{tpu_custom_call.1} parent=11 // pred_region
          _
        $region20: #{tpu_custom_call.1} parent=11 // pred_fallthru
          _
        // Predicated region
        $region21: #{tpu_custom_call.1} parent=11 // pred_check
          %p334 = pneg %p114
        $region22: #{tpu_custom_call.1} parent=11 // pred_check_branch
          %336 = sbr.rel (%p334) target = $region24
        $region23: #{tpu_custom_call.1} parent=11 // pred_region
          _
        $region24: #{tpu_custom_call.1} parent=11 // pred_fallthru
          _
        // Predicated region
        $region25: #{tpu_custom_call.1} parent=11 // pred_check
          %p337 = pneg %p135
        $region26: #{tpu_custom_call.1} parent=11 // pred_check_branch
          %339 = sbr.rel (%p337) target = $region28
        $region27: #{tpu_custom_call.1} parent=11 // pred_region
          _
        $region28: #{tpu_custom_call.1} parent=11 // pred_fallthru
          _
        // Predicated region
        $region29: #{tpu_custom_call.1} parent=11 // pred_check
          %p340 = pneg %p156
        $region30: #{tpu_custom_call.1} parent=11 // pred_check_branch
          %342 = sbr.rel (%p340) target = $region32
        $region31: #{tpu_custom_call.1} parent=11 // pred_region
          _
        $region32: #{tpu_custom_call.1} parent=11 // pred_fallthru
          _
        // Predicated region
        $region33: #{tpu_custom_call.1} parent=11 // pred_check
          %p343 = pneg %p177
        $region34: #{tpu_custom_call.1} parent=11 // pred_check_branch
          %345 = sbr.rel (%p343) target = $region36
        $region35: #{tpu_custom_call.1} parent=11 // pred_region
          _
        $region36: #{tpu_custom_call.1} parent=11 // pred_fallthru
          _
        // Predicated region
        $region37: #{tpu_custom_call.1} parent=11 // pred_check
          %p346 = pneg %p198
        $region38: #{tpu_custom_call.1} parent=11 // pred_check_branch
          %348 = sbr.rel (%p346) target = $region40
        $region39: #{tpu_custom_call.1} parent=11 // pred_region
          _
        $region40: #{tpu_custom_call.1} parent=11 // pred_fallthru
          _
        // Predicated region
        $region41: #{tpu_custom_call.1} parent=11 // pred_check
          %p349 = pneg %p219
        $region42: #{tpu_custom_call.1} parent=11 // pred_check_branch
          %351 = sbr.rel (%p349) target = $region44
        $region43: #{tpu_custom_call.1} parent=11 // pred_region
          _
        $region44: #{tpu_custom_call.1} parent=11 // pred_fallthru
          _
        // Predicated region
        $region45: #{tpu_custom_call.1} parent=11 // pred_check
          %p352 = pneg %p240
        $region46: #{tpu_custom_call.1} parent=11 // pred_check_branch
          %354 = sbr.rel (%p352) target = $region48
        $region47: #{tpu_custom_call.1} parent=11 // pred_region
          _
        $region48: #{tpu_custom_call.1} parent=11 // pred_fallthru
          _
        // Predicated region
        $region49: #{tpu_custom_call.1} parent=11 // pred_check
          %p355 = pneg %p261
        $region50: #{tpu_custom_call.1} parent=11 // pred_check_branch
          %357 = sbr.rel (%p355) target = $region52
        $region51: #{tpu_custom_call.1} parent=11 // pred_region
          _
        $region52: #{tpu_custom_call.1} parent=11 // pred_fallthru
          _
      $region12: #{tpu_custom_call.1} parent=5 // pred_fallthru
        _
      %p358 = scmp.lt.s32.totalorder %s25, 2
      // Predicated region
      $region53: #{tpu_custom_call.1} parent=5 // pred_check
        %p359 = pneg %p358
      $region54: #{tpu_custom_call.1} parent=5 // pred_check_branch
        %361 = sbr.rel (%p359) target = $region56
      $region55: #{tpu_custom_call.1} parent=5 // pred_region
        // Predicated region
        $region57: #{tpu_custom_call.1} parent=55 // pred_check
          %p362 = pneg %p45
        $region58: #{tpu_custom_call.1} parent=55 // pred_check_branch
          %364 = sbr.rel (%p362) target = $region60
        $region59: #{tpu_custom_call.1} parent=55 // pred_region
          %p365 = scmp.lt.s32.totalorder %s25, 1
          %s366 = scalar_select %p365, %s25, 1
          %s367 = smul.addr %s366, 2
          %s368 = scalar_lea.vmem %s0, %s367
        $region60: #{tpu_custom_call.1} parent=55 // pred_fallthru
          _
      $region56: #{tpu_custom_call.1} parent=5 // pred_fallthru
        _
      %p369 = scmp.le.s32.totalorder 1, %s25
      %p370 = scmp.lt.s32.totalorder %s25, 3
      %p371 = pnand %p369, %p370
      %p372 = pneg %p371
      // Predicated region
      $region61: #{tpu_custom_call.1} parent=5 // pred_check
        _
      $region62: #{tpu_custom_call.1} parent=5 // pred_check_branch
        %374 = sbr.rel (%p371) target = $region64
      $region63: #{tpu_custom_call.1} parent=5 // pred_region
        %s375 = ssub.s32 %s25, 1
        %p376 = scmp.lt.s32.totalorder %s30, 1
        %s377 = scalar_select %p376, %s30, 1
        %s378 = smul.addr %s377, 2
        %s379 = scalar_lea.vmem %s0, %s378
        %p380 = pneg %p51
        %p381 = pneg %p48
        %p382 = pneg %p72
        %p383 = pneg %p69
        %p384 = pneg %p93
        %p385 = pneg %p90
        %p386 = pneg %p114
        %p387 = pneg %p111
        %p388 = pneg %p135
        %p389 = pneg %p132
        %p390 = pneg %p156
        %p391 = pneg %p153
        %p392 = pneg %p177
        %p393 = pneg %p174
        %p394 = pneg %p198
        %p395 = pneg %p195
        %p396 = pneg %p219
        %p397 = pneg %p216
        %p398 = pneg %p240
        %p399 = pneg %p237
        %p400 = pneg %p261
        %p401 = pneg %p258
        %p402 = pneg %p287
        %p403 = pneg %p284
        %s404 = sand.u32 %s274, 1
        %s405 = scalar_lea.sflag [#allocation3], %s404
        %s406 = sand.u32 %s274, 1
        %s407 = smul.addr %s406, 4
        %s408 = scalar_lea.vmem [#allocation2], %s407
        %p409 = pneg %p313
        %p410 = pneg %p310
        %s411 = sand.u32 %s300, 1
        %s412 = scalar_lea.sflag [#allocation5], %s411
        %s413 = sand.u32 %s300, 1
        %s414 = smul.addr %s413, 4
        %s415 = scalar_lea.vmem [#allocation4], %s414
        %p416 = scmp.lt.s32.totalorder %s30, 1
        %s417 = scalar_select %p416, %s30, 1
        %s418 = smul.addr %s417, 2
        %s419 = scalar_lea.vmem %s0, %s418
        %v420 = vld [vmem:[%s419] sm:$0x3]
        %v421 = vld [vmem:[%s1] sm:$0xff]
        %v422 = vld [vmem:[%s1 + $0x8] sm:$0xff]
        %v423 = vld [vmem:[%s1 + $0x10] sm:$0x3f]
        %425 = vset.pattern.permute.xlu0 0
        %426 = vperm.xlu0 %425, %v421
        %v427 = vpop.permute.xlu0 %426
        %430 = vset.pattern.permute.xlu0 0
        %431 = vperm.xlu0 %430, %v422
        %v432 = vpop.permute.xlu0 %431
        %435 = vset.pattern.permute.xlu0 0
        %436 = vperm.xlu0 %435, %v423
        %v437 = vpop.permute.xlu0 %436
        %v439 = vperm.slane %v420, 0
        %v440 = vmul.f32 %v427, %v439
        %v441 = vmul.f32 %v432, %v439
        %v442 = vmul.f32 %v437, %v439
        %443 = vset.pattern.permute.xlu0 1
        %444 = vperm.xlu0 %443, %v421
        %v445 = vpop.permute.xlu0 %444
        %447 = vset.pattern.permute.xlu0 1
        %448 = vperm.xlu0 %447, %v422
        %v449 = vpop.permute.xlu0 %448
        %451 = vset.pattern.permute.xlu0 1
        %452 = vperm.xlu0 %451, %v423
        %v453 = vpop.permute.xlu0 %452
        %v455 = vperm.slane %v420, 1
        %v456 = vmul.f32 %v445, %v455
        %v457 = vmul.f32 %v449, %v455
        %v458 = vmul.f32 %v453, %v455
        %v459 = vadd.f32 %v440, %v456
        %v460 = vadd.f32 %v441, %v457
        %v461 = vadd.f32 %v442, %v458
        %v462 = vld [vmem:[%s2] sm:$0xff]
        %v463 = vld [vmem:[%s2 + $0x8] sm:$0xff]
        %v464 = vld [vmem:[%s2 + $0x10] sm:$0x3f]
        %466 = vset.pattern.permute.xlu0 0
        %467 = vperm.xlu0 %466, %v462
        %v468 = vpop.permute.xlu0 %467
        %471 = vset.pattern.permute.xlu0 0
        %472 = vperm.xlu0 %471, %v463
        %v473 = vpop.permute.xlu0 %472
        %476 = vset.pattern.permute.xlu0 0
        %477 = vperm.xlu0 %476, %v464
        %v478 = vpop.permute.xlu0 %477
        %v480 = vadd.f32 %v459, %v468
        %v481 = vadd.f32 %v460, %v473
        %v482 = vadd.f32 %v461, %v478
        %v483 = vmul.f32 %v480, %v480
        %v484 = vmul.f32 %v481, %v481
        %v485 = vmul.f32 %v482, %v482
        %v486 = vmul.f32 %v483, -100.0
        %v487 = vmul.f32 %v484, -100.0
        %v488 = vmul.f32 %v485, -100.0
        %v489 = vmul.f32 %v486, 1.442695
        %v490 = vpow.pop %v489
        %v491 = vmul.f32 %v487, 1.442695
        %v492 = vpow.pop %v491
        %v493 = vmul.f32 %v488, 1.442695
        %v494 = vpow.pop %v493
        %v495 = vmul.f32 %v480, 20.0
        %v496 = vmul.f32 %v481, 20.0
        %v497 = vmul.f32 %v482, 20.0
        %v498 = vand.u32 2147483647, %v495
        %vm499 = vcmp.le.f32.partialorder %v498, 0.7853982
        %vm500 = vcmp.lt.s32.totalorder %v495, 0
        %v501 = vand.u32 %v495, 2139095040
        %v502 = vshrl.u32 %v501, 23
        %v503 = vsub.s32 %v502, 127
        %v504 = vand.u32 2147483647, %v495
        %v505 = vand.u32 %v504, 8388607
        %v506 = vor.u32 %v505, 8388608
        %v507 = vsub.s32 0, %v506
        %v508 = vadd.s32 %v503, 1
        %vm509 = vcmp.gt.s32.totalorder %v508, 0
        %v510 = vsel %vm509, %v508, 0
        %v511 = vshrl.u32 %v510, 5
        %v512 = vand.u32 %v510, 31
        %v513 = vsub.s32 32, %v512
        %v514 = vshrl.u32 683565275, %v513
        %v515 = vshll.u32 683565275, %v512
        %v516 = vshrl.u32 2475754826, %v513
        %v517 = vor.u32 %v515, %v516
        %v518 = vshll.u32 2475754826, %v512
        %v519 = vshrl.u32 2131351028, %v513
        %v520 = vor.u32 %v518, %v519
        %v521 = vshll.u32 2131351028, %v512
        %v522 = vshrl.u32 2102212464, %v513
        %v523 = vor.u32 %v521, %v522
        %v524 = vshll.u32 2102212464, %v512
        %v525 = vshrl.u32 920167782, %v513
        %v526 = vor.u32 %v524, %v525
        %v527 = vshll.u32 920167782, %v512
        %v528 = vshrl.u32 1326507024, %v513
        %v529 = vor.u32 %v527, %v528
        %vm530 = vcmp.lt.s32.totalorder %v511, 1
        %vm531 = vcmp.lt.s32.totalorder %v511, 2
        %vm532 = vcmp.lt.s32.totalorder %v511, 3
        %vm533 = vcmp.lt.s32.totalorder %v511, 4
        %v534 = vsel %vm530, %v514, %v517
        %v535 = vsel %vm533, %v523, 2102212464
        %v536 = vsel %vm532, %v520, %v535
        %v537 = vsel %vm531, %v534, %v536
        %v538 = vsel %vm530, %v517, %v520
        %v539 = vsel %vm533, %v526, 920167782
        %v540 = vsel %vm532, %v523, %v539
        %v541 = vsel %vm531, %v538, %v540
        %v542 = vsel %vm530, %v520, %v523
        %v543 = vsel %vm533, %v529, 1326507024
        %v544 = vsel %vm532, %v526, %v543
        %v545 = vsel %vm531, %v542, %v544
        %v546 = vshll.u32 %v506, 8
        %v547 = vand.u32 %v546, 65535
        %v548 = vshrl.u32 %v546, 16
        %v549 = vand.u32 %v545, 65535
        %v550 = vshrl.u32 %v545, 16
        %v551 = vmul.u32 %v547, %v549
        %v552 = vmul.u32 %v547, %v550
        %v553 = vmul.u32 %v548, %v549
        %v554 = vmul.u32 %v548, %v550
        %v555 = vshll.u32 %v552, 16
        %v556 = vshrl.u32 %v552, 16
        %v557 = vshll.u32 %v553, 16
        %v558 = vshrl.u32 %v553, 16
        %vm559 = vc.u32 %v551, %v555
        %v560 = vsel %vm559, 1, 0
        %v561 = vadd.s32 %v551, %v555
        %v562 = vadd.s32 %v554, %v560
        %vm563 = vc.u32 %v561, %v557
        %v564 = vsel %vm563, 1, 0
        %v565 = vadd.s32 %v561, %v557
        %v566 = vadd.s32 %v562, %v564
        %v567 = vadd.s32 %v566, %v556
        %v568 = vadd.s32 %v567, %v558
        %v569 = vand.u32 %v546, 65535
        %v570 = vshrl.u32 %v546, 16
        %v571 = vand.u32 %v541, 65535
        %v572 = vshrl.u32 %v541, 16
        %v573 = vmul.u32 %v569, %v571
        %v574 = vmul.u32 %v569, %v572
        %v575 = vmul.u32 %v570, %v571
        %v576 = vmul.u32 %v570, %v572
        %v577 = vshll.u32 %v574, 16
        %v578 = vshrl.u32 %v574, 16
        %v579 = vshll.u32 %v575, 16
        %v580 = vshrl.u32 %v575, 16
        %vm581 = vc.u32 %v573, %v577
        %v582 = vsel %vm581, 1, 0
        %v583 = vadd.s32 %v573, %v577
        %v584 = vadd.s32 %v576, %v582
        %vm585 = vc.u32 %v583, %v579
        %v586 = vsel %vm585, 1, 0
        %v587 = vadd.s32 %v583, %v579
        %v588 = vadd.s32 %v584, %v586
        %v589 = vadd.s32 %v588, %v578
        %v590 = vadd.s32 %v589, %v580
        %v591 = vmul.u32 %v546, %v537
        %v592 = vadd.s32 %v568, %v587
        %vm593 = vc.u32 %v568, %v587
        %v594 = vadd.s32 %v590, 1
        %v595 = vsel %vm593, %v594, %v590
        %v596 = vadd.s32 %v591, %v595
        %v597 = vadd.s32 %v596, 536870912
        %v598 = vshrl.u32 %v597, 30
        %v599 = vshll.u32 %v598, 30
        %v600 = vsub.s32 %v596, %v599
        %vm601 = vcmp.lt.s32.totalorder %v600, 0
        %v602 = vsub.s32 0, %v600
        %v603 = vsel %vm601, %v602, %v600
        %v604 = vclz %v603
        %v605 = vsub.s32 %v604, 2
        %vm606 = vcmp.gt.s32.totalorder 0, %v605
        %v607 = vsel %vm606, 0, %v605
        %v608 = vsub.s32 32, %v607
        %v609 = vshll.u32 %v600, %v607
        %v610 = vshrl.u32 %v592, %v608
        %v611 = vor.u32 %v609, %v610
        %v612 = vsub.s32 4294967266, %v607
        %v613 = vadd.s32 %v612, 127
        %v614 = vshll.u32 %v613, 23
        %v615 = vor.u32 4788187, %v614
        %v616 = vand.u32 2147483647, %v615
        %v618 = vcvt.s32.f32 %v611
        %v619 = vmul.f32 %v618, %v616
        %v620 = vxor.u32 %v619, 2147483648
        %v621 = vsel %vm500, %v620, %v619
        %v622 = vsub.s32 4, %v598
        %v623 = vsel %vm500, %v622, %v598
        %v624 = vsel %vm499, %v495, %v621
        %v625 = vsel %vm499, 0, %v623
        %v626 = vmul.f32 %v624, %v624
        %v627 = vmul.f32 %v626, -0.001358992
        %v628 = vadd.f32 %v627, 0.041655596
        %v629 = vmul.f32 %v626, %v628
        %v630 = vadd.f32 %v629, -0.4999988
        %v631 = vmul.f32 %v626, %v630
        %v632 = vadd.f32 1.0, %v631
        %v633 = vmul.f32 %v624, %v624
        %v634 = vmul.f32 %v633, -0.00019511016
        %v635 = vadd.f32 %v634, 0.008332121
        %v636 = vmul.f32 %v633, %v635
        %v637 = vadd.f32 %v636, -0.16666654
        %v638 = vmul.f32 %v633, %v637
        %v639 = vadd.f32 %v638, 1.0
        %v640 = vmul.f32 %v639, %v624
        %vm641 = vweird.f32 %v495
        %v642 = vand.u32 %v625, 3
        %vm643 = vcmp.lt.s32.totalorder %v642, 2
        %vm644 = vcmp.eq.s32.totalorder %v642, 0
        %v645 = vxor.u32 %v640, 2147483648
        %v646 = vsel %vm644, %v632, %v645
        %vm647 = vcmp.eq.s32.totalorder %v642, 2
        %v648 = vxor.u32 %v632, 2147483648
        %v649 = vsel %vm647, %v648, %v640
        %v650 = vsel %vm643, %v646, %v649
        %v651 = vsel %vm641, nan, %v650
        %v652 = vand.u32 2147483647, %v496
        %vm653 = vcmp.le.f32.partialorder %v652, 0.7853982
        %vm654 = vcmp.lt.s32.totalorder %v496, 0
        %v655 = vand.u32 %v496, 2139095040
        %v656 = vshrl.u32 %v655, 23
        %v657 = vsub.s32 %v656, 127
        %v658 = vand.u32 2147483647, %v496
        %v659 = vand.u32 %v658, 8388607
        %v660 = vor.u32 %v659, 8388608
        %v661 = vsub.s32 0, %v660
        %v662 = vadd.s32 %v657, 1
        %vm663 = vcmp.gt.s32.totalorder %v662, 0
        %v664 = vsel %vm663, %v662, 0
        %v665 = vshrl.u32 %v664, 5
        %v666 = vand.u32 %v664, 31
        %v667 = vsub.s32 32, %v666
        %v668 = vshrl.u32 683565275, %v667
        %v669 = vshll.u32 683565275, %v666
        %v670 = vshrl.u32 2475754826, %v667
        %v671 = vor.u32 %v669, %v670
        %v672 = vshll.u32 2475754826, %v666
        %v673 = vshrl.u32 2131351028, %v667
        %v674 = vor.u32 %v672, %v673
        %v675 = vshll.u32 2131351028, %v666
        %v676 = vshrl.u32 2102212464, %v667
        %v677 = vor.u32 %v675, %v676
        %v678 = vshll.u32 2102212464, %v666
        %v679 = vshrl.u32 920167782, %v667
        %v680 = vor.u32 %v678, %v679
        %v681 = vshll.u32 920167782, %v666
        %v682 = vshrl.u32 1326507024, %v667
        %v683 = vor.u32 %v681, %v682
        %vm684 = vcmp.lt.s32.totalorder %v665, 1
        %vm685 = vcmp.lt.s32.totalorder %v665, 2
        %vm686 = vcmp.lt.s32.totalorder %v665, 3
        %vm687 = vcmp.lt.s32.totalorder %v665, 4
        %v688 = vsel %vm684, %v668, %v671
        %v689 = vsel %vm687, %v677, 2102212464
        %v690 = vsel %vm686, %v674, %v689
        %v691 = vsel %vm685, %v688, %v690
        %v692 = vsel %vm684, %v671, %v674
        %v693 = vsel %vm687, %v680, 920167782
        %v694 = vsel %vm686, %v677, %v693
        %v695 = vsel %vm685, %v692, %v694
        %v696 = vsel %vm684, %v674, %v677
        %v697 = vsel %vm687, %v683, 1326507024
        %v698 = vsel %vm686, %v680, %v697
        %v699 = vsel %vm685, %v696, %v698
        %v700 = vshll.u32 %v660, 8
        %v701 = vand.u32 %v700, 65535
        %v702 = vshrl.u32 %v700, 16
        %v703 = vand.u32 %v699, 65535
        %v704 = vshrl.u32 %v699, 16
        %v705 = vmul.u32 %v701, %v703
        %v706 = vmul.u32 %v701, %v704
        %v707 = vmul.u32 %v702, %v703
        %v708 = vmul.u32 %v702, %v704
        %v709 = vshll.u32 %v706, 16
        %v710 = vshrl.u32 %v706, 16
        %v711 = vshll.u32 %v707, 16
        %v712 = vshrl.u32 %v707, 16
        %vm713 = vc.u32 %v705, %v709
        %v714 = vsel %vm713, 1, 0
        %v715 = vadd.s32 %v705, %v709
        %v716 = vadd.s32 %v708, %v714
        %vm717 = vc.u32 %v715, %v711
        %v718 = vsel %vm717, 1, 0
        %v719 = vadd.s32 %v715, %v711
        %v720 = vadd.s32 %v716, %v718
        %v721 = vadd.s32 %v720, %v710
        %v722 = vadd.s32 %v721, %v712
        %v723 = vand.u32 %v700, 65535
        %v724 = vshrl.u32 %v700, 16
        %v725 = vand.u32 %v695, 65535
        %v726 = vshrl.u32 %v695, 16
        %v727 = vmul.u32 %v723, %v725
        %v728 = vmul.u32 %v723, %v726
        %v729 = vmul.u32 %v724, %v725
        %v730 = vmul.u32 %v724, %v726
        %v731 = vshll.u32 %v728, 16
        %v732 = vshrl.u32 %v728, 16
        %v733 = vshll.u32 %v729, 16
        %v734 = vshrl.u32 %v729, 16
        %vm735 = vc.u32 %v727, %v731
        %v736 = vsel %vm735, 1, 0
        %v737 = vadd.s32 %v727, %v731
        %v738 = vadd.s32 %v730, %v736
        %vm739 = vc.u32 %v737, %v733
        %v740 = vsel %vm739, 1, 0
        %v741 = vadd.s32 %v737, %v733
        %v742 = vadd.s32 %v738, %v740
        %v743 = vadd.s32 %v742, %v732
        %v744 = vadd.s32 %v743, %v734
        %v745 = vmul.u32 %v700, %v691
        %v746 = vadd.s32 %v722, %v741
        %vm747 = vc.u32 %v722, %v741
        %v748 = vadd.s32 %v744, 1
        %v749 = vsel %vm747, %v748, %v744
        %v750 = vadd.s32 %v745, %v749
        %v751 = vadd.s32 %v750, 536870912
        %v752 = vshrl.u32 %v751, 30
        %v753 = vshll.u32 %v752, 30
        %v754 = vsub.s32 %v750, %v753
        %vm755 = vcmp.lt.s32.totalorder %v754, 0
        %v756 = vsub.s32 0, %v754
        %v757 = vsel %vm755, %v756, %v754
        %v758 = vclz %v757
        %v759 = vsub.s32 %v758, 2
        %vm760 = vcmp.gt.s32.totalorder 0, %v759
        %v761 = vsel %vm760, 0, %v759
        %v762 = vsub.s32 32, %v761
        %v763 = vshll.u32 %v754, %v761
        %v764 = vshrl.u32 %v746, %v762
        %v765 = vor.u32 %v763, %v764
        %v766 = vsub.s32 4294967266, %v761
        %v767 = vadd.s32 %v766, 127
        %v768 = vshll.u32 %v767, 23
        %v769 = vor.u32 4788187, %v768
        %v770 = vand.u32 2147483647, %v769
        %v772 = vcvt.s32.f32 %v765
        %v773 = vmul.f32 %v772, %v770
        %v774 = vxor.u32 %v773, 2147483648
        %v775 = vsel %vm654, %v774, %v773
        %v776 = vsub.s32 4, %v752
        %v777 = vsel %vm654, %v776, %v752
        %v778 = vsel %vm653, %v496, %v775
        %v779 = vsel %vm653, 0, %v777
        %v780 = vmul.f32 %v778, %v778
        %v781 = vmul.f32 %v780, -0.001358992
        %v782 = vadd.f32 %v781, 0.041655596
        %v783 = vmul.f32 %v780, %v782
        %v784 = vadd.f32 %v783, -0.4999988
        %v785 = vmul.f32 %v780, %v784
        %v786 = vadd.f32 1.0, %v785
        %v787 = vmul.f32 %v778, %v778
        %v788 = vmul.f32 %v787, -0.00019511016
        %v789 = vadd.f32 %v788, 0.008332121
        %v790 = vmul.f32 %v787, %v789
        %v791 = vadd.f32 %v790, -0.16666654
        %v792 = vmul.f32 %v787, %v791
        %v793 = vadd.f32 %v792, 1.0
        %v794 = vmul.f32 %v793, %v778
        %vm795 = vweird.f32 %v496
        %v796 = vand.u32 %v779, 3
        %vm797 = vcmp.lt.s32.totalorder %v796, 2
        %vm798 = vcmp.eq.s32.totalorder %v796, 0
        %v799 = vxor.u32 %v794, 2147483648
        %v800 = vsel %vm798, %v786, %v799
        %vm801 = vcmp.eq.s32.totalorder %v796, 2
        %v802 = vxor.u32 %v786, 2147483648
        %v803 = vsel %vm801, %v802, %v794
        %v804 = vsel %vm797, %v800, %v803
        %v805 = vsel %vm795, nan, %v804
        %v806 = vand.u32 2147483647, %v497
        %vm807 = vcmp.le.f32.partialorder %v806, 0.7853982
        %vm808 = vcmp.lt.s32.totalorder %v497, 0
        %v809 = vand.u32 %v497, 2139095040
        %v810 = vshrl.u32 %v809, 23
        %v811 = vsub.s32 %v810, 127
        %v812 = vand.u32 2147483647, %v497
        %v813 = vand.u32 %v812, 8388607
        %v814 = vor.u32 %v813, 8388608
        %v815 = vsub.s32 0, %v814
        %v816 = vadd.s32 %v811, 1
        %vm817 = vcmp.gt.s32.totalorder %v816, 0
        %v818 = vsel %vm817, %v816, 0
        %v819 = vshrl.u32 %v818, 5
        %v820 = vand.u32 %v818, 31
        %v821 = vsub.s32 32, %v820
        %v822 = vshrl.u32 683565275, %v821
        %v823 = vshll.u32 683565275, %v820
        %v824 = vshrl.u32 2475754826, %v821
        %v825 = vor.u32 %v823, %v824
        %v826 = vshll.u32 2475754826, %v820
        %v827 = vshrl.u32 2131351028, %v821
        %v828 = vor.u32 %v826, %v827
        %v829 = vshll.u32 2131351028, %v820
        %v830 = vshrl.u32 2102212464, %v821
        %v831 = vor.u32 %v829, %v830
        %v832 = vshll.u32 2102212464, %v820
        %v833 = vshrl.u32 920167782, %v821
        %v834 = vor.u32 %v832, %v833
        %v835 = vshll.u32 920167782, %v820
        %v836 = vshrl.u32 1326507024, %v821
        %v837 = vor.u32 %v835, %v836
        %vm838 = vcmp.lt.s32.totalorder %v819, 1
        %vm839 = vcmp.lt.s32.totalorder %v819, 2
        %vm840 = vcmp.lt.s32.totalorder %v819, 3
        %vm841 = vcmp.lt.s32.totalorder %v819, 4
        %v842 = vsel %vm838, %v822, %v825
        %v843 = vsel %vm841, %v831, 2102212464
        %v844 = vsel %vm840, %v828, %v843
        %v845 = vsel %vm839, %v842, %v844
        %v846 = vsel %vm838, %v825, %v828
        %v847 = vsel %vm841, %v834, 920167782
        %v848 = vsel %vm840, %v831, %v847
        %v849 = vsel %vm839, %v846, %v848
        %v850 = vsel %vm838, %v828, %v831
        %v851 = vsel %vm841, %v837, 1326507024
        %v852 = vsel %vm840, %v834, %v851
        %v853 = vsel %vm839, %v850, %v852
        %v854 = vshll.u32 %v814, 8
        %v855 = vand.u32 %v854, 65535
        %v856 = vshrl.u32 %v854, 16
        %v857 = vand.u32 %v853, 65535
        %v858 = vshrl.u32 %v853, 16
        %v859 = vmul.u32 %v855, %v857
        %v860 = vmul.u32 %v855, %v858
        %v861 = vmul.u32 %v856, %v857
        %v862 = vmul.u32 %v856, %v858
        %v863 = vshll.u32 %v860, 16
        %v864 = vshrl.u32 %v860, 16
        %v865 = vshll.u32 %v861, 16
        %v866 = vshrl.u32 %v861, 16
        %vm867 = vc.u32 %v859, %v863
        %v868 = vsel %vm867, 1, 0
        %v869 = vadd.s32 %v859, %v863
        %v870 = vadd.s32 %v862, %v868
        %vm871 = vc.u32 %v869, %v865
        %v872 = vsel %vm871, 1, 0
        %v873 = vadd.s32 %v869, %v865
        %v874 = vadd.s32 %v870, %v872
        %v875 = vadd.s32 %v874, %v864
        %v876 = vadd.s32 %v875, %v866
        %v877 = vand.u32 %v854, 65535
        %v878 = vshrl.u32 %v854, 16
        %v879 = vand.u32 %v849, 65535
        %v880 = vshrl.u32 %v849, 16
        %v881 = vmul.u32 %v877, %v879
        %v882 = vmul.u32 %v877, %v880
        %v883 = vmul.u32 %v878, %v879
        %v884 = vmul.u32 %v878, %v880
        %v885 = vshll.u32 %v882, 16
        %v886 = vshrl.u32 %v882, 16
        %v887 = vshll.u32 %v883, 16
        %v888 = vshrl.u32 %v883, 16
        %vm889 = vc.u32 %v881, %v885
        %v890 = vsel %vm889, 1, 0
        %v891 = vadd.s32 %v881, %v885
        %v892 = vadd.s32 %v884, %v890
        %vm893 = vc.u32 %v891, %v887
        %v894 = vsel %vm893, 1, 0
        %v895 = vadd.s32 %v891, %v887
        %v896 = vadd.s32 %v892, %v894
        %v897 = vadd.s32 %v896, %v886
        %v898 = vadd.s32 %v897, %v888
        %v899 = vmul.u32 %v854, %v845
        %v900 = vadd.s32 %v876, %v895
        %vm901 = vc.u32 %v876, %v895
        %v902 = vadd.s32 %v898, 1
        %v903 = vsel %vm901, %v902, %v898
        %v904 = vadd.s32 %v899, %v903
        %v905 = vadd.s32 %v904, 536870912
        %v906 = vshrl.u32 %v905, 30
        %v907 = vshll.u32 %v906, 30
        %v908 = vsub.s32 %v904, %v907
        %vm909 = vcmp.lt.s32.totalorder %v908, 0
        %v910 = vsub.s32 0, %v908
        %v911 = vsel %vm909, %v910, %v908
        %v912 = vclz %v911
        %v913 = vsub.s32 %v912, 2
        %vm914 = vcmp.gt.s32.totalorder 0, %v913
        %v915 = vsel %vm914, 0, %v913
        %v916 = vsub.s32 32, %v915
        %v917 = vshll.u32 %v908, %v915
        %v918 = vshrl.u32 %v900, %v916
        %v919 = vor.u32 %v917, %v918
        %v920 = vsub.s32 4294967266, %v915
        %v921 = vadd.s32 %v920, 127
        %v922 = vshll.u32 %v921, 23
        %v923 = vor.u32 4788187, %v922
        %v924 = vand.u32 2147483647, %v923
        %v926 = vcvt.s32.f32 %v919
        %v927 = vmul.f32 %v926, %v924
        %v928 = vxor.u32 %v927, 2147483648
        %v929 = vsel %vm808, %v928, %v927
        %v930 = vsub.s32 4, %v906
        %v931 = vsel %vm808, %v930, %v906
        %v932 = vsel %vm807, %v497, %v929
        %v933 = vsel %vm807, 0, %v931
        %v934 = vmul.f32 %v932, %v932
        %v935 = vmul.f32 %v934, -0.001358992
        %v936 = vadd.f32 %v935, 0.041655596
        %v937 = vmul.f32 %v934, %v936
        %v938 = vadd.f32 %v937, -0.4999988
        %v939 = vmul.f32 %v934, %v938
        %v940 = vadd.f32 1.0, %v939
        %v941 = vmul.f32 %v932, %v932
        %v942 = vmul.f32 %v941, -0.00019511016
        %v943 = vadd.f32 %v942, 0.008332121
        %v944 = vmul.f32 %v941, %v943
        %v945 = vadd.f32 %v944, -0.16666654
        %v946 = vmul.f32 %v941, %v945
        %v947 = vadd.f32 %v946, 1.0
        %v948 = vmul.f32 %v947, %v932
        %vm949 = vweird.f32 %v497
        %v950 = vand.u32 %v933, 3
        %vm951 = vcmp.lt.s32.totalorder %v950, 2
        %vm952 = vcmp.eq.s32.totalorder %v950, 0
        %v953 = vxor.u32 %v948, 2147483648
        %v954 = vsel %vm952, %v940, %v953
        %vm955 = vcmp.eq.s32.totalorder %v950, 2
        %v956 = vxor.u32 %v940, 2147483648
        %v957 = vsel %vm955, %v956, %v948
        %v958 = vsel %vm951, %v954, %v957
        %v959 = vsel %vm949, nan, %v958
        %v960 = vmul.f32 %v490, %v651
        %v961 = vmul.f32 %v492, %v805
        %v962 = vmul.f32 %v494, %v959
        %v963 = vand.u32 2147483647, %v495
        %vm964 = vcmp.le.f32.partialorder %v963, 0.7853982
        %vm965 = vcmp.lt.s32.totalorder %v495, 0
        %v966 = vand.u32 %v495, 2139095040
        %v967 = vshrl.u32 %v966, 23
        %v968 = vsub.s32 %v967, 127
        %v969 = vand.u32 2147483647, %v495
        %v970 = vand.u32 %v969, 8388607
        %v971 = vor.u32 %v970, 8388608
        %v972 = vsub.s32 0, %v971
        %v973 = vadd.s32 %v968, 1
        %vm974 = vcmp.gt.s32.totalorder %v973, 0
        %v975 = vsel %vm974, %v973, 0
        %v976 = vshrl.u32 %v975, 5
        %v977 = vand.u32 %v975, 31
        %v978 = vsub.s32 32, %v977
        %v979 = vshrl.u32 683565275, %v978
        %v980 = vshll.u32 683565275, %v977
        %v981 = vshrl.u32 2475754826, %v978
        %v982 = vor.u32 %v980, %v981
        %v983 = vshll.u32 2475754826, %v977
        %v984 = vshrl.u32 2131351028, %v978
        %v985 = vor.u32 %v983, %v984
        %v986 = vshll.u32 2131351028, %v977
        %v987 = vshrl.u32 2102212464, %v978
        %v988 = vor.u32 %v986, %v987
        %v989 = vshll.u32 2102212464, %v977
        %v990 = vshrl.u32 920167782, %v978
        %v991 = vor.u32 %v989, %v990
        %v992 = vshll.u32 920167782, %v977
        %v993 = vshrl.u32 1326507024, %v978
        %v994 = vor.u32 %v992, %v993
        %vm995 = vcmp.lt.s32.totalorder %v976, 1
        %vm996 = vcmp.lt.s32.totalorder %v976, 2
        %vm997 = vcmp.lt.s32.totalorder %v976, 3
        %vm998 = vcmp.lt.s32.totalorder %v976, 4
        %v999 = vsel %vm995, %v979, %v982
        %v1000 = vsel %vm998, %v988, 2102212464
        %v1001 = vsel %vm997, %v985, %v1000
        %v1002 = vsel %vm996, %v999, %v1001
        %v1003 = vsel %vm995, %v982, %v985
        %v1004 = vsel %vm998, %v991, 920167782
        %v1005 = vsel %vm997, %v988, %v1004
        %v1006 = vsel %vm996, %v1003, %v1005
        %v1007 = vsel %vm995, %v985, %v988
        %v1008 = vsel %vm998, %v994, 1326507024
        %v1009 = vsel %vm997, %v991, %v1008
        %v1010 = vsel %vm996, %v1007, %v1009
        %v1011 = vshll.u32 %v971, 8
        %v1012 = vand.u32 %v1011, 65535
        %v1013 = vshrl.u32 %v1011, 16
        %v1014 = vand.u32 %v1010, 65535
        %v1015 = vshrl.u32 %v1010, 16
        %v1016 = vmul.u32 %v1012, %v1014
        %v1017 = vmul.u32 %v1012, %v1015
        %v1018 = vmul.u32 %v1013, %v1014
        %v1019 = vmul.u32 %v1013, %v1015
        %v1020 = vshll.u32 %v1017, 16
        %v1021 = vshrl.u32 %v1017, 16
        %v1022 = vshll.u32 %v1018, 16
        %v1023 = vshrl.u32 %v1018, 16
        %vm1024 = vc.u32 %v1016, %v1020
        %v1025 = vsel %vm1024, 1, 0
        %v1026 = vadd.s32 %v1016, %v1020
        %v1027 = vadd.s32 %v1019, %v1025
        %vm1028 = vc.u32 %v1026, %v1022
        %v1029 = vsel %vm1028, 1, 0
        %v1030 = vadd.s32 %v1026, %v1022
        %v1031 = vadd.s32 %v1027, %v1029
        %v1032 = vadd.s32 %v1031, %v1021
        %v1033 = vadd.s32 %v1032, %v1023
        %v1034 = vand.u32 %v1011, 65535
        %v1035 = vshrl.u32 %v1011, 16
        %v1036 = vand.u32 %v1006, 65535
        %v1037 = vshrl.u32 %v1006, 16
        %v1038 = vmul.u32 %v1034, %v1036
        %v1039 = vmul.u32 %v1034, %v1037
        %v1040 = vmul.u32 %v1035, %v1036
        %v1041 = vmul.u32 %v1035, %v1037
        %v1042 = vshll.u32 %v1039, 16
        %v1043 = vshrl.u32 %v1039, 16
        %v1044 = vshll.u32 %v1040, 16
        %v1045 = vshrl.u32 %v1040, 16
        %vm1046 = vc.u32 %v1038, %v1042
        %v1047 = vsel %vm1046, 1, 0
        %v1048 = vadd.s32 %v1038, %v1042
        %v1049 = vadd.s32 %v1041, %v1047
        %vm1050 = vc.u32 %v1048, %v1044
        %v1051 = vsel %vm1050, 1, 0
        %v1052 = vadd.s32 %v1048, %v1044
        %v1053 = vadd.s32 %v1049, %v1051
        %v1054 = vadd.s32 %v1053, %v1043
        %v1055 = vadd.s32 %v1054, %v1045
        %v1056 = vmul.u32 %v1011, %v1002
        %v1057 = vadd.s32 %v1033, %v1052
        %vm1058 = vc.u32 %v1033, %v1052
        %v1059 = vadd.s32 %v1055, 1
        %v1060 = vsel %vm1058, %v1059, %v1055
        %v1061 = vadd.s32 %v1056, %v1060
        %v1062 = vadd.s32 %v1061, 536870912
        %v1063 = vshrl.u32 %v1062, 30
        %v1064 = vshll.u32 %v1063, 30
        %v1065 = vsub.s32 %v1061, %v1064
        %vm1066 = vcmp.lt.s32.totalorder %v1065, 0
        %v1067 = vsub.s32 0, %v1065
        %v1068 = vsel %vm1066, %v1067, %v1065
        %v1069 = vclz %v1068
        %v1070 = vsub.s32 %v1069, 2
        %vm1071 = vcmp.gt.s32.totalorder 0, %v1070
        %v1072 = vsel %vm1071, 0, %v1070
        %v1073 = vsub.s32 32, %v1072
        %v1074 = vshll.u32 %v1065, %v1072
        %v1075 = vshrl.u32 %v1057, %v1073
        %v1076 = vor.u32 %v1074, %v1075
        %v1077 = vsub.s32 4294967266, %v1072
        %v1078 = vadd.s32 %v1077, 127
        %v1079 = vshll.u32 %v1078, 23
        %v1080 = vor.u32 4788187, %v1079
        %v1081 = vand.u32 2147483647, %v1080
        %v1083 = vcvt.s32.f32 %v1076
        %v1084 = vmul.f32 %v1083, %v1081
        %v1085 = vxor.u32 %v1084, 2147483648
        %v1086 = vsel %vm965, %v1085, %v1084
        %v1087 = vsub.s32 4, %v1063
        %v1088 = vsel %vm965, %v1087, %v1063
        %v1089 = vsel %vm964, %v495, %v1086
        %v1090 = vsel %vm964, 0, %v1088
        %v1091 = vmul.f32 %v1089, %v1089
        %v1092 = vmul.f32 %v1091, -0.001358992
        %v1093 = vadd.f32 %v1092, 0.041655596
        %v1094 = vmul.f32 %v1091, %v1093
        %v1095 = vadd.f32 %v1094, -0.4999988
        %v1096 = vmul.f32 %v1091, %v1095
        %v1097 = vadd.f32 1.0, %v1096
        %v1098 = vmul.f32 %v1089, %v1089
        %v1099 = vmul.f32 %v1098, -0.00019511016
        %v1100 = vadd.f32 %v1099, 0.008332121
        %v1101 = vmul.f32 %v1098, %v1100
        %v1102 = vadd.f32 %v1101, -0.16666654
        %v1103 = vmul.f32 %v1098, %v1102
        %v1104 = vadd.f32 %v1103, 1.0
        %v1105 = vmul.f32 %v1104, %v1089
        %vm1106 = vweird.f32 %v495
        %v1107 = vadd.s32 %v1090, 3
        %v1108 = vand.u32 %v1107, 3
        %vm1109 = vcmp.lt.s32.totalorder %v1108, 2
        %vm1110 = vcmp.eq.s32.totalorder %v1108, 0
        %v1111 = vxor.u32 %v1105, 2147483648
        %v1112 = vsel %vm1110, %v1097, %v1111
        %vm1113 = vcmp.eq.s32.totalorder %v1108, 2
        %v1114 = vxor.u32 %v1097, 2147483648
        %v1115 = vsel %vm1113, %v1114, %v1105
        %v1116 = vsel %vm1109, %v1112, %v1115
        %v1117 = vsel %vm1106, nan, %v1116
        %v1118 = vand.u32 2147483647, %v496
        %vm1119 = vcmp.le.f32.partialorder %v1118, 0.7853982
        %vm1120 = vcmp.lt.s32.totalorder %v496, 0
        %v1121 = vand.u32 %v496, 2139095040
        %v1122 = vshrl.u32 %v1121, 23
        %v1123 = vsub.s32 %v1122, 127
        %v1124 = vand.u32 2147483647, %v496
        %v1125 = vand.u32 %v1124, 8388607
        %v1126 = vor.u32 %v1125, 8388608
        %v1127 = vsub.s32 0, %v1126
        %v1128 = vadd.s32 %v1123, 1
        %vm1129 = vcmp.gt.s32.totalorder %v1128, 0
        %v1130 = vsel %vm1129, %v1128, 0
        %v1131 = vshrl.u32 %v1130, 5
        %v1132 = vand.u32 %v1130, 31
        %v1133 = vsub.s32 32, %v1132
        %v1134 = vshrl.u32 683565275, %v1133
        %v1135 = vshll.u32 683565275, %v1132
        %v1136 = vshrl.u32 2475754826, %v1133
        %v1137 = vor.u32 %v1135, %v1136
        %v1138 = vshll.u32 2475754826, %v1132
        %v1139 = vshrl.u32 2131351028, %v1133
        %v1140 = vor.u32 %v1138, %v1139
        %v1141 = vshll.u32 2131351028, %v1132
        %v1142 = vshrl.u32 2102212464, %v1133
        %v1143 = vor.u32 %v1141, %v1142
        %v1144 = vshll.u32 2102212464, %v1132
        %v1145 = vshrl.u32 920167782, %v1133
        %v1146 = vor.u32 %v1144, %v1145
        %v1147 = vshll.u32 920167782, %v1132
        %v1148 = vshrl.u32 1326507024, %v1133
        %v1149 = vor.u32 %v1147, %v1148
        %vm1150 = vcmp.lt.s32.totalorder %v1131, 1
        %vm1151 = vcmp.lt.s32.totalorder %v1131, 2
        %vm1152 = vcmp.lt.s32.totalorder %v1131, 3
        %vm1153 = vcmp.lt.s32.totalorder %v1131, 4
        %v1154 = vsel %vm1150, %v1134, %v1137
        %v1155 = vsel %vm1153, %v1143, 2102212464
        %v1156 = vsel %vm1152, %v1140, %v1155
        %v1157 = vsel %vm1151, %v1154, %v1156
        %v1158 = vsel %vm1150, %v1137, %v1140
        %v1159 = vsel %vm1153, %v1146, 920167782
        %v1160 = vsel %vm1152, %v1143, %v1159
        %v1161 = vsel %vm1151, %v1158, %v1160
        %v1162 = vsel %vm1150, %v1140, %v1143
        %v1163 = vsel %vm1153, %v1149, 1326507024
        %v1164 = vsel %vm1152, %v1146, %v1163
        %v1165 = vsel %vm1151, %v1162, %v1164
        %v1166 = vshll.u32 %v1126, 8
        %v1167 = vand.u32 %v1166, 65535
        %v1168 = vshrl.u32 %v1166, 16
        %v1169 = vand.u32 %v1165, 65535
        %v1170 = vshrl.u32 %v1165, 16
        %v1171 = vmul.u32 %v1167, %v1169
        %v1172 = vmul.u32 %v1167, %v1170
        %v1173 = vmul.u32 %v1168, %v1169
        %v1174 = vmul.u32 %v1168, %v1170
        %v1175 = vshll.u32 %v1172, 16
        %v1176 = vshrl.u32 %v1172, 16
        %v1177 = vshll.u32 %v1173, 16
        %v1178 = vshrl.u32 %v1173, 16
        %vm1179 = vc.u32 %v1171, %v1175
        %v1180 = vsel %vm1179, 1, 0
        %v1181 = vadd.s32 %v1171, %v1175
        %v1182 = vadd.s32 %v1174, %v1180
        %vm1183 = vc.u32 %v1181, %v1177
        %v1184 = vsel %vm1183, 1, 0
        %v1185 = vadd.s32 %v1181, %v1177
        %v1186 = vadd.s32 %v1182, %v1184
        %v1187 = vadd.s32 %v1186, %v1176
        %v1188 = vadd.s32 %v1187, %v1178
        %v1189 = vand.u32 %v1166, 65535
        %v1190 = vshrl.u32 %v1166, 16
        %v1191 = vand.u32 %v1161, 65535
        %v1192 = vshrl.u32 %v1161, 16
        %v1193 = vmul.u32 %v1189, %v1191
        %v1194 = vmul.u32 %v1189, %v1192
        %v1195 = vmul.u32 %v1190, %v1191
        %v1196 = vmul.u32 %v1190, %v1192
        %v1197 = vshll.u32 %v1194, 16
        %v1198 = vshrl.u32 %v1194, 16
        %v1199 = vshll.u32 %v1195, 16
        %v1200 = vshrl.u32 %v1195, 16
        %vm1201 = vc.u32 %v1193, %v1197
        %v1202 = vsel %vm1201, 1, 0
        %v1203 = vadd.s32 %v1193, %v1197
        %v1204 = vadd.s32 %v1196, %v1202
        %vm1205 = vc.u32 %v1203, %v1199
        %v1206 = vsel %vm1205, 1, 0
        %v1207 = vadd.s32 %v1203, %v1199
        %v1208 = vadd.s32 %v1204, %v1206
        %v1209 = vadd.s32 %v1208, %v1198
        %v1210 = vadd.s32 %v1209, %v1200
        %v1211 = vmul.u32 %v1166, %v1157
        %v1212 = vadd.s32 %v1188, %v1207
        %vm1213 = vc.u32 %v1188, %v1207
        %v1214 = vadd.s32 %v1210, 1
        %v1215 = vsel %vm1213, %v1214, %v1210
        %v1216 = vadd.s32 %v1211, %v1215
        %v1217 = vadd.s32 %v1216, 536870912
        %v1218 = vshrl.u32 %v1217, 30
        %v1219 = vshll.u32 %v1218, 30
        %v1220 = vsub.s32 %v1216, %v1219
        %vm1221 = vcmp.lt.s32.totalorder %v1220, 0
        %v1222 = vsub.s32 0, %v1220
        %v1223 = vsel %vm1221, %v1222, %v1220
        %v1224 = vclz %v1223
        %v1225 = vsub.s32 %v1224, 2
        %vm1226 = vcmp.gt.s32.totalorder 0, %v1225
        %v1227 = vsel %vm1226, 0, %v1225
        %v1228 = vsub.s32 32, %v1227
        %v1229 = vshll.u32 %v1220, %v1227
        %v1230 = vshrl.u32 %v1212, %v1228
        %v1231 = vor.u32 %v1229, %v1230
        %v1232 = vsub.s32 4294967266, %v1227
        %v1233 = vadd.s32 %v1232, 127
        %v1234 = vshll.u32 %v1233, 23
        %v1235 = vor.u32 4788187, %v1234
        %v1236 = vand.u32 2147483647, %v1235
        %v1238 = vcvt.s32.f32 %v1231
        %v1239 = vmul.f32 %v1238, %v1236
        %v1240 = vxor.u32 %v1239, 2147483648
        %v1241 = vsel %vm1120, %v1240, %v1239
        %v1242 = vsub.s32 4, %v1218
        %v1243 = vsel %vm1120, %v1242, %v1218
        %v1244 = vsel %vm1119, %v496, %v1241
        %v1245 = vsel %vm1119, 0, %v1243
        %v1246 = vmul.f32 %v1244, %v1244
        %v1247 = vmul.f32 %v1246, -0.001358992
        %v1248 = vadd.f32 %v1247, 0.041655596
        %v1249 = vmul.f32 %v1246, %v1248
        %v1250 = vadd.f32 %v1249, -0.4999988
        %v1251 = vmul.f32 %v1246, %v1250
        %v1252 = vadd.f32 1.0, %v1251
        %v1253 = vmul.f32 %v1244, %v1244
        %v1254 = vmul.f32 %v1253, -0.00019511016
        %v1255 = vadd.f32 %v1254, 0.008332121
        %v1256 = vmul.f32 %v1253, %v1255
        %v1257 = vadd.f32 %v1256, -0.16666654
        %v1258 = vmul.f32 %v1253, %v1257
        %v1259 = vadd.f32 %v1258, 1.0
        %v1260 = vmul.f32 %v1259, %v1244
        %vm1261 = vweird.f32 %v496
        %v1262 = vadd.s32 %v1245, 3
        %v1263 = vand.u32 %v1262, 3
        %vm1264 = vcmp.lt.s32.totalorder %v1263, 2
        %vm1265 = vcmp.eq.s32.totalorder %v1263, 0
        %v1266 = vxor.u32 %v1260, 2147483648
        %v1267 = vsel %vm1265, %v1252, %v1266
        %vm1268 = vcmp.eq.s32.totalorder %v1263, 2
        %v1269 = vxor.u32 %v1252, 2147483648
        %v1270 = vsel %vm1268, %v1269, %v1260
        %v1271 = vsel %vm1264, %v1267, %v1270
        %v1272 = vsel %vm1261, nan, %v1271
        %v1273 = vand.u32 2147483647, %v497
        %vm1274 = vcmp.le.f32.partialorder %v1273, 0.7853982
        %vm1275 = vcmp.lt.s32.totalorder %v497, 0
        %v1276 = vand.u32 %v497, 2139095040
        %v1277 = vshrl.u32 %v1276, 23
        %v1278 = vsub.s32 %v1277, 127
        %v1279 = vand.u32 2147483647, %v497
        %v1280 = vand.u32 %v1279, 8388607
        %v1281 = vor.u32 %v1280, 8388608
        %v1282 = vsub.s32 0, %v1281
        %v1283 = vadd.s32 %v1278, 1
        %vm1284 = vcmp.gt.s32.totalorder %v1283, 0
        %v1285 = vsel %vm1284, %v1283, 0
        %v1286 = vshrl.u32 %v1285, 5
        %v1287 = vand.u32 %v1285, 31
        %v1288 = vsub.s32 32, %v1287
        %v1289 = vshrl.u32 683565275, %v1288
        %v1290 = vshll.u32 683565275, %v1287
        %v1291 = vshrl.u32 2475754826, %v1288
        %v1292 = vor.u32 %v1290, %v1291
        %v1293 = vshll.u32 2475754826, %v1287
        %v1294 = vshrl.u32 2131351028, %v1288
        %v1295 = vor.u32 %v1293, %v1294
        %v1296 = vshll.u32 2131351028, %v1287
        %v1297 = vshrl.u32 2102212464, %v1288
        %v1298 = vor.u32 %v1296, %v1297
        %v1299 = vshll.u32 2102212464, %v1287
        %v1300 = vshrl.u32 920167782, %v1288
        %v1301 = vor.u32 %v1299, %v1300
        %v1302 = vshll.u32 920167782, %v1287
        %v1303 = vshrl.u32 1326507024, %v1288
        %v1304 = vor.u32 %v1302, %v1303
        %vm1305 = vcmp.lt.s32.totalorder %v1286, 1
        %vm1306 = vcmp.lt.s32.totalorder %v1286, 2
        %vm1307 = vcmp.lt.s32.totalorder %v1286, 3
        %vm1308 = vcmp.lt.s32.totalorder %v1286, 4
        %v1309 = vsel %vm1305, %v1289, %v1292
        %v1310 = vsel %vm1308, %v1298, 2102212464
        %v1311 = vsel %vm1307, %v1295, %v1310
        %v1312 = vsel %vm1306, %v1309, %v1311
        %v1313 = vsel %vm1305, %v1292, %v1295
        %v1314 = vsel %vm1308, %v1301, 920167782
        %v1315 = vsel %vm1307, %v1298, %v1314
        %v1316 = vsel %vm1306, %v1313, %v1315
        %v1317 = vsel %vm1305, %v1295, %v1298
        %v1318 = vsel %vm1308, %v1304, 1326507024
        %v1319 = vsel %vm1307, %v1301, %v1318
        %v1320 = vsel %vm1306, %v1317, %v1319
        %v1321 = vshll.u32 %v1281, 8
        %v1322 = vand.u32 %v1321, 65535
        %v1323 = vshrl.u32 %v1321, 16
        %v1324 = vand.u32 %v1320, 65535
        %v1325 = vshrl.u32 %v1320, 16
        %v1326 = vmul.u32 %v1322, %v1324
        %v1327 = vmul.u32 %v1322, %v1325
        %v1328 = vmul.u32 %v1323, %v1324
        %v1329 = vmul.u32 %v1323, %v1325
        %v1330 = vshll.u32 %v1327, 16
        %v1331 = vshrl.u32 %v1327, 16
        %v1332 = vshll.u32 %v1328, 16
        %v1333 = vshrl.u32 %v1328, 16
        %vm1334 = vc.u32 %v1326, %v1330
        %v1335 = vsel %vm1334, 1, 0
        %v1336 = vadd.s32 %v1326, %v1330
        %v1337 = vadd.s32 %v1329, %v1335
        %vm1338 = vc.u32 %v1336, %v1332
        %v1339 = vsel %vm1338, 1, 0
        %v1340 = vadd.s32 %v1336, %v1332
        %v1341 = vadd.s32 %v1337, %v1339
        %v1342 = vadd.s32 %v1341, %v1331
        %v1343 = vadd.s32 %v1342, %v1333
        %v1344 = vand.u32 %v1321, 65535
        %v1345 = vshrl.u32 %v1321, 16
        %v1346 = vand.u32 %v1316, 65535
        %v1347 = vshrl.u32 %v1316, 16
        %v1348 = vmul.u32 %v1344, %v1346
        %v1349 = vmul.u32 %v1344, %v1347
        %v1350 = vmul.u32 %v1345, %v1346
        %v1351 = vmul.u32 %v1345, %v1347
        %v1352 = vshll.u32 %v1349, 16
        %v1353 = vshrl.u32 %v1349, 16
        %v1354 = vshll.u32 %v1350, 16
        %v1355 = vshrl.u32 %v1350, 16
        %vm1356 = vc.u32 %v1348, %v1352
        %v1357 = vsel %vm1356, 1, 0
        %v1358 = vadd.s32 %v1348, %v1352
        %v1359 = vadd.s32 %v1351, %v1357
        %vm1360 = vc.u32 %v1358, %v1354
        %v1361 = vsel %vm1360, 1, 0
        %v1362 = vadd.s32 %v1358, %v1354
        %v1363 = vadd.s32 %v1359, %v1361
        %v1364 = vadd.s32 %v1363, %v1353
        %v1365 = vadd.s32 %v1364, %v1355
        %v1366 = vmul.u32 %v1321, %v1312
        %v1367 = vadd.s32 %v1343, %v1362
        %vm1368 = vc.u32 %v1343, %v1362
        %v1369 = vadd.s32 %v1365, 1
        %v1370 = vsel %vm1368, %v1369, %v1365
        %v1371 = vadd.s32 %v1366, %v1370
        %v1372 = vadd.s32 %v1371, 536870912
        %v1373 = vshrl.u32 %v1372, 30
        %v1374 = vshll.u32 %v1373, 30
        %v1375 = vsub.s32 %v1371, %v1374
        %vm1376 = vcmp.lt.s32.totalorder %v1375, 0
        %v1377 = vsub.s32 0, %v1375
        %v1378 = vsel %vm1376, %v1377, %v1375
        %v1379 = vclz %v1378
        %v1380 = vsub.s32 %v1379, 2
        %vm1381 = vcmp.gt.s32.totalorder 0, %v1380
        %v1382 = vsel %vm1381, 0, %v1380
        %v1383 = vsub.s32 32, %v1382
        %v1384 = vshll.u32 %v1375, %v1382
        %v1385 = vshrl.u32 %v1367, %v1383
        %v1386 = vor.u32 %v1384, %v1385
        %v1387 = vsub.s32 4294967266, %v1382
        %v1388 = vadd.s32 %v1387, 127
        %v1389 = vshll.u32 %v1388, 23
        %v1390 = vor.u32 4788187, %v1389
        %v1391 = vand.u32 2147483647, %v1390
        %v1393 = vcvt.s32.f32 %v1386
        %v1394 = vmul.f32 %v1393, %v1391
        %v1395 = vxor.u32 %v1394, 2147483648
        %v1396 = vsel %vm1275, %v1395, %v1394
        %v1397 = vsub.s32 4, %v1373
        %v1398 = vsel %vm1275, %v1397, %v1373
        %v1399 = vsel %vm1274, %v497, %v1396
        %v1400 = vsel %vm1274, 0, %v1398
        %v1401 = vmul.f32 %v1399, %v1399
        %v1402 = vmul.f32 %v1401, -0.001358992
        %v1403 = vadd.f32 %v1402, 0.041655596
        %v1404 = vmul.f32 %v1401, %v1403
        %v1405 = vadd.f32 %v1404, -0.4999988
        %v1406 = vmul.f32 %v1401, %v1405
        %v1407 = vadd.f32 1.0, %v1406
        %v1408 = vmul.f32 %v1399, %v1399
        %v1409 = vmul.f32 %v1408, -0.00019511016
        %v1410 = vadd.f32 %v1409, 0.008332121
        %v1411 = vmul.f32 %v1408, %v1410
        %v1412 = vadd.f32 %v1411, -0.16666654
        %v1413 = vmul.f32 %v1408, %v1412
        %v1414 = vadd.f32 %v1413, 1.0
        %v1415 = vmul.f32 %v1414, %v1399
        %vm1416 = vweird.f32 %v497
        %v1417 = vadd.s32 %v1400, 3
        %v1418 = vand.u32 %v1417, 3
        %vm1419 = vcmp.lt.s32.totalorder %v1418, 2
        %vm1420 = vcmp.eq.s32.totalorder %v1418, 0
        %v1421 = vxor.u32 %v1415, 2147483648
        %v1422 = vsel %vm1420, %v1407, %v1421
        %vm1423 = vcmp.eq.s32.totalorder %v1418, 2
        %v1424 = vxor.u32 %v1407, 2147483648
        %v1425 = vsel %vm1423, %v1424, %v1415
        %v1426 = vsel %vm1419, %v1422, %v1425
        %v1427 = vsel %vm1416, nan, %v1426
        %v1428 = vmul.f32 %v490, %v1117
        %v1429 = vmul.f32 %v492, %v1272
        %v1430 = vmul.f32 %v494, %v1427
        %v1431 = vld [vmem:[%s3] sm:$0xff]
        %v1432 = vld [vmem:[%s3 + $0x8] sm:$0xff]
        %v1433 = vld [vmem:[%s3 + $0x10] sm:$0x3f]
        %v1434 = vld [vmem:[%s4] sm:$0xff]
        %v1435 = vld [vmem:[%s4 + $0x8] sm:$0xff]
        %v1436 = vld [vmem:[%s4 + $0x10] sm:$0x3f]
        %vm1437 = vcmask 179200
        %v1439 = vsel %vm1437, %v1431, 0
        %v1442 = vsel %vm1437, %v1432, 0
        %v1445 = vsel %vm1437, %v1433, 0
        %vm1447 = vcmask 1045504
        %v1449 = vsel %vm1447, %v962, 0
        %1451 = vmatpush.msra.mxu0 0.0
        %1452 = vmatpush.msra.mxu0 0.0
        %1453 = vmatpush.msra.mxu0 0.0
        %1454 = vmatpush.msra.mxu0 0.0
        %1455 = vmatpush.msra.mxu0 0.0
        %1456 = vmatpush.msra.mxu0 0.0
        %1457 = vmatpush.msra.mxu0 0.0
        %1458 = vmatpush.msra.mxu0 0.0
        %1459 = vmatpush.msra.mxu0 0.0
        %1460 = vmatpush.msra.mxu0 0.0
        %1461 = vmatpush.msra.mxu0 0.0
        %1462 = vmatpush.msra.mxu0 0.0
        %1463 = vmatpush.msra.mxu0 0.0
        %1464 = vmatpush.msra.mxu0 %v1449
        %1465 = vmatpush.msra.mxu0 %v961
        %1466 = vmatpush.msra.mxu0 %v960
        %1467 = vmatmul.f32.gmra.mxu0 %v1439
        %v1468 = vpop.f32.mrf.mxu0
        %v1469 = vadd.f32 0.0, %v1468
        %1470 = vmatmul.f32.gmra.mxu0 %v1442
        %v1471 = vpop.f32.mrf.mxu0
        %v1472 = vadd.f32 0.0, %v1471
        %1473 = vmatmul.f32.gmra.mxu0 %v1445
        %v1474 = vpop.f32.mrf.mxu0
        %v1475 = vadd.f32 0.0, %v1474
        %1476 = vdwg.mxu0
        %v1478 = vsel %vm1437, %v1434, 0
        %v1481 = vsel %vm1437, %v1435, 0
        %v1484 = vsel %vm1437, %v1436, 0
        %v1487 = vsel %vm1447, %v1430, 0
        %1489 = vmatpush.msra.mxu0 0.0
        %1490 = vmatpush.msra.mxu0 0.0
        %1491 = vmatpush.msra.mxu0 0.0
        %1492 = vmatpush.msra.mxu0 0.0
        %1493 = vmatpush.msra.mxu0 0.0
        %1494 = vmatpush.msra.mxu0 0.0
        %1495 = vmatpush.msra.mxu0 0.0
        %1496 = vmatpush.msra.mxu0 0.0
        %1497 = vmatpush.msra.mxu0 0.0
        %1498 = vmatpush.msra.mxu0 0.0
        %1499 = vmatpush.msra.mxu0 0.0
        %1500 = vmatpush.msra.mxu0 0.0
        %1501 = vmatpush.msra.mxu0 0.0
        %1502 = vmatpush.msra.mxu0 %v1487
        %1503 = vmatpush.msra.mxu0 %v1429
        %1504 = vmatpush.msra.mxu0 %v1428
        %1505 = vmatmul.f32.gmra.mxu0 %v1478
        %v1506 = vpop.f32.mrf.mxu0
        %v1507 = vadd.f32 0.0, %v1506
        %1508 = vmatmul.f32.gmra.mxu0 %v1481
        %v1509 = vpop.f32.mrf.mxu0
        %v1510 = vadd.f32 0.0, %v1509
        %1511 = vmatmul.f32.gmra.mxu0 %v1484
        %v1512 = vpop.f32.mrf.mxu0
        %v1513 = vadd.f32 0.0, %v1512
        %1514 = vdwg.mxu0
        %v1515 = vsub.f32 %v1469, %v1507
        %v1516 = vsub.f32 %v1472, %v1510
        %v1517 = vsub.f32 %v1475, %v1513
        %v1518 = vld [vmem:[%s5] sm:$0xff]
        %v1519 = vld [vmem:[%s5 + $0x8] sm:$0xff]
        %v1520 = vld [vmem:[%s5 + $0x10] sm:$0x3f]
        %1522 = vset.pattern.permute.xlu0 0
        %1523 = vperm.xlu0 %1522, %v1518
        %v1524 = vpop.permute.xlu0 %1523
        %1527 = vset.pattern.permute.xlu0 0
        %1528 = vperm.xlu0 %1527, %v1519
        %v1529 = vpop.permute.xlu0 %1528
        %1532 = vset.pattern.permute.xlu0 0
        %1533 = vperm.xlu0 %1532, %v1520
        %v1534 = vpop.permute.xlu0 %1533
        %v1536 = vadd.f32 %v1515, %v1524
        %v1537 = vadd.f32 %v1516, %v1529
        %v1538 = vadd.f32 %v1517, %v1534
        %1539 = vmatpush.msra.mxu0 0.0
        %1540 = vmatpush.msra.mxu0 0.0
        %1541 = vmatpush.msra.mxu0 0.0
        %1542 = vmatpush.msra.mxu0 0.0
        %1543 = vmatpush.msra.mxu0 0.0
        %1544 = vmatpush.msra.mxu0 0.0
        %1545 = vmatpush.msra.mxu0 0.0
        %1546 = vmatpush.msra.mxu0 0.0
        %1547 = vmatpush.msra.mxu0 0.0
        %1548 = vmatpush.msra.mxu0 0.0
        %1549 = vmatpush.msra.mxu0 0.0
        %1550 = vmatpush.msra.mxu0 0.0
        %1551 = vmatpush.msra.mxu0 0.0
        %1552 = vmatpush.msra.mxu0 %v1449
        %1553 = vmatpush.msra.mxu0 %v961
        %1554 = vmatpush.msra.mxu0 %v960
        %1555 = vmatmul.f32.gmra.mxu0 %v1478
        %v1556 = vpop.f32.mrf.mxu0
        %v1557 = vadd.f32 0.0, %v1556
        %1558 = vmatmul.f32.gmra.mxu0 %v1481
        %v1559 = vpop.f32.mrf.mxu0
        %v1560 = vadd.f32 0.0, %v1559
        %1561 = vmatmul.f32.gmra.mxu0 %v1484
        %v1562 = vpop.f32.mrf.mxu0
        %v1563 = vadd.f32 0.0, %v1562
        %1564 = vdwg.mxu0
        %1565 = vmatpush.msra.mxu0 0.0
        %1566 = vmatpush.msra.mxu0 0.0
        %1567 = vmatpush.msra.mxu0 0.0
        %1568 = vmatpush.msra.mxu0 0.0
        %1569 = vmatpush.msra.mxu0 0.0
        %1570 = vmatpush.msra.mxu0 0.0
        %1571 = vmatpush.msra.mxu0 0.0
        %1572 = vmatpush.msra.mxu0 0.0
        %1573 = vmatpush.msra.mxu0 0.0
        %1574 = vmatpush.msra.mxu0 0.0
        %1575 = vmatpush.msra.mxu0 0.0
        %1576 = vmatpush.msra.mxu0 0.0
        %1577 = vmatpush.msra.mxu0 0.0
        %1578 = vmatpush.msra.mxu0 %v1487
        %1579 = vmatpush.msra.mxu0 %v1429
        %1580 = vmatpush.msra.mxu0 %v1428
        %1581 = vmatmul.f32.gmra.mxu0 %v1439
        %v1582 = vpop.f32.mrf.mxu0
        %v1583 = vadd.f32 %v1557, %v1582
        %1584 = vmatmul.f32.gmra.mxu0 %v1442
        %v1585 = vpop.f32.mrf.mxu0
        %v1586 = vadd.f32 %v1560, %v1585
        %1587 = vmatmul.f32.gmra.mxu0 %v1445
        %v1588 = vpop.f32.mrf.mxu0
        %v1589 = vadd.f32 %v1563, %v1588
        %1590 = vdwg.mxu0
        %v1591 = vld [vmem:[%s6] sm:$0xff]
        %v1592 = vld [vmem:[%s6 + $0x8] sm:$0xff]
        %v1593 = vld [vmem:[%s6 + $0x10] sm:$0x3f]
        %1595 = vset.pattern.permute.xlu0 0
        %1596 = vperm.xlu0 %1595, %v1591
        %v1597 = vpop.permute.xlu0 %1596
        %1600 = vset.pattern.permute.xlu0 0
        %1601 = vperm.xlu0 %1600, %v1592
        %v1602 = vpop.permute.xlu0 %1601
        %1605 = vset.pattern.permute.xlu0 0
        %1606 = vperm.xlu0 %1605, %v1593
        %v1607 = vpop.permute.xlu0 %1606
        %v1609 = vadd.f32 %v1583, %v1597
        %v1610 = vadd.f32 %v1586, %v1602
        %v1611 = vadd.f32 %v1589, %v1607
        %v1612 = vmul.f32 %v1609, -20.0
        %v1613 = vmul.f32 %v1610, -20.0
        %v1614 = vmul.f32 %v1611, -20.0
        %v1615 = vmul.f32 %v1536, %v1536
        %v1616 = vmul.f32 %v1537, %v1537
        %v1617 = vmul.f32 %v1538, %v1538
        %v1618 = vmul.f32 %v1609, %v1609
        %v1619 = vmul.f32 %v1610, %v1610
        %v1620 = vmul.f32 %v1611, %v1611
        %v1621 = vadd.f32 %v1615, %v1618
        %v1622 = vadd.f32 %v1616, %v1619
        %v1623 = vadd.f32 %v1617, %v1620
        %v1624 = vmul.f32 %v1621, 100.0
        %v1625 = vmul.f32 %v1622, 100.0
        %v1626 = vmul.f32 %v1623, 100.0
        %v1627 = vsub.f32 %v1612, %v1624
        %v1628 = vsub.f32 %v1613, %v1625
        %v1629 = vsub.f32 %v1614, %v1626
        %v1630 = vmul.f32 %v1627, 1.442695
        %v1631 = vpow.pop %v1630
        %v1632 = vmul.f32 %v1628, 1.442695
        %v1633 = vpow.pop %v1632
        %v1634 = vmul.f32 %v1629, 1.442695
        %v1635 = vpow.pop %v1634
        %v1636 = vmul.f32 %v1536, 20.0
        %v1637 = vmul.f32 %v1537, 20.0
        %v1638 = vmul.f32 %v1538, 20.0
        %v1639 = vand.u32 2147483647, %v1636
        %vm1640 = vcmp.le.f32.partialorder %v1639, 0.7853982
        %vm1641 = vcmp.lt.s32.totalorder %v1636, 0
        %v1642 = vand.u32 %v1636, 2139095040
        %v1643 = vshrl.u32 %v1642, 23
        %v1644 = vsub.s32 %v1643, 127
        %v1645 = vand.u32 2147483647, %v1636
        %v1646 = vand.u32 %v1645, 8388607
        %v1647 = vor.u32 %v1646, 8388608
        %v1648 = vsub.s32 0, %v1647
        %v1649 = vadd.s32 %v1644, 1
        %vm1650 = vcmp.gt.s32.totalorder %v1649, 0
        %v1651 = vsel %vm1650, %v1649, 0
        %v1652 = vshrl.u32 %v1651, 5
        %v1653 = vand.u32 %v1651, 31
        %v1654 = vsub.s32 32, %v1653
        %v1655 = vshrl.u32 683565275, %v1654
        %v1656 = vshll.u32 683565275, %v1653
        %v1657 = vshrl.u32 2475754826, %v1654
        %v1658 = vor.u32 %v1656, %v1657
        %v1659 = vshll.u32 2475754826, %v1653
        %v1660 = vshrl.u32 2131351028, %v1654
        %v1661 = vor.u32 %v1659, %v1660
        %v1662 = vshll.u32 2131351028, %v1653
        %v1663 = vshrl.u32 2102212464, %v1654
        %v1664 = vor.u32 %v1662, %v1663
        %v1665 = vshll.u32 2102212464, %v1653
        %v1666 = vshrl.u32 920167782, %v1654
        %v1667 = vor.u32 %v1665, %v1666
        %v1668 = vshll.u32 920167782, %v1653
        %v1669 = vshrl.u32 1326507024, %v1654
        %v1670 = vor.u32 %v1668, %v1669
        %vm1671 = vcmp.lt.s32.totalorder %v1652, 1
        %vm1672 = vcmp.lt.s32.totalorder %v1652, 2
        %vm1673 = vcmp.lt.s32.totalorder %v1652, 3
        %vm1674 = vcmp.lt.s32.totalorder %v1652, 4
        %v1675 = vsel %vm1671, %v1655, %v1658
        %v1676 = vsel %vm1674, %v1664, 2102212464
        %v1677 = vsel %vm1673, %v1661, %v1676
        %v1678 = vsel %vm1672, %v1675, %v1677
        %v1679 = vsel %vm1671, %v1658, %v1661
        %v1680 = vsel %vm1674, %v1667, 920167782
        %v1681 = vsel %vm1673, %v1664, %v1680
        %v1682 = vsel %vm1672, %v1679, %v1681
        %v1683 = vsel %vm1671, %v1661, %v1664
        %v1684 = vsel %vm1674, %v1670, 1326507024
        %v1685 = vsel %vm1673, %v1667, %v1684
        %v1686 = vsel %vm1672, %v1683, %v1685
        %v1687 = vshll.u32 %v1647, 8
        %v1688 = vand.u32 %v1687, 65535
        %v1689 = vshrl.u32 %v1687, 16
        %v1690 = vand.u32 %v1686, 65535
        %v1691 = vshrl.u32 %v1686, 16
        %v1692 = vmul.u32 %v1688, %v1690
        %v1693 = vmul.u32 %v1688, %v1691
        %v1694 = vmul.u32 %v1689, %v1690
        %v1695 = vmul.u32 %v1689, %v1691
        %v1696 = vshll.u32 %v1693, 16
        %v1697 = vshrl.u32 %v1693, 16
        %v1698 = vshll.u32 %v1694, 16
        %v1699 = vshrl.u32 %v1694, 16
        %vm1700 = vc.u32 %v1692, %v1696
        %v1701 = vsel %vm1700, 1, 0
        %v1702 = vadd.s32 %v1692, %v1696
        %v1703 = vadd.s32 %v1695, %v1701
        %vm1704 = vc.u32 %v1702, %v1698
        %v1705 = vsel %vm1704, 1, 0
        %v1706 = vadd.s32 %v1702, %v1698
        %v1707 = vadd.s32 %v1703, %v1705
        %v1708 = vadd.s32 %v1707, %v1697
        %v1709 = vadd.s32 %v1708, %v1699
        %v1710 = vand.u32 %v1687, 65535
        %v1711 = vshrl.u32 %v1687, 16
        %v1712 = vand.u32 %v1682, 65535
        %v1713 = vshrl.u32 %v1682, 16
        %v1714 = vmul.u32 %v1710, %v1712
        %v1715 = vmul.u32 %v1710, %v1713
        %v1716 = vmul.u32 %v1711, %v1712
        %v1717 = vmul.u32 %v1711, %v1713
        %v1718 = vshll.u32 %v1715, 16
        %v1719 = vshrl.u32 %v1715, 16
        %v1720 = vshll.u32 %v1716, 16
        %v1721 = vshrl.u32 %v1716, 16
        %vm1722 = vc.u32 %v1714, %v1718
        %v1723 = vsel %vm1722, 1, 0
        %v1724 = vadd.s32 %v1714, %v1718
        %v1725 = vadd.s32 %v1717, %v1723
        %vm1726 = vc.u32 %v1724, %v1720
        %v1727 = vsel %vm1726, 1, 0
        %v1728 = vadd.s32 %v1724, %v1720
        %v1729 = vadd.s32 %v1725, %v1727
        %v1730 = vadd.s32 %v1729, %v1719
        %v1731 = vadd.s32 %v1730, %v1721
        %v1732 = vmul.u32 %v1687, %v1678
        %v1733 = vadd.s32 %v1709, %v1728
        %vm1734 = vc.u32 %v1709, %v1728
        %v1735 = vadd.s32 %v1731, 1
        %v1736 = vsel %vm1734, %v1735, %v1731
        %v1737 = vadd.s32 %v1732, %v1736
        %v1738 = vadd.s32 %v1737, 536870912
        %v1739 = vshrl.u32 %v1738, 30
        %v1740 = vshll.u32 %v1739, 30
        %v1741 = vsub.s32 %v1737, %v1740
        %vm1742 = vcmp.lt.s32.totalorder %v1741, 0
        %v1743 = vsub.s32 0, %v1741
        %v1744 = vsel %vm1742, %v1743, %v1741
        %v1745 = vclz %v1744
        %v1746 = vsub.s32 %v1745, 2
        %vm1747 = vcmp.gt.s32.totalorder 0, %v1746
        %v1748 = vsel %vm1747, 0, %v1746
        %v1749 = vsub.s32 32, %v1748
        %v1750 = vshll.u32 %v1741, %v1748
        %v1751 = vshrl.u32 %v1733, %v1749
        %v1752 = vor.u32 %v1750, %v1751
        %v1753 = vsub.s32 4294967266, %v1748
        %v1754 = vadd.s32 %v1753, 127
        %v1755 = vshll.u32 %v1754, 23
        %v1756 = vor.u32 4788187, %v1755
        %v1757 = vand.u32 2147483647, %v1756
        %v1759 = vcvt.s32.f32 %v1752
        %v1760 = vmul.f32 %v1759, %v1757
        %v1761 = vxor.u32 %v1760, 2147483648
        %v1762 = vsel %vm1641, %v1761, %v1760
        %v1763 = vsub.s32 4, %v1739
        %v1764 = vsel %vm1641, %v1763, %v1739
        %v1765 = vsel %vm1640, %v1636, %v1762
        %v1766 = vsel %vm1640, 0, %v1764
        %v1767 = vmul.f32 %v1765, %v1765
        %v1768 = vmul.f32 %v1767, -0.001358992
        %v1769 = vadd.f32 %v1768, 0.041655596
        %v1770 = vmul.f32 %v1767, %v1769
        %v1771 = vadd.f32 %v1770, -0.4999988
        %v1772 = vmul.f32 %v1767, %v1771
        %v1773 = vadd.f32 1.0, %v1772
        %v1774 = vmul.f32 %v1765, %v1765
        %v1775 = vmul.f32 %v1774, -0.00019511016
        %v1776 = vadd.f32 %v1775, 0.008332121
        %v1777 = vmul.f32 %v1774, %v1776
        %v1778 = vadd.f32 %v1777, -0.16666654
        %v1779 = vmul.f32 %v1774, %v1778
        %v1780 = vadd.f32 %v1779, 1.0
        %v1781 = vmul.f32 %v1780, %v1765
        %vm1782 = vweird.f32 %v1636
        %v1783 = vand.u32 %v1766, 3
        %vm1784 = vcmp.lt.s32.totalorder %v1783, 2
        %vm1785 = vcmp.eq.s32.totalorder %v1783, 0
        %v1786 = vxor.u32 %v1781, 2147483648
        %v1787 = vsel %vm1785, %v1773, %v1786
        %vm1788 = vcmp.eq.s32.totalorder %v1783, 2
        %v1789 = vxor.u32 %v1773, 2147483648
        %v1790 = vsel %vm1788, %v1789, %v1781
        %v1791 = vsel %vm1784, %v1787, %v1790
        %v1792 = vsel %vm1782, nan, %v1791
        %v1793 = vand.u32 2147483647, %v1637
        %vm1794 = vcmp.le.f32.partialorder %v1793, 0.7853982
        %vm1795 = vcmp.lt.s32.totalorder %v1637, 0
        %v1796 = vand.u32 %v1637, 2139095040
        %v1797 = vshrl.u32 %v1796, 23
        %v1798 = vsub.s32 %v1797, 127
        %v1799 = vand.u32 2147483647, %v1637
        %v1800 = vand.u32 %v1799, 8388607
        %v1801 = vor.u32 %v1800, 8388608
        %v1802 = vsub.s32 0, %v1801
        %v1803 = vadd.s32 %v1798, 1
        %vm1804 = vcmp.gt.s32.totalorder %v1803, 0
        %v1805 = vsel %vm1804, %v1803, 0
        %v1806 = vshrl.u32 %v1805, 5
        %v1807 = vand.u32 %v1805, 31
        %v1808 = vsub.s32 32, %v1807
        %v1809 = vshrl.u32 683565275, %v1808
        %v1810 = vshll.u32 683565275, %v1807
        %v1811 = vshrl.u32 2475754826, %v1808
        %v1812 = vor.u32 %v1810, %v1811
        %v1813 = vshll.u32 2475754826, %v1807
        %v1814 = vshrl.u32 2131351028, %v1808
        %v1815 = vor.u32 %v1813, %v1814
        %v1816 = vshll.u32 2131351028, %v1807
        %v1817 = vshrl.u32 2102212464, %v1808
        %v1818 = vor.u32 %v1816, %v1817
        %v1819 = vshll.u32 2102212464, %v1807
        %v1820 = vshrl.u32 920167782, %v1808
        %v1821 = vor.u32 %v1819, %v1820
        %v1822 = vshll.u32 920167782, %v1807
        %v1823 = vshrl.u32 1326507024, %v1808
        %v1824 = vor.u32 %v1822, %v1823
        %vm1825 = vcmp.lt.s32.totalorder %v1806, 1
        %vm1826 = vcmp.lt.s32.totalorder %v1806, 2
        %vm1827 = vcmp.lt.s32.totalorder %v1806, 3
        %vm1828 = vcmp.lt.s32.totalorder %v1806, 4
        %v1829 = vsel %vm1825, %v1809, %v1812
        %v1830 = vsel %vm1828, %v1818, 2102212464
        %v1831 = vsel %vm1827, %v1815, %v1830
        %v1832 = vsel %vm1826, %v1829, %v1831
        %v1833 = vsel %vm1825, %v1812, %v1815
        %v1834 = vsel %vm1828, %v1821, 920167782
        %v1835 = vsel %vm1827, %v1818, %v1834
        %v1836 = vsel %vm1826, %v1833, %v1835
        %v1837 = vsel %vm1825, %v1815, %v1818
        %v1838 = vsel %vm1828, %v1824, 1326507024
        %v1839 = vsel %vm1827, %v1821, %v1838
        %v1840 = vsel %vm1826, %v1837, %v1839
        %v1841 = vshll.u32 %v1801, 8
        %v1842 = vand.u32 %v1841, 65535
        %v1843 = vshrl.u32 %v1841, 16
        %v1844 = vand.u32 %v1840, 65535
        %v1845 = vshrl.u32 %v1840, 16
        %v1846 = vmul.u32 %v1842, %v1844
        %v1847 = vmul.u32 %v1842, %v1845
        %v1848 = vmul.u32 %v1843, %v1844
        %v1849 = vmul.u32 %v1843, %v1845
        %v1850 = vshll.u32 %v1847, 16
        %v1851 = vshrl.u32 %v1847, 16
        %v1852 = vshll.u32 %v1848, 16
        %v1853 = vshrl.u32 %v1848, 16
        %vm1854 = vc.u32 %v1846, %v1850
        %v1855 = vsel %vm1854, 1, 0
        %v1856 = vadd.s32 %v1846, %v1850
        %v1857 = vadd.s32 %v1849, %v1855
        %vm1858 = vc.u32 %v1856, %v1852
        %v1859 = vsel %vm1858, 1, 0
        %v1860 = vadd.s32 %v1856, %v1852
        %v1861 = vadd.s32 %v1857, %v1859
        %v1862 = vadd.s32 %v1861, %v1851
        %v1863 = vadd.s32 %v1862, %v1853
        %v1864 = vand.u32 %v1841, 65535
        %v1865 = vshrl.u32 %v1841, 16
        %v1866 = vand.u32 %v1836, 65535
        %v1867 = vshrl.u32 %v1836, 16
        %v1868 = vmul.u32 %v1864, %v1866
        %v1869 = vmul.u32 %v1864, %v1867
        %v1870 = vmul.u32 %v1865, %v1866
        %v1871 = vmul.u32 %v1865, %v1867
        %v1872 = vshll.u32 %v1869, 16
        %v1873 = vshrl.u32 %v1869, 16
        %v1874 = vshll.u32 %v1870, 16
        %v1875 = vshrl.u32 %v1870, 16
        %vm1876 = vc.u32 %v1868, %v1872
        %v1877 = vsel %vm1876, 1, 0
        %v1878 = vadd.s32 %v1868, %v1872
        %v1879 = vadd.s32 %v1871, %v1877
        %vm1880 = vc.u32 %v1878, %v1874
        %v1881 = vsel %vm1880, 1, 0
        %v1882 = vadd.s32 %v1878, %v1874
        %v1883 = vadd.s32 %v1879, %v1881
        %v1884 = vadd.s32 %v1883, %v1873
        %v1885 = vadd.s32 %v1884, %v1875
        %v1886 = vmul.u32 %v1841, %v1832
        %v1887 = vadd.s32 %v1863, %v1882
        %vm1888 = vc.u32 %v1863, %v1882
        %v1889 = vadd.s32 %v1885, 1
        %v1890 = vsel %vm1888, %v1889, %v1885
        %v1891 = vadd.s32 %v1886, %v1890
        %v1892 = vadd.s32 %v1891, 536870912
        %v1893 = vshrl.u32 %v1892, 30
        %v1894 = vshll.u32 %v1893, 30
        %v1895 = vsub.s32 %v1891, %v1894
        %vm1896 = vcmp.lt.s32.totalorder %v1895, 0
        %v1897 = vsub.s32 0, %v1895
        %v1898 = vsel %vm1896, %v1897, %v1895
        %v1899 = vclz %v1898
        %v1900 = vsub.s32 %v1899, 2
        %vm1901 = vcmp.gt.s32.totalorder 0, %v1900
        %v1902 = vsel %vm1901, 0, %v1900
        %v1903 = vsub.s32 32, %v1902
        %v1904 = vshll.u32 %v1895, %v1902
        %v1905 = vshrl.u32 %v1887, %v1903
        %v1906 = vor.u32 %v1904, %v1905
        %v1907 = vsub.s32 4294967266, %v1902
        %v1908 = vadd.s32 %v1907, 127
        %v1909 = vshll.u32 %v1908, 23
        %v1910 = vor.u32 4788187, %v1909
        %v1911 = vand.u32 2147483647, %v1910
        %v1913 = vcvt.s32.f32 %v1906
        %v1914 = vmul.f32 %v1913, %v1911
        %v1915 = vxor.u32 %v1914, 2147483648
        %v1916 = vsel %vm1795, %v1915, %v1914
        %v1917 = vsub.s32 4, %v1893
        %v1918 = vsel %vm1795, %v1917, %v1893
        %v1919 = vsel %vm1794, %v1637, %v1916
        %v1920 = vsel %vm1794, 0, %v1918
        %v1921 = vmul.f32 %v1919, %v1919
        %v1922 = vmul.f32 %v1921, -0.001358992
        %v1923 = vadd.f32 %v1922, 0.041655596
        %v1924 = vmul.f32 %v1921, %v1923
        %v1925 = vadd.f32 %v1924, -0.4999988
        %v1926 = vmul.f32 %v1921, %v1925
        %v1927 = vadd.f32 1.0, %v1926
        %v1928 = vmul.f32 %v1919, %v1919
        %v1929 = vmul.f32 %v1928, -0.00019511016
        %v1930 = vadd.f32 %v1929, 0.008332121
        %v1931 = vmul.f32 %v1928, %v1930
        %v1932 = vadd.f32 %v1931, -0.16666654
        %v1933 = vmul.f32 %v1928, %v1932
        %v1934 = vadd.f32 %v1933, 1.0
        %v1935 = vmul.f32 %v1934, %v1919
        %vm1936 = vweird.f32 %v1637
        %v1937 = vand.u32 %v1920, 3
        %vm1938 = vcmp.lt.s32.totalorder %v1937, 2
        %vm1939 = vcmp.eq.s32.totalorder %v1937, 0
        %v1940 = vxor.u32 %v1935, 2147483648
        %v1941 = vsel %vm1939, %v1927, %v1940
        %vm1942 = vcmp.eq.s32.totalorder %v1937, 2
        %v1943 = vxor.u32 %v1927, 2147483648
        %v1944 = vsel %vm1942, %v1943, %v1935
        %v1945 = vsel %vm1938, %v1941, %v1944
        %v1946 = vsel %vm1936, nan, %v1945
        %v1947 = vand.u32 2147483647, %v1638
        %vm1948 = vcmp.le.f32.partialorder %v1947, 0.7853982
        %vm1949 = vcmp.lt.s32.totalorder %v1638, 0
        %v1950 = vand.u32 %v1638, 2139095040
        %v1951 = vshrl.u32 %v1950, 23
        %v1952 = vsub.s32 %v1951, 127
        %v1953 = vand.u32 2147483647, %v1638
        %v1954 = vand.u32 %v1953, 8388607
        %v1955 = vor.u32 %v1954, 8388608
        %v1956 = vsub.s32 0, %v1955
        %v1957 = vadd.s32 %v1952, 1
        %vm1958 = vcmp.gt.s32.totalorder %v1957, 0
        %v1959 = vsel %vm1958, %v1957, 0
        %v1960 = vshrl.u32 %v1959, 5
        %v1961 = vand.u32 %v1959, 31
        %v1962 = vsub.s32 32, %v1961
        %v1963 = vshrl.u32 683565275, %v1962
        %v1964 = vshll.u32 683565275, %v1961
        %v1965 = vshrl.u32 2475754826, %v1962
        %v1966 = vor.u32 %v1964, %v1965
        %v1967 = vshll.u32 2475754826, %v1961
        %v1968 = vshrl.u32 2131351028, %v1962
        %v1969 = vor.u32 %v1967, %v1968
        %v1970 = vshll.u32 2131351028, %v1961
        %v1971 = vshrl.u32 2102212464, %v1962
        %v1972 = vor.u32 %v1970, %v1971
        %v1973 = vshll.u32 2102212464, %v1961
        %v1974 = vshrl.u32 920167782, %v1962
        %v1975 = vor.u32 %v1973, %v1974
        %v1976 = vshll.u32 920167782, %v1961
        %v1977 = vshrl.u32 1326507024, %v1962
        %v1978 = vor.u32 %v1976, %v1977
        %vm1979 = vcmp.lt.s32.totalorder %v1960, 1
        %vm1980 = vcmp.lt.s32.totalorder %v1960, 2
        %vm1981 = vcmp.lt.s32.totalorder %v1960, 3
        %vm1982 = vcmp.lt.s32.totalorder %v1960, 4
        %v1983 = vsel %vm1979, %v1963, %v1966
        %v1984 = vsel %vm1982, %v1972, 2102212464
        %v1985 = vsel %vm1981, %v1969, %v1984
        %v1986 = vsel %vm1980, %v1983, %v1985
        %v1987 = vsel %vm1979, %v1966, %v1969
        %v1988 = vsel %vm1982, %v1975, 920167782
        %v1989 = vsel %vm1981, %v1972, %v1988
        %v1990 = vsel %vm1980, %v1987, %v1989
        %v1991 = vsel %vm1979, %v1969, %v1972
        %v1992 = vsel %vm1982, %v1978, 1326507024
        %v1993 = vsel %vm1981, %v1975, %v1992
        %v1994 = vsel %vm1980, %v1991, %v1993
        %v1995 = vshll.u32 %v1955, 8
        %v1996 = vand.u32 %v1995, 65535
        %v1997 = vshrl.u32 %v1995, 16
        %v1998 = vand.u32 %v1994, 65535
        %v1999 = vshrl.u32 %v1994, 16
        %v2000 = vmul.u32 %v1996, %v1998
        %v2001 = vmul.u32 %v1996, %v1999
        %v2002 = vmul.u32 %v1997, %v1998
        %v2003 = vmul.u32 %v1997, %v1999
        %v2004 = vshll.u32 %v2001, 16
        %v2005 = vshrl.u32 %v2001, 16
        %v2006 = vshll.u32 %v2002, 16
        %v2007 = vshrl.u32 %v2002, 16
        %vm2008 = vc.u32 %v2000, %v2004
        %v2009 = vsel %vm2008, 1, 0
        %v2010 = vadd.s32 %v2000, %v2004
        %v2011 = vadd.s32 %v2003, %v2009
        %vm2012 = vc.u32 %v2010, %v2006
        %v2013 = vsel %vm2012, 1, 0
        %v2014 = vadd.s32 %v2010, %v2006
        %v2015 = vadd.s32 %v2011, %v2013
        %v2016 = vadd.s32 %v2015, %v2005
        %v2017 = vadd.s32 %v2016, %v2007
        %v2018 = vand.u32 %v1995, 65535
        %v2019 = vshrl.u32 %v1995, 16
        %v2020 = vand.u32 %v1990, 65535
        %v2021 = vshrl.u32 %v1990, 16
        %v2022 = vmul.u32 %v2018, %v2020
        %v2023 = vmul.u32 %v2018, %v2021
        %v2024 = vmul.u32 %v2019, %v2020
        %v2025 = vmul.u32 %v2019, %v2021
        %v2026 = vshll.u32 %v2023, 16
        %v2027 = vshrl.u32 %v2023, 16
        %v2028 = vshll.u32 %v2024, 16
        %v2029 = vshrl.u32 %v2024, 16
        %vm2030 = vc.u32 %v2022, %v2026
        %v2031 = vsel %vm2030, 1, 0
        %v2032 = vadd.s32 %v2022, %v2026
        %v2033 = vadd.s32 %v2025, %v2031
        %vm2034 = vc.u32 %v2032, %v2028
        %v2035 = vsel %vm2034, 1, 0
        %v2036 = vadd.s32 %v2032, %v2028
        %v2037 = vadd.s32 %v2033, %v2035
        %v2038 = vadd.s32 %v2037, %v2027
        %v2039 = vadd.s32 %v2038, %v2029
        %v2040 = vmul.u32 %v1995, %v1986
        %v2041 = vadd.s32 %v2017, %v2036
        %vm2042 = vc.u32 %v2017, %v2036
        %v2043 = vadd.s32 %v2039, 1
        %v2044 = vsel %vm2042, %v2043, %v2039
        %v2045 = vadd.s32 %v2040, %v2044
        %v2046 = vadd.s32 %v2045, 536870912
        %v2047 = vshrl.u32 %v2046, 30
        %v2048 = vshll.u32 %v2047, 30
        %v2049 = vsub.s32 %v2045, %v2048
        %vm2050 = vcmp.lt.s32.totalorder %v2049, 0
        %v2051 = vsub.s32 0, %v2049
        %v2052 = vsel %vm2050, %v2051, %v2049
        %v2053 = vclz %v2052
        %v2054 = vsub.s32 %v2053, 2
        %vm2055 = vcmp.gt.s32.totalorder 0, %v2054
        %v2056 = vsel %vm2055, 0, %v2054
        %v2057 = vsub.s32 32, %v2056
        %v2058 = vshll.u32 %v2049, %v2056
        %v2059 = vshrl.u32 %v2041, %v2057
        %v2060 = vor.u32 %v2058, %v2059
        %v2061 = vsub.s32 4294967266, %v2056
        %v2062 = vadd.s32 %v2061, 127
        %v2063 = vshll.u32 %v2062, 23
        %v2064 = vor.u32 4788187, %v2063
        %v2065 = vand.u32 2147483647, %v2064
        %v2067 = vcvt.s32.f32 %v2060
        %v2068 = vmul.f32 %v2067, %v2065
        %v2069 = vxor.u32 %v2068, 2147483648
        %v2070 = vsel %vm1949, %v2069, %v2068
        %v2071 = vsub.s32 4, %v2047
        %v2072 = vsel %vm1949, %v2071, %v2047
        %v2073 = vsel %vm1948, %v1638, %v2070
        %v2074 = vsel %vm1948, 0, %v2072
        %v2075 = vmul.f32 %v2073, %v2073
        %v2076 = vmul.f32 %v2075, -0.001358992
        %v2077 = vadd.f32 %v2076, 0.041655596
        %v2078 = vmul.f32 %v2075, %v2077
        %v2079 = vadd.f32 %v2078, -0.4999988
        %v2080 = vmul.f32 %v2075, %v2079
        %v2081 = vadd.f32 1.0, %v2080
        %v2082 = vmul.f32 %v2073, %v2073
        %v2083 = vmul.f32 %v2082, -0.00019511016
        %v2084 = vadd.f32 %v2083, 0.008332121
        %v2085 = vmul.f32 %v2082, %v2084
        %v2086 = vadd.f32 %v2085, -0.16666654
        %v2087 = vmul.f32 %v2082, %v2086
        %v2088 = vadd.f32 %v2087, 1.0
        %v2089 = vmul.f32 %v2088, %v2073
        %vm2090 = vweird.f32 %v1638
        %v2091 = vand.u32 %v2074, 3
        %vm2092 = vcmp.lt.s32.totalorder %v2091, 2
        %vm2093 = vcmp.eq.s32.totalorder %v2091, 0
        %v2094 = vxor.u32 %v2089, 2147483648
        %v2095 = vsel %vm2093, %v2081, %v2094
        %vm2096 = vcmp.eq.s32.totalorder %v2091, 2
        %v2097 = vxor.u32 %v2081, 2147483648
        %v2098 = vsel %vm2096, %v2097, %v2089
        %v2099 = vsel %vm2092, %v2095, %v2098
        %v2100 = vsel %vm2090, nan, %v2099
        %v2101 = vmul.f32 %v1631, %v1792
        %v2102 = vmul.f32 %v1633, %v1946
        %v2103 = vmul.f32 %v1635, %v2100
        %v2104 = vand.u32 2147483647, %v1636
        %vm2105 = vcmp.le.f32.partialorder %v2104, 0.7853982
        %vm2106 = vcmp.lt.s32.totalorder %v1636, 0
        %v2107 = vand.u32 %v1636, 2139095040
        %v2108 = vshrl.u32 %v2107, 23
        %v2109 = vsub.s32 %v2108, 127
        %v2110 = vand.u32 2147483647, %v1636
        %v2111 = vand.u32 %v2110, 8388607
        %v2112 = vor.u32 %v2111, 8388608
        %v2113 = vsub.s32 0, %v2112
        %v2114 = vadd.s32 %v2109, 1
        %vm2115 = vcmp.gt.s32.totalorder %v2114, 0
        %v2116 = vsel %vm2115, %v2114, 0
        %v2117 = vshrl.u32 %v2116, 5
        %v2118 = vand.u32 %v2116, 31
        %v2119 = vsub.s32 32, %v2118
        %v2120 = vshrl.u32 683565275, %v2119
        %v2121 = vshll.u32 683565275, %v2118
        %v2122 = vshrl.u32 2475754826, %v2119
        %v2123 = vor.u32 %v2121, %v2122
        %v2124 = vshll.u32 2475754826, %v2118
        %v2125 = vshrl.u32 2131351028, %v2119
        %v2126 = vor.u32 %v2124, %v2125
        %v2127 = vshll.u32 2131351028, %v2118
        %v2128 = vshrl.u32 2102212464, %v2119
        %v2129 = vor.u32 %v2127, %v2128
        %v2130 = vshll.u32 2102212464, %v2118
        %v2131 = vshrl.u32 920167782, %v2119
        %v2132 = vor.u32 %v2130, %v2131
        %v2133 = vshll.u32 920167782, %v2118
        %v2134 = vshrl.u32 1326507024, %v2119
        %v2135 = vor.u32 %v2133, %v2134
        %vm2136 = vcmp.lt.s32.totalorder %v2117, 1
        %vm2137 = vcmp.lt.s32.totalorder %v2117, 2
        %vm2138 = vcmp.lt.s32.totalorder %v2117, 3
        %vm2139 = vcmp.lt.s32.totalorder %v2117, 4
        %v2140 = vsel %vm2136, %v2120, %v2123
        %v2141 = vsel %vm2139, %v2129, 2102212464
        %v2142 = vsel %vm2138, %v2126, %v2141
        %v2143 = vsel %vm2137, %v2140, %v2142
        %v2144 = vsel %vm2136, %v2123, %v2126
        %v2145 = vsel %vm2139, %v2132, 920167782
        %v2146 = vsel %vm2138, %v2129, %v2145
        %v2147 = vsel %vm2137, %v2144, %v2146
        %v2148 = vsel %vm2136, %v2126, %v2129
        %v2149 = vsel %vm2139, %v2135, 1326507024
        %v2150 = vsel %vm2138, %v2132, %v2149
        %v2151 = vsel %vm2137, %v2148, %v2150
        %v2152 = vshll.u32 %v2112, 8
        %v2153 = vand.u32 %v2152, 65535
        %v2154 = vshrl.u32 %v2152, 16
        %v2155 = vand.u32 %v2151, 65535
        %v2156 = vshrl.u32 %v2151, 16
        %v2157 = vmul.u32 %v2153, %v2155
        %v2158 = vmul.u32 %v2153, %v2156
        %v2159 = vmul.u32 %v2154, %v2155
        %v2160 = vmul.u32 %v2154, %v2156
        %v2161 = vshll.u32 %v2158, 16
        %v2162 = vshrl.u32 %v2158, 16
        %v2163 = vshll.u32 %v2159, 16
        %v2164 = vshrl.u32 %v2159, 16
        %vm2165 = vc.u32 %v2157, %v2161
        %v2166 = vsel %vm2165, 1, 0
        %v2167 = vadd.s32 %v2157, %v2161
        %v2168 = vadd.s32 %v2160, %v2166
        %vm2169 = vc.u32 %v2167, %v2163
        %v2170 = vsel %vm2169, 1, 0
        %v2171 = vadd.s32 %v2167, %v2163
        %v2172 = vadd.s32 %v2168, %v2170
        %v2173 = vadd.s32 %v2172, %v2162
        %v2174 = vadd.s32 %v2173, %v2164
        %v2175 = vand.u32 %v2152, 65535
        %v2176 = vshrl.u32 %v2152, 16
        %v2177 = vand.u32 %v2147, 65535
        %v2178 = vshrl.u32 %v2147, 16
        %v2179 = vmul.u32 %v2175, %v2177
        %v2180 = vmul.u32 %v2175, %v2178
        %v2181 = vmul.u32 %v2176, %v2177
        %v2182 = vmul.u32 %v2176, %v2178
        %v2183 = vshll.u32 %v2180, 16
        %v2184 = vshrl.u32 %v2180, 16
        %v2185 = vshll.u32 %v2181, 16
        %v2186 = vshrl.u32 %v2181, 16
        %vm2187 = vc.u32 %v2179, %v2183
        %v2188 = vsel %vm2187, 1, 0
        %v2189 = vadd.s32 %v2179, %v2183
        %v2190 = vadd.s32 %v2182, %v2188
        %vm2191 = vc.u32 %v2189, %v2185
        %v2192 = vsel %vm2191, 1, 0
        %v2193 = vadd.s32 %v2189, %v2185
        %v2194 = vadd.s32 %v2190, %v2192
        %v2195 = vadd.s32 %v2194, %v2184
        %v2196 = vadd.s32 %v2195, %v2186
        %v2197 = vmul.u32 %v2152, %v2143
        %v2198 = vadd.s32 %v2174, %v2193
        %vm2199 = vc.u32 %v2174, %v2193
        %v2200 = vadd.s32 %v2196, 1
        %v2201 = vsel %vm2199, %v2200, %v2196
        %v2202 = vadd.s32 %v2197, %v2201
        %v2203 = vadd.s32 %v2202, 536870912
        %v2204 = vshrl.u32 %v2203, 30
        %v2205 = vshll.u32 %v2204, 30
        %v2206 = vsub.s32 %v2202, %v2205
        %vm2207 = vcmp.lt.s32.totalorder %v2206, 0
        %v2208 = vsub.s32 0, %v2206
        %v2209 = vsel %vm2207, %v2208, %v2206
        %v2210 = vclz %v2209
        %v2211 = vsub.s32 %v2210, 2
        %vm2212 = vcmp.gt.s32.totalorder 0, %v2211
        %v2213 = vsel %vm2212, 0, %v2211
        %v2214 = vsub.s32 32, %v2213
        %v2215 = vshll.u32 %v2206, %v2213
        %v2216 = vshrl.u32 %v2198, %v2214
        %v2217 = vor.u32 %v2215, %v2216
        %v2218 = vsub.s32 4294967266, %v2213
        %v2219 = vadd.s32 %v2218, 127
        %v2220 = vshll.u32 %v2219, 23
        %v2221 = vor.u32 4788187, %v2220
        %v2222 = vand.u32 2147483647, %v2221
        %v2224 = vcvt.s32.f32 %v2217
        %v2225 = vmul.f32 %v2224, %v2222
        %v2226 = vxor.u32 %v2225, 2147483648
        %v2227 = vsel %vm2106, %v2226, %v2225
        %v2228 = vsub.s32 4, %v2204
        %v2229 = vsel %vm2106, %v2228, %v2204
        %v2230 = vsel %vm2105, %v1636, %v2227
        %v2231 = vsel %vm2105, 0, %v2229
        %v2232 = vmul.f32 %v2230, %v2230
        %v2233 = vmul.f32 %v2232, -0.001358992
        %v2234 = vadd.f32 %v2233, 0.041655596
        %v2235 = vmul.f32 %v2232, %v2234
        %v2236 = vadd.f32 %v2235, -0.4999988
        %v2237 = vmul.f32 %v2232, %v2236
        %v2238 = vadd.f32 1.0, %v2237
        %v2239 = vmul.f32 %v2230, %v2230
        %v2240 = vmul.f32 %v2239, -0.00019511016
        %v2241 = vadd.f32 %v2240, 0.008332121
        %v2242 = vmul.f32 %v2239, %v2241
        %v2243 = vadd.f32 %v2242, -0.16666654
        %v2244 = vmul.f32 %v2239, %v2243
        %v2245 = vadd.f32 %v2244, 1.0
        %v2246 = vmul.f32 %v2245, %v2230
        %vm2247 = vweird.f32 %v1636
        %v2248 = vadd.s32 %v2231, 3
        %v2249 = vand.u32 %v2248, 3
        %vm2250 = vcmp.lt.s32.totalorder %v2249, 2
        %vm2251 = vcmp.eq.s32.totalorder %v2249, 0
        %v2252 = vxor.u32 %v2246, 2147483648
        %v2253 = vsel %vm2251, %v2238, %v2252
        %vm2254 = vcmp.eq.s32.totalorder %v2249, 2
        %v2255 = vxor.u32 %v2238, 2147483648
        %v2256 = vsel %vm2254, %v2255, %v2246
        %v2257 = vsel %vm2250, %v2253, %v2256
        %v2258 = vsel %vm2247, nan, %v2257
        %v2259 = vand.u32 2147483647, %v1637
        %vm2260 = vcmp.le.f32.partialorder %v2259, 0.7853982
        %vm2261 = vcmp.lt.s32.totalorder %v1637, 0
        %v2262 = vand.u32 %v1637, 2139095040
        %v2263 = vshrl.u32 %v2262, 23
        %v2264 = vsub.s32 %v2263, 127
        %v2265 = vand.u32 2147483647, %v1637
        %v2266 = vand.u32 %v2265, 8388607
        %v2267 = vor.u32 %v2266, 8388608
        %v2268 = vsub.s32 0, %v2267
        %v2269 = vadd.s32 %v2264, 1
        %vm2270 = vcmp.gt.s32.totalorder %v2269, 0
        %v2271 = vsel %vm2270, %v2269, 0
        %v2272 = vshrl.u32 %v2271, 5
        %v2273 = vand.u32 %v2271, 31
        %v2274 = vsub.s32 32, %v2273
        %v2275 = vshrl.u32 683565275, %v2274
        %v2276 = vshll.u32 683565275, %v2273
        %v2277 = vshrl.u32 2475754826, %v2274
        %v2278 = vor.u32 %v2276, %v2277
        %v2279 = vshll.u32 2475754826, %v2273
        %v2280 = vshrl.u32 2131351028, %v2274
        %v2281 = vor.u32 %v2279, %v2280
        %v2282 = vshll.u32 2131351028, %v2273
        %v2283 = vshrl.u32 2102212464, %v2274
        %v2284 = vor.u32 %v2282, %v2283
        %v2285 = vshll.u32 2102212464, %v2273
        %v2286 = vshrl.u32 920167782, %v2274
        %v2287 = vor.u32 %v2285, %v2286
        %v2288 = vshll.u32 920167782, %v2273
        %v2289 = vshrl.u32 1326507024, %v2274
        %v2290 = vor.u32 %v2288, %v2289
        %vm2291 = vcmp.lt.s32.totalorder %v2272, 1
        %vm2292 = vcmp.lt.s32.totalorder %v2272, 2
        %vm2293 = vcmp.lt.s32.totalorder %v2272, 3
        %vm2294 = vcmp.lt.s32.totalorder %v2272, 4
        %v2295 = vsel %vm2291, %v2275, %v2278
        %v2296 = vsel %vm2294, %v2284, 2102212464
        %v2297 = vsel %vm2293, %v2281, %v2296
        %v2298 = vsel %vm2292, %v2295, %v2297
        %v2299 = vsel %vm2291, %v2278, %v2281
        %v2300 = vsel %vm2294, %v2287, 920167782
        %v2301 = vsel %vm2293, %v2284, %v2300
        %v2302 = vsel %vm2292, %v2299, %v2301
        %v2303 = vsel %vm2291, %v2281, %v2284
        %v2304 = vsel %vm2294, %v2290, 1326507024
        %v2305 = vsel %vm2293, %v2287, %v2304
        %v2306 = vsel %vm2292, %v2303, %v2305
        %v2307 = vshll.u32 %v2267, 8
        %v2308 = vand.u32 %v2307, 65535
        %v2309 = vshrl.u32 %v2307, 16
        %v2310 = vand.u32 %v2306, 65535
        %v2311 = vshrl.u32 %v2306, 16
        %v2312 = vmul.u32 %v2308, %v2310
        %v2313 = vmul.u32 %v2308, %v2311
        %v2314 = vmul.u32 %v2309, %v2310
        %v2315 = vmul.u32 %v2309, %v2311
        %v2316 = vshll.u32 %v2313, 16
        %v2317 = vshrl.u32 %v2313, 16
        %v2318 = vshll.u32 %v2314, 16
        %v2319 = vshrl.u32 %v2314, 16
        %vm2320 = vc.u32 %v2312, %v2316
        %v2321 = vsel %vm2320, 1, 0
        %v2322 = vadd.s32 %v2312, %v2316
        %v2323 = vadd.s32 %v2315, %v2321
        %vm2324 = vc.u32 %v2322, %v2318
        %v2325 = vsel %vm2324, 1, 0
        %v2326 = vadd.s32 %v2322, %v2318
        %v2327 = vadd.s32 %v2323, %v2325
        %v2328 = vadd.s32 %v2327, %v2317
        %v2329 = vadd.s32 %v2328, %v2319
        %v2330 = vand.u32 %v2307, 65535
        %v2331 = vshrl.u32 %v2307, 16
        %v2332 = vand.u32 %v2302, 65535
        %v2333 = vshrl.u32 %v2302, 16
        %v2334 = vmul.u32 %v2330, %v2332
        %v2335 = vmul.u32 %v2330, %v2333
        %v2336 = vmul.u32 %v2331, %v2332
        %v2337 = vmul.u32 %v2331, %v2333
        %v2338 = vshll.u32 %v2335, 16
        %v2339 = vshrl.u32 %v2335, 16
        %v2340 = vshll.u32 %v2336, 16
        %v2341 = vshrl.u32 %v2336, 16
        %vm2342 = vc.u32 %v2334, %v2338
        %v2343 = vsel %vm2342, 1, 0
        %v2344 = vadd.s32 %v2334, %v2338
        %v2345 = vadd.s32 %v2337, %v2343
        %vm2346 = vc.u32 %v2344, %v2340
        %v2347 = vsel %vm2346, 1, 0
        %v2348 = vadd.s32 %v2344, %v2340
        %v2349 = vadd.s32 %v2345, %v2347
        %v2350 = vadd.s32 %v2349, %v2339
        %v2351 = vadd.s32 %v2350, %v2341
        %v2352 = vmul.u32 %v2307, %v2298
        %v2353 = vadd.s32 %v2329, %v2348
        %vm2354 = vc.u32 %v2329, %v2348
        %v2355 = vadd.s32 %v2351, 1
        %v2356 = vsel %vm2354, %v2355, %v2351
        %v2357 = vadd.s32 %v2352, %v2356
        %v2358 = vadd.s32 %v2357, 536870912
        %v2359 = vshrl.u32 %v2358, 30
        %v2360 = vshll.u32 %v2359, 30
        %v2361 = vsub.s32 %v2357, %v2360
        %vm2362 = vcmp.lt.s32.totalorder %v2361, 0
        %v2363 = vsub.s32 0, %v2361
        %v2364 = vsel %vm2362, %v2363, %v2361
        %v2365 = vclz %v2364
        %v2366 = vsub.s32 %v2365, 2
        %vm2367 = vcmp.gt.s32.totalorder 0, %v2366
        %v2368 = vsel %vm2367, 0, %v2366
        %v2369 = vsub.s32 32, %v2368
        %v2370 = vshll.u32 %v2361, %v2368
        %v2371 = vshrl.u32 %v2353, %v2369
        %v2372 = vor.u32 %v2370, %v2371
        %v2373 = vsub.s32 4294967266, %v2368
        %v2374 = vadd.s32 %v2373, 127
        %v2375 = vshll.u32 %v2374, 23
        %v2376 = vor.u32 4788187, %v2375
        %v2377 = vand.u32 2147483647, %v2376
        %v2379 = vcvt.s32.f32 %v2372
        %v2380 = vmul.f32 %v2379, %v2377
        %v2381 = vxor.u32 %v2380, 2147483648
        %v2382 = vsel %vm2261, %v2381, %v2380
        %v2383 = vsub.s32 4, %v2359
        %v2384 = vsel %vm2261, %v2383, %v2359
        %v2385 = vsel %vm2260, %v1637, %v2382
        %v2386 = vsel %vm2260, 0, %v2384
        %v2387 = vmul.f32 %v2385, %v2385
        %v2388 = vmul.f32 %v2387, -0.001358992
        %v2389 = vadd.f32 %v2388, 0.041655596
        %v2390 = vmul.f32 %v2387, %v2389
        %v2391 = vadd.f32 %v2390, -0.4999988
        %v2392 = vmul.f32 %v2387, %v2391
        %v2393 = vadd.f32 1.0, %v2392
        %v2394 = vmul.f32 %v2385, %v2385
        %v2395 = vmul.f32 %v2394, -0.00019511016
        %v2396 = vadd.f32 %v2395, 0.008332121
        %v2397 = vmul.f32 %v2394, %v2396
        %v2398 = vadd.f32 %v2397, -0.16666654
        %v2399 = vmul.f32 %v2394, %v2398
        %v2400 = vadd.f32 %v2399, 1.0
        %v2401 = vmul.f32 %v2400, %v2385
        %vm2402 = vweird.f32 %v1637
        %v2403 = vadd.s32 %v2386, 3
        %v2404 = vand.u32 %v2403, 3
        %vm2405 = vcmp.lt.s32.totalorder %v2404, 2
        %vm2406 = vcmp.eq.s32.totalorder %v2404, 0
        %v2407 = vxor.u32 %v2401, 2147483648
        %v2408 = vsel %vm2406, %v2393, %v2407
        %vm2409 = vcmp.eq.s32.totalorder %v2404, 2
        %v2410 = vxor.u32 %v2393, 2147483648
        %v2411 = vsel %vm2409, %v2410, %v2401
        %v2412 = vsel %vm2405, %v2408, %v2411
        %v2413 = vsel %vm2402, nan, %v2412
        %v2414 = vand.u32 2147483647, %v1638
        %vm2415 = vcmp.le.f32.partialorder %v2414, 0.7853982
        %vm2416 = vcmp.lt.s32.totalorder %v1638, 0
        %v2417 = vand.u32 %v1638, 2139095040
        %v2418 = vshrl.u32 %v2417, 23
        %v2419 = vsub.s32 %v2418, 127
        %v2420 = vand.u32 2147483647, %v1638
        %v2421 = vand.u32 %v2420, 8388607
        %v2422 = vor.u32 %v2421, 8388608
        %v2423 = vsub.s32 0, %v2422
        %v2424 = vadd.s32 %v2419, 1
        %vm2425 = vcmp.gt.s32.totalorder %v2424, 0
        %v2426 = vsel %vm2425, %v2424, 0
        %v2427 = vshrl.u32 %v2426, 5
        %v2428 = vand.u32 %v2426, 31
        %v2429 = vsub.s32 32, %v2428
        %v2430 = vshrl.u32 683565275, %v2429
        %v2431 = vshll.u32 683565275, %v2428
        %v2432 = vshrl.u32 2475754826, %v2429
        %v2433 = vor.u32 %v2431, %v2432
        %v2434 = vshll.u32 2475754826, %v2428
        %v2435 = vshrl.u32 2131351028, %v2429
        %v2436 = vor.u32 %v2434, %v2435
        %v2437 = vshll.u32 2131351028, %v2428
        %v2438 = vshrl.u32 2102212464, %v2429
        %v2439 = vor.u32 %v2437, %v2438
        %v2440 = vshll.u32 2102212464, %v2428
        %v2441 = vshrl.u32 920167782, %v2429
        %v2442 = vor.u32 %v2440, %v2441
        %v2443 = vshll.u32 920167782, %v2428
        %v2444 = vshrl.u32 1326507024, %v2429
        %v2445 = vor.u32 %v2443, %v2444
        %vm2446 = vcmp.lt.s32.totalorder %v2427, 1
        %vm2447 = vcmp.lt.s32.totalorder %v2427, 2
        %vm2448 = vcmp.lt.s32.totalorder %v2427, 3
        %vm2449 = vcmp.lt.s32.totalorder %v2427, 4
        %v2450 = vsel %vm2446, %v2430, %v2433
        %v2451 = vsel %vm2449, %v2439, 2102212464
        %v2452 = vsel %vm2448, %v2436, %v2451
        %v2453 = vsel %vm2447, %v2450, %v2452
        %v2454 = vsel %vm2446, %v2433, %v2436
        %v2455 = vsel %vm2449, %v2442, 920167782
        %v2456 = vsel %vm2448, %v2439, %v2455
        %v2457 = vsel %vm2447, %v2454, %v2456
        %v2458 = vsel %vm2446, %v2436, %v2439
        %v2459 = vsel %vm2449, %v2445, 1326507024
        %v2460 = vsel %vm2448, %v2442, %v2459
        %v2461 = vsel %vm2447, %v2458, %v2460
        %v2462 = vshll.u32 %v2422, 8
        %v2463 = vand.u32 %v2462, 65535
        %v2464 = vshrl.u32 %v2462, 16
        %v2465 = vand.u32 %v2461, 65535
        %v2466 = vshrl.u32 %v2461, 16
        %v2467 = vmul.u32 %v2463, %v2465
        %v2468 = vmul.u32 %v2463, %v2466
        %v2469 = vmul.u32 %v2464, %v2465
        %v2470 = vmul.u32 %v2464, %v2466
        %v2471 = vshll.u32 %v2468, 16
        %v2472 = vshrl.u32 %v2468, 16
        %v2473 = vshll.u32 %v2469, 16
        %v2474 = vshrl.u32 %v2469, 16
        %vm2475 = vc.u32 %v2467, %v2471
        %v2476 = vsel %vm2475, 1, 0
        %v2477 = vadd.s32 %v2467, %v2471
        %v2478 = vadd.s32 %v2470, %v2476
        %vm2479 = vc.u32 %v2477, %v2473
        %v2480 = vsel %vm2479, 1, 0
        %v2481 = vadd.s32 %v2477, %v2473
        %v2482 = vadd.s32 %v2478, %v2480
        %v2483 = vadd.s32 %v2482, %v2472
        %v2484 = vadd.s32 %v2483, %v2474
        %v2485 = vand.u32 %v2462, 65535
        %v2486 = vshrl.u32 %v2462, 16
        %v2487 = vand.u32 %v2457, 65535
        %v2488 = vshrl.u32 %v2457, 16
        %v2489 = vmul.u32 %v2485, %v2487
        %v2490 = vmul.u32 %v2485, %v2488
        %v2491 = vmul.u32 %v2486, %v2487
        %v2492 = vmul.u32 %v2486, %v2488
        %v2493 = vshll.u32 %v2490, 16
        %v2494 = vshrl.u32 %v2490, 16
        %v2495 = vshll.u32 %v2491, 16
        %v2496 = vshrl.u32 %v2491, 16
        %vm2497 = vc.u32 %v2489, %v2493
        %v2498 = vsel %vm2497, 1, 0
        %v2499 = vadd.s32 %v2489, %v2493
        %v2500 = vadd.s32 %v2492, %v2498
        %vm2501 = vc.u32 %v2499, %v2495
        %v2502 = vsel %vm2501, 1, 0
        %v2503 = vadd.s32 %v2499, %v2495
        %v2504 = vadd.s32 %v2500, %v2502
        %v2505 = vadd.s32 %v2504, %v2494
        %v2506 = vadd.s32 %v2505, %v2496
        %v2507 = vmul.u32 %v2462, %v2453
        %v2508 = vadd.s32 %v2484, %v2503
        %vm2509 = vc.u32 %v2484, %v2503
        %v2510 = vadd.s32 %v2506, 1
        %v2511 = vsel %vm2509, %v2510, %v2506
        %v2512 = vadd.s32 %v2507, %v2511
        %v2513 = vadd.s32 %v2512, 536870912
        %v2514 = vshrl.u32 %v2513, 30
        %v2515 = vshll.u32 %v2514, 30
        %v2516 = vsub.s32 %v2512, %v2515
        %vm2517 = vcmp.lt.s32.totalorder %v2516, 0
        %v2518 = vsub.s32 0, %v2516
        %v2519 = vsel %vm2517, %v2518, %v2516
        %v2520 = vclz %v2519
        %v2521 = vsub.s32 %v2520, 2
        %vm2522 = vcmp.gt.s32.totalorder 0, %v2521
        %v2523 = vsel %vm2522, 0, %v2521
        %v2524 = vsub.s32 32, %v2523
        %v2525 = vshll.u32 %v2516, %v2523
        %v2526 = vshrl.u32 %v2508, %v2524
        %v2527 = vor.u32 %v2525, %v2526
        %v2528 = vsub.s32 4294967266, %v2523
        %v2529 = vadd.s32 %v2528, 127
        %v2530 = vshll.u32 %v2529, 23
        %v2531 = vor.u32 4788187, %v2530
        %v2532 = vand.u32 2147483647, %v2531
        %v2534 = vcvt.s32.f32 %v2527
        %v2535 = vmul.f32 %v2534, %v2532
        %v2536 = vxor.u32 %v2535, 2147483648
        %v2537 = vsel %vm2416, %v2536, %v2535
        %v2538 = vsub.s32 4, %v2514
        %v2539 = vsel %vm2416, %v2538, %v2514
        %v2540 = vsel %vm2415, %v1638, %v2537
        %v2541 = vsel %vm2415, 0, %v2539
        %v2542 = vmul.f32 %v2540, %v2540
        %v2543 = vmul.f32 %v2542, -0.001358992
        %v2544 = vadd.f32 %v2543, 0.041655596
        %v2545 = vmul.f32 %v2542, %v2544
        %v2546 = vadd.f32 %v2545, -0.4999988
        %v2547 = vmul.f32 %v2542, %v2546
        %v2548 = vadd.f32 1.0, %v2547
        %v2549 = vmul.f32 %v2540, %v2540
        %v2550 = vmul.f32 %v2549, -0.00019511016
        %v2551 = vadd.f32 %v2550, 0.008332121
        %v2552 = vmul.f32 %v2549, %v2551
        %v2553 = vadd.f32 %v2552, -0.16666654
        %v2554 = vmul.f32 %v2549, %v2553
        %v2555 = vadd.f32 %v2554, 1.0
        %v2556 = vmul.f32 %v2555, %v2540
        %vm2557 = vweird.f32 %v1638
        %v2558 = vadd.s32 %v2541, 3
        %v2559 = vand.u32 %v2558, 3
        %vm2560 = vcmp.lt.s32.totalorder %v2559, 2
        %vm2561 = vcmp.eq.s32.totalorder %v2559, 0
        %v2562 = vxor.u32 %v2556, 2147483648
        %v2563 = vsel %vm2561, %v2548, %v2562
        %vm2564 = vcmp.eq.s32.totalorder %v2559, 2
        %v2565 = vxor.u32 %v2548, 2147483648
        %v2566 = vsel %vm2564, %v2565, %v2556
        %v2567 = vsel %vm2560, %v2563, %v2566
        %v2568 = vsel %vm2557, nan, %v2567
        %v2569 = vmul.f32 %v1631, %v2258
        %v2570 = vmul.f32 %v1633, %v2413
        %v2571 = vmul.f32 %v1635, %v2568
        %s2572 = scalar_lea.vmem %s3, 24
        %v2573 = vld [vmem:[%s2572] sm:$0xff]
        %v2574 = vld [vmem:[%s2572 + $0x8] sm:$0xff]
        %v2575 = vld [vmem:[%s2572 + $0x10] sm:$0x3f]
        %s2576 = scalar_lea.vmem %s4, 24
        %v2577 = vld [vmem:[%s2576] sm:$0xff]
        %v2578 = vld [vmem:[%s2576 + $0x8] sm:$0xff]
        %v2579 = vld [vmem:[%s2576 + $0x10] sm:$0x3f]
        %v2581 = vsel %vm1437, %v2573, 0
        %v2584 = vsel %vm1437, %v2574, 0
        %v2587 = vsel %vm1437, %v2575, 0
        %v2590 = vsel %vm1447, %v2103, 0
        %2592 = vmatpush.msra.mxu0 0.0
        %2593 = vmatpush.msra.mxu0 0.0
        %2594 = vmatpush.msra.mxu0 0.0
        %2595 = vmatpush.msra.mxu0 0.0
        %2596 = vmatpush.msra.mxu0 0.0
        %2597 = vmatpush.msra.mxu0 0.0
        %2598 = vmatpush.msra.mxu0 0.0
        %2599 = vmatpush.msra.mxu0 0.0
        %2600 = vmatpush.msra.mxu0 0.0
        %2601 = vmatpush.msra.mxu0 0.0
        %2602 = vmatpush.msra.mxu0 0.0
        %2603 = vmatpush.msra.mxu0 0.0
        %2604 = vmatpush.msra.mxu0 0.0
        %2605 = vmatpush.msra.mxu0 %v2590
        %2606 = vmatpush.msra.mxu0 %v2102
        %2607 = vmatpush.msra.mxu0 %v2101
        %2608 = vmatmul.f32.gmra.mxu0 %v2581
        %v2609 = vpop.f32.mrf.mxu0
        %v2610 = vadd.f32 0.0, %v2609
        %2611 = vmatmul.f32.gmra.mxu0 %v2584
        %v2612 = vpop.f32.mrf.mxu0
        %v2613 = vadd.f32 0.0, %v2612
        %2614 = vmatmul.f32.gmra.mxu0 %v2587
        %v2615 = vpop.f32.mrf.mxu0
        %v2616 = vadd.f32 0.0, %v2615
        %2617 = vdwg.mxu0
        %v2619 = vsel %vm1437, %v2577, 0
        %v2622 = vsel %vm1437, %v2578, 0
        %v2625 = vsel %vm1437, %v2579, 0
        %v2628 = vsel %vm1447, %v2571, 0
        %2630 = vmatpush.msra.mxu0 0.0
        %2631 = vmatpush.msra.mxu0 0.0
        %2632 = vmatpush.msra.mxu0 0.0
        %2633 = vmatpush.msra.mxu0 0.0
        %2634 = vmatpush.msra.mxu0 0.0
        %2635 = vmatpush.msra.mxu0 0.0
        %2636 = vmatpush.msra.mxu0 0.0
        %2637 = vmatpush.msra.mxu0 0.0
        %2638 = vmatpush.msra.mxu0 0.0
        %2639 = vmatpush.msra.mxu0 0.0
        %2640 = vmatpush.msra.mxu0 0.0
        %2641 = vmatpush.msra.mxu0 0.0
        %2642 = vmatpush.msra.mxu0 0.0
        %2643 = vmatpush.msra.mxu0 %v2628
        %2644 = vmatpush.msra.mxu0 %v2570
        %2645 = vmatpush.msra.mxu0 %v2569
        %2646 = vmatmul.f32.gmra.mxu0 %v2619
        %v2647 = vpop.f32.mrf.mxu0
        %v2648 = vadd.f32 0.0, %v2647
        %2649 = vmatmul.f32.gmra.mxu0 %v2622
        %v2650 = vpop.f32.mrf.mxu0
        %v2651 = vadd.f32 0.0, %v2650
        %2652 = vmatmul.f32.gmra.mxu0 %v2625
        %v2653 = vpop.f32.mrf.mxu0
        %v2654 = vadd.f32 0.0, %v2653
        %2655 = vdwg.mxu0
        %v2656 = vsub.f32 %v2610, %v2648
        %v2657 = vsub.f32 %v2613, %v2651
        %v2658 = vsub.f32 %v2616, %v2654
        %s2659 = scalar_lea.vmem %s5, 24
        %v2660 = vld [vmem:[%s2659] sm:$0xff]
        %v2661 = vld [vmem:[%s2659 + $0x8] sm:$0xff]
        %v2662 = vld [vmem:[%s2659 + $0x10] sm:$0x3f]
        %2664 = vset.pattern.permute.xlu0 0
        %2665 = vperm.xlu0 %2664, %v2660
        %v2666 = vpop.permute.xlu0 %2665
        %2669 = vset.pattern.permute.xlu0 0
        %2670 = vperm.xlu0 %2669, %v2661
        %v2671 = vpop.permute.xlu0 %2670
        %2674 = vset.pattern.permute.xlu0 0
        %2675 = vperm.xlu0 %2674, %v2662
        %v2676 = vpop.permute.xlu0 %2675
        %v2678 = vadd.f32 %v2656, %v2666
        %v2679 = vadd.f32 %v2657, %v2671
        %v2680 = vadd.f32 %v2658, %v2676
        %2681 = vmatpush.msra.mxu0 0.0
        %2682 = vmatpush.msra.mxu0 0.0
        %2683 = vmatpush.msra.mxu0 0.0
        %2684 = vmatpush.msra.mxu0 0.0
        %2685 = vmatpush.msra.mxu0 0.0
        %2686 = vmatpush.msra.mxu0 0.0
        %2687 = vmatpush.msra.mxu0 0.0
        %2688 = vmatpush.msra.mxu0 0.0
        %2689 = vmatpush.msra.mxu0 0.0
        %2690 = vmatpush.msra.mxu0 0.0
        %2691 = vmatpush.msra.mxu0 0.0
        %2692 = vmatpush.msra.mxu0 0.0
        %2693 = vmatpush.msra.mxu0 0.0
        %2694 = vmatpush.msra.mxu0 %v2590
        %2695 = vmatpush.msra.mxu0 %v2102
        %2696 = vmatpush.msra.mxu0 %v2101
        %2697 = vmatmul.f32.gmra.mxu0 %v2619
        %v2698 = vpop.f32.mrf.mxu0
        %v2699 = vadd.f32 0.0, %v2698
        %2700 = vmatmul.f32.gmra.mxu0 %v2622
        %v2701 = vpop.f32.mrf.mxu0
        %v2702 = vadd.f32 0.0, %v2701
        %2703 = vmatmul.f32.gmra.mxu0 %v2625
        %v2704 = vpop.f32.mrf.mxu0
        %v2705 = vadd.f32 0.0, %v2704
        %2706 = vdwg.mxu0
        %2707 = vmatpush.msra.mxu0 0.0
        %2708 = vmatpush.msra.mxu0 0.0
        %2709 = vmatpush.msra.mxu0 0.0
        %2710 = vmatpush.msra.mxu0 0.0
        %2711 = vmatpush.msra.mxu0 0.0
        %2712 = vmatpush.msra.mxu0 0.0
        %2713 = vmatpush.msra.mxu0 0.0
        %2714 = vmatpush.msra.mxu0 0.0
        %2715 = vmatpush.msra.mxu0 0.0
        %2716 = vmatpush.msra.mxu0 0.0
        %2717 = vmatpush.msra.mxu0 0.0
        %2718 = vmatpush.msra.mxu0 0.0
        %2719 = vmatpush.msra.mxu0 0.0
        %2720 = vmatpush.msra.mxu0 %v2628
        %2721 = vmatpush.msra.mxu0 %v2570
        %2722 = vmatpush.msra.mxu0 %v2569
        %2723 = vmatmul.f32.gmra.mxu0 %v2581
        %v2724 = vpop.f32.mrf.mxu0
        %v2725 = vadd.f32 %v2699, %v2724
        %2726 = vmatmul.f32.gmra.mxu0 %v2584
        %v2727 = vpop.f32.mrf.mxu0
        %v2728 = vadd.f32 %v2702, %v2727
        %2729 = vmatmul.f32.gmra.mxu0 %v2587
        %v2730 = vpop.f32.mrf.mxu0
        %v2731 = vadd.f32 %v2705, %v2730
        %2732 = vdwg.mxu0
        %s2733 = scalar_lea.vmem %s6, 24
        %v2734 = vld [vmem:[%s2733] sm:$0xff]
        %v2735 = vld [vmem:[%s2733 + $0x8] sm:$0xff]
        %v2736 = vld [vmem:[%s2733 + $0x10] sm:$0x3f]
        %2738 = vset.pattern.permute.xlu0 0
        %2739 = vperm.xlu0 %2738, %v2734
        %v2740 = vpop.permute.xlu0 %2739
        %2743 = vset.pattern.permute.xlu0 0
        %2744 = vperm.xlu0 %2743, %v2735
        %v2745 = vpop.permute.xlu0 %2744
        %2748 = vset.pattern.permute.xlu0 0
        %2749 = vperm.xlu0 %2748, %v2736
        %v2750 = vpop.permute.xlu0 %2749
        %v2752 = vadd.f32 %v2725, %v2740
        %v2753 = vadd.f32 %v2728, %v2745
        %v2754 = vadd.f32 %v2731, %v2750
        %v2755 = vmul.f32 %v2752, -20.0
        %v2756 = vmul.f32 %v2753, -20.0
        %v2757 = vmul.f32 %v2754, -20.0
        %v2758 = vmul.f32 %v2678, %v2678
        %v2759 = vmul.f32 %v2679, %v2679
        %v2760 = vmul.f32 %v2680, %v2680
        %v2761 = vmul.f32 %v2752, %v2752
        %v2762 = vmul.f32 %v2753, %v2753
        %v2763 = vmul.f32 %v2754, %v2754
        %v2764 = vadd.f32 %v2758, %v2761
        %v2765 = vadd.f32 %v2759, %v2762
        %v2766 = vadd.f32 %v2760, %v2763
        %v2767 = vmul.f32 %v2764, 100.0
        %v2768 = vmul.f32 %v2765, 100.0
        %v2769 = vmul.f32 %v2766, 100.0
        %v2770 = vsub.f32 %v2755, %v2767
        %v2771 = vsub.f32 %v2756, %v2768
        %v2772 = vsub.f32 %v2757, %v2769
        %v2773 = vmul.f32 %v2770, 1.442695
        %v2774 = vpow.pop %v2773
        %v2775 = vmul.f32 %v2771, 1.442695
        %v2776 = vpow.pop %v2775
        %v2777 = vmul.f32 %v2772, 1.442695
        %v2778 = vpow.pop %v2777
        %v2779 = vmul.f32 %v2678, 20.0
        %v2780 = vmul.f32 %v2679, 20.0
        %v2781 = vmul.f32 %v2680, 20.0
        %v2782 = vand.u32 2147483647, %v2779
        %vm2783 = vcmp.le.f32.partialorder %v2782, 0.7853982
        %vm2784 = vcmp.lt.s32.totalorder %v2779, 0
        %v2785 = vand.u32 %v2779, 2139095040
        %v2786 = vshrl.u32 %v2785, 23
        %v2787 = vsub.s32 %v2786, 127
        %v2788 = vand.u32 2147483647, %v2779
        %v2789 = vand.u32 %v2788, 8388607
        %v2790 = vor.u32 %v2789, 8388608
        %v2791 = vsub.s32 0, %v2790
        %v2792 = vadd.s32 %v2787, 1
        %vm2793 = vcmp.gt.s32.totalorder %v2792, 0
        %v2794 = vsel %vm2793, %v2792, 0
        %v2795 = vshrl.u32 %v2794, 5
        %v2796 = vand.u32 %v2794, 31
        %v2797 = vsub.s32 32, %v2796
        %v2798 = vshrl.u32 683565275, %v2797
        %v2799 = vshll.u32 683565275, %v2796
        %v2800 = vshrl.u32 2475754826, %v2797
        %v2801 = vor.u32 %v2799, %v2800
        %v2802 = vshll.u32 2475754826, %v2796
        %v2803 = vshrl.u32 2131351028, %v2797
        %v2804 = vor.u32 %v2802, %v2803
        %v2805 = vshll.u32 2131351028, %v2796
        %v2806 = vshrl.u32 2102212464, %v2797
        %v2807 = vor.u32 %v2805, %v2806
        %v2808 = vshll.u32 2102212464, %v2796
        %v2809 = vshrl.u32 920167782, %v2797
        %v2810 = vor.u32 %v2808, %v2809
        %v2811 = vshll.u32 920167782, %v2796
        %v2812 = vshrl.u32 1326507024, %v2797
        %v2813 = vor.u32 %v2811, %v2812
        %vm2814 = vcmp.lt.s32.totalorder %v2795, 1
        %vm2815 = vcmp.lt.s32.totalorder %v2795, 2
        %vm2816 = vcmp.lt.s32.totalorder %v2795, 3
        %vm2817 = vcmp.lt.s32.totalorder %v2795, 4
        %v2818 = vsel %vm2814, %v2798, %v2801
        %v2819 = vsel %vm2817, %v2807, 2102212464
        %v2820 = vsel %vm2816, %v2804, %v2819
        %v2821 = vsel %vm2815, %v2818, %v2820
        %v2822 = vsel %vm2814, %v2801, %v2804
        %v2823 = vsel %vm2817, %v2810, 920167782
        %v2824 = vsel %vm2816, %v2807, %v2823
        %v2825 = vsel %vm2815, %v2822, %v2824
        %v2826 = vsel %vm2814, %v2804, %v2807
        %v2827 = vsel %vm2817, %v2813, 1326507024
        %v2828 = vsel %vm2816, %v2810, %v2827
        %v2829 = vsel %vm2815, %v2826, %v2828
        %v2830 = vshll.u32 %v2790, 8
        %v2831 = vand.u32 %v2830, 65535
        %v2832 = vshrl.u32 %v2830, 16
        %v2833 = vand.u32 %v2829, 65535
        %v2834 = vshrl.u32 %v2829, 16
        %v2835 = vmul.u32 %v2831, %v2833
        %v2836 = vmul.u32 %v2831, %v2834
        %v2837 = vmul.u32 %v2832, %v2833
        %v2838 = vmul.u32 %v2832, %v2834
        %v2839 = vshll.u32 %v2836, 16
        %v2840 = vshrl.u32 %v2836, 16
        %v2841 = vshll.u32 %v2837, 16
        %v2842 = vshrl.u32 %v2837, 16
        %vm2843 = vc.u32 %v2835, %v2839
        %v2844 = vsel %vm2843, 1, 0
        %v2845 = vadd.s32 %v2835, %v2839
        %v2846 = vadd.s32 %v2838, %v2844
        %vm2847 = vc.u32 %v2845, %v2841
        %v2848 = vsel %vm2847, 1, 0
        %v2849 = vadd.s32 %v2845, %v2841
        %v2850 = vadd.s32 %v2846, %v2848
        %v2851 = vadd.s32 %v2850, %v2840
        %v2852 = vadd.s32 %v2851, %v2842
        %v2853 = vand.u32 %v2830, 65535
        %v2854 = vshrl.u32 %v2830, 16
        %v2855 = vand.u32 %v2825, 65535
        %v2856 = vshrl.u32 %v2825, 16
        %v2857 = vmul.u32 %v2853, %v2855
        %v2858 = vmul.u32 %v2853, %v2856
        %v2859 = vmul.u32 %v2854, %v2855
        %v2860 = vmul.u32 %v2854, %v2856
        %v2861 = vshll.u32 %v2858, 16
        %v2862 = vshrl.u32 %v2858, 16
        %v2863 = vshll.u32 %v2859, 16
        %v2864 = vshrl.u32 %v2859, 16
        %vm2865 = vc.u32 %v2857, %v2861
        %v2866 = vsel %vm2865, 1, 0
        %v2867 = vadd.s32 %v2857, %v2861
        %v2868 = vadd.s32 %v2860, %v2866
        %vm2869 = vc.u32 %v2867, %v2863
        %v2870 = vsel %vm2869, 1, 0
        %v2871 = vadd.s32 %v2867, %v2863
        %v2872 = vadd.s32 %v2868, %v2870
        %v2873 = vadd.s32 %v2872, %v2862
        %v2874 = vadd.s32 %v2873, %v2864
        %v2875 = vmul.u32 %v2830, %v2821
        %v2876 = vadd.s32 %v2852, %v2871
        %vm2877 = vc.u32 %v2852, %v2871
        %v2878 = vadd.s32 %v2874, 1
        %v2879 = vsel %vm2877, %v2878, %v2874
        %v2880 = vadd.s32 %v2875, %v2879
        %v2881 = vadd.s32 %v2880, 536870912
        %v2882 = vshrl.u32 %v2881, 30
        %v2883 = vshll.u32 %v2882, 30
        %v2884 = vsub.s32 %v2880, %v2883
        %vm2885 = vcmp.lt.s32.totalorder %v2884, 0
        %v2886 = vsub.s32 0, %v2884
        %v2887 = vsel %vm2885, %v2886, %v2884
        %v2888 = vclz %v2887
        %v2889 = vsub.s32 %v2888, 2
        %vm2890 = vcmp.gt.s32.totalorder 0, %v2889
        %v2891 = vsel %vm2890, 0, %v2889
        %v2892 = vsub.s32 32, %v2891
        %v2893 = vshll.u32 %v2884, %v2891
        %v2894 = vshrl.u32 %v2876, %v2892
        %v2895 = vor.u32 %v2893, %v2894
        %v2896 = vsub.s32 4294967266, %v2891
        %v2897 = vadd.s32 %v2896, 127
        %v2898 = vshll.u32 %v2897, 23
        %v2899 = vor.u32 4788187, %v2898
        %v2900 = vand.u32 2147483647, %v2899
        %v2902 = vcvt.s32.f32 %v2895
        %v2903 = vmul.f32 %v2902, %v2900
        %v2904 = vxor.u32 %v2903, 2147483648
        %v2905 = vsel %vm2784, %v2904, %v2903
        %v2906 = vsub.s32 4, %v2882
        %v2907 = vsel %vm2784, %v2906, %v2882
        %v2908 = vsel %vm2783, %v2779, %v2905
        %v2909 = vsel %vm2783, 0, %v2907
        %v2910 = vmul.f32 %v2908, %v2908
        %v2911 = vmul.f32 %v2910, -0.001358992
        %v2912 = vadd.f32 %v2911, 0.041655596
        %v2913 = vmul.f32 %v2910, %v2912
        %v2914 = vadd.f32 %v2913, -0.4999988
        %v2915 = vmul.f32 %v2910, %v2914
        %v2916 = vadd.f32 1.0, %v2915
        %v2917 = vmul.f32 %v2908, %v2908
        %v2918 = vmul.f32 %v2917, -0.00019511016
        %v2919 = vadd.f32 %v2918, 0.008332121
        %v2920 = vmul.f32 %v2917, %v2919
        %v2921 = vadd.f32 %v2920, -0.16666654
        %v2922 = vmul.f32 %v2917, %v2921
        %v2923 = vadd.f32 %v2922, 1.0
        %v2924 = vmul.f32 %v2923, %v2908
        %vm2925 = vweird.f32 %v2779
        %v2926 = vand.u32 %v2909, 3
        %vm2927 = vcmp.lt.s32.totalorder %v2926, 2
        %vm2928 = vcmp.eq.s32.totalorder %v2926, 0
        %v2929 = vxor.u32 %v2924, 2147483648
        %v2930 = vsel %vm2928, %v2916, %v2929
        %vm2931 = vcmp.eq.s32.totalorder %v2926, 2
        %v2932 = vxor.u32 %v2916, 2147483648
        %v2933 = vsel %vm2931, %v2932, %v2924
        %v2934 = vsel %vm2927, %v2930, %v2933
        %v2935 = vsel %vm2925, nan, %v2934
        %v2936 = vand.u32 2147483647, %v2780
        %vm2937 = vcmp.le.f32.partialorder %v2936, 0.7853982
        %vm2938 = vcmp.lt.s32.totalorder %v2780, 0
        %v2939 = vand.u32 %v2780, 2139095040
        %v2940 = vshrl.u32 %v2939, 23
        %v2941 = vsub.s32 %v2940, 127
        %v2942 = vand.u32 2147483647, %v2780
        %v2943 = vand.u32 %v2942, 8388607
        %v2944 = vor.u32 %v2943, 8388608
        %v2945 = vsub.s32 0, %v2944
        %v2946 = vadd.s32 %v2941, 1
        %vm2947 = vcmp.gt.s32.totalorder %v2946, 0
        %v2948 = vsel %vm2947, %v2946, 0
        %v2949 = vshrl.u32 %v2948, 5
        %v2950 = vand.u32 %v2948, 31
        %v2951 = vsub.s32 32, %v2950
        %v2952 = vshrl.u32 683565275, %v2951
        %v2953 = vshll.u32 683565275, %v2950
        %v2954 = vshrl.u32 2475754826, %v2951
        %v2955 = vor.u32 %v2953, %v2954
        %v2956 = vshll.u32 2475754826, %v2950
        %v2957 = vshrl.u32 2131351028, %v2951
        %v2958 = vor.u32 %v2956, %v2957
        %v2959 = vshll.u32 2131351028, %v2950
        %v2960 = vshrl.u32 2102212464, %v2951
        %v2961 = vor.u32 %v2959, %v2960
        %v2962 = vshll.u32 2102212464, %v2950
        %v2963 = vshrl.u32 920167782, %v2951
        %v2964 = vor.u32 %v2962, %v2963
        %v2965 = vshll.u32 920167782, %v2950
        %v2966 = vshrl.u32 1326507024, %v2951
        %v2967 = vor.u32 %v2965, %v2966
        %vm2968 = vcmp.lt.s32.totalorder %v2949, 1
        %vm2969 = vcmp.lt.s32.totalorder %v2949, 2
        %vm2970 = vcmp.lt.s32.totalorder %v2949, 3
        %vm2971 = vcmp.lt.s32.totalorder %v2949, 4
        %v2972 = vsel %vm2968, %v2952, %v2955
        %v2973 = vsel %vm2971, %v2961, 2102212464
        %v2974 = vsel %vm2970, %v2958, %v2973
        %v2975 = vsel %vm2969, %v2972, %v2974
        %v2976 = vsel %vm2968, %v2955, %v2958
        %v2977 = vsel %vm2971, %v2964, 920167782
        %v2978 = vsel %vm2970, %v2961, %v2977
        %v2979 = vsel %vm2969, %v2976, %v2978
        %v2980 = vsel %vm2968, %v2958, %v2961
        %v2981 = vsel %vm2971, %v2967, 1326507024
        %v2982 = vsel %vm2970, %v2964, %v2981
        %v2983 = vsel %vm2969, %v2980, %v2982
        %v2984 = vshll.u32 %v2944, 8
        %v2985 = vand.u32 %v2984, 65535
        %v2986 = vshrl.u32 %v2984, 16
        %v2987 = vand.u32 %v2983, 65535
        %v2988 = vshrl.u32 %v2983, 16
        %v2989 = vmul.u32 %v2985, %v2987
        %v2990 = vmul.u32 %v2985, %v2988
        %v2991 = vmul.u32 %v2986, %v2987
        %v2992 = vmul.u32 %v2986, %v2988
        %v2993 = vshll.u32 %v2990, 16
        %v2994 = vshrl.u32 %v2990, 16
        %v2995 = vshll.u32 %v2991, 16
        %v2996 = vshrl.u32 %v2991, 16
        %vm2997 = vc.u32 %v2989, %v2993
        %v2998 = vsel %vm2997, 1, 0
        %v2999 = vadd.s32 %v2989, %v2993
        %v3000 = vadd.s32 %v2992, %v2998
        %vm3001 = vc.u32 %v2999, %v2995
        %v3002 = vsel %vm3001, 1, 0
        %v3003 = vadd.s32 %v2999, %v2995
        %v3004 = vadd.s32 %v3000, %v3002
        %v3005 = vadd.s32 %v3004, %v2994
        %v3006 = vadd.s32 %v3005, %v2996
        %v3007 = vand.u32 %v2984, 65535
        %v3008 = vshrl.u32 %v2984, 16
        %v3009 = vand.u32 %v2979, 65535
        %v3010 = vshrl.u32 %v2979, 16
        %v3011 = vmul.u32 %v3007, %v3009
        %v3012 = vmul.u32 %v3007, %v3010
        %v3013 = vmul.u32 %v3008, %v3009
        %v3014 = vmul.u32 %v3008, %v3010
        %v3015 = vshll.u32 %v3012, 16
        %v3016 = vshrl.u32 %v3012, 16
        %v3017 = vshll.u32 %v3013, 16
        %v3018 = vshrl.u32 %v3013, 16
        %vm3019 = vc.u32 %v3011, %v3015
        %v3020 = vsel %vm3019, 1, 0
        %v3021 = vadd.s32 %v3011, %v3015
        %v3022 = vadd.s32 %v3014, %v3020
        %vm3023 = vc.u32 %v3021, %v3017
        %v3024 = vsel %vm3023, 1, 0
        %v3025 = vadd.s32 %v3021, %v3017
        %v3026 = vadd.s32 %v3022, %v3024
        %v3027 = vadd.s32 %v3026, %v3016
        %v3028 = vadd.s32 %v3027, %v3018
        %v3029 = vmul.u32 %v2984, %v2975
        %v3030 = vadd.s32 %v3006, %v3025
        %vm3031 = vc.u32 %v3006, %v3025
        %v3032 = vadd.s32 %v3028, 1
        %v3033 = vsel %vm3031, %v3032, %v3028
        %v3034 = vadd.s32 %v3029, %v3033
        %v3035 = vadd.s32 %v3034, 536870912
        %v3036 = vshrl.u32 %v3035, 30
        %v3037 = vshll.u32 %v3036, 30
        %v3038 = vsub.s32 %v3034, %v3037
        %vm3039 = vcmp.lt.s32.totalorder %v3038, 0
        %v3040 = vsub.s32 0, %v3038
        %v3041 = vsel %vm3039, %v3040, %v3038
        %v3042 = vclz %v3041
        %v3043 = vsub.s32 %v3042, 2
        %vm3044 = vcmp.gt.s32.totalorder 0, %v3043
        %v3045 = vsel %vm3044, 0, %v3043
        %v3046 = vsub.s32 32, %v3045
        %v3047 = vshll.u32 %v3038, %v3045
        %v3048 = vshrl.u32 %v3030, %v3046
        %v3049 = vor.u32 %v3047, %v3048
        %v3050 = vsub.s32 4294967266, %v3045
        %v3051 = vadd.s32 %v3050, 127
        %v3052 = vshll.u32 %v3051, 23
        %v3053 = vor.u32 4788187, %v3052
        %v3054 = vand.u32 2147483647, %v3053
        %v3056 = vcvt.s32.f32 %v3049
        %v3057 = vmul.f32 %v3056, %v3054
        %v3058 = vxor.u32 %v3057, 2147483648
        %v3059 = vsel %vm2938, %v3058, %v3057
        %v3060 = vsub.s32 4, %v3036
        %v3061 = vsel %vm2938, %v3060, %v3036
        %v3062 = vsel %vm2937, %v2780, %v3059
        %v3063 = vsel %vm2937, 0, %v3061
        %v3064 = vmul.f32 %v3062, %v3062
        %v3065 = vmul.f32 %v3064, -0.001358992
        %v3066 = vadd.f32 %v3065, 0.041655596
        %v3067 = vmul.f32 %v3064, %v3066
        %v3068 = vadd.f32 %v3067, -0.4999988
        %v3069 = vmul.f32 %v3064, %v3068
        %v3070 = vadd.f32 1.0, %v3069
        %v3071 = vmul.f32 %v3062, %v3062
        %v3072 = vmul.f32 %v3071, -0.00019511016
        %v3073 = vadd.f32 %v3072, 0.008332121
        %v3074 = vmul.f32 %v3071, %v3073
        %v3075 = vadd.f32 %v3074, -0.16666654
        %v3076 = vmul.f32 %v3071, %v3075
        %v3077 = vadd.f32 %v3076, 1.0
        %v3078 = vmul.f32 %v3077, %v3062
        %vm3079 = vweird.f32 %v2780
        %v3080 = vand.u32 %v3063, 3
        %vm3081 = vcmp.lt.s32.totalorder %v3080, 2
        %vm3082 = vcmp.eq.s32.totalorder %v3080, 0
        %v3083 = vxor.u32 %v3078, 2147483648
        %v3084 = vsel %vm3082, %v3070, %v3083
        %vm3085 = vcmp.eq.s32.totalorder %v3080, 2
        %v3086 = vxor.u32 %v3070, 2147483648
        %v3087 = vsel %vm3085, %v3086, %v3078
        %v3088 = vsel %vm3081, %v3084, %v3087
        %v3089 = vsel %vm3079, nan, %v3088
        %v3090 = vand.u32 2147483647, %v2781
        %vm3091 = vcmp.le.f32.partialorder %v3090, 0.7853982
        %vm3092 = vcmp.lt.s32.totalorder %v2781, 0
        %v3093 = vand.u32 %v2781, 2139095040
        %v3094 = vshrl.u32 %v3093, 23
        %v3095 = vsub.s32 %v3094, 127
        %v3096 = vand.u32 2147483647, %v2781
        %v3097 = vand.u32 %v3096, 8388607
        %v3098 = vor.u32 %v3097, 8388608
        %v3099 = vsub.s32 0, %v3098
        %v3100 = vadd.s32 %v3095, 1
        %vm3101 = vcmp.gt.s32.totalorder %v3100, 0
        %v3102 = vsel %vm3101, %v3100, 0
        %v3103 = vshrl.u32 %v3102, 5
        %v3104 = vand.u32 %v3102, 31
        %v3105 = vsub.s32 32, %v3104
        %v3106 = vshrl.u32 683565275, %v3105
        %v3107 = vshll.u32 683565275, %v3104
        %v3108 = vshrl.u32 2475754826, %v3105
        %v3109 = vor.u32 %v3107, %v3108
        %v3110 = vshll.u32 2475754826, %v3104
        %v3111 = vshrl.u32 2131351028, %v3105
        %v3112 = vor.u32 %v3110, %v3111
        %v3113 = vshll.u32 2131351028, %v3104
        %v3114 = vshrl.u32 2102212464, %v3105
        %v3115 = vor.u32 %v3113, %v3114
        %v3116 = vshll.u32 2102212464, %v3104
        %v3117 = vshrl.u32 920167782, %v3105
        %v3118 = vor.u32 %v3116, %v3117
        %v3119 = vshll.u32 920167782, %v3104
        %v3120 = vshrl.u32 1326507024, %v3105
        %v3121 = vor.u32 %v3119, %v3120
        %vm3122 = vcmp.lt.s32.totalorder %v3103, 1
        %vm3123 = vcmp.lt.s32.totalorder %v3103, 2
        %vm3124 = vcmp.lt.s32.totalorder %v3103, 3
        %vm3125 = vcmp.lt.s32.totalorder %v3103, 4
        %v3126 = vsel %vm3122, %v3106, %v3109
        %v3127 = vsel %vm3125, %v3115, 2102212464
        %v3128 = vsel %vm3124, %v3112, %v3127
        %v3129 = vsel %vm3123, %v3126, %v3128
        %v3130 = vsel %vm3122, %v3109, %v3112
        %v3131 = vsel %vm3125, %v3118, 920167782
        %v3132 = vsel %vm3124, %v3115, %v3131
        %v3133 = vsel %vm3123, %v3130, %v3132
        %v3134 = vsel %vm3122, %v3112, %v3115
        %v3135 = vsel %vm3125, %v3121, 1326507024
        %v3136 = vsel %vm3124, %v3118, %v3135
        %v3137 = vsel %vm3123, %v3134, %v3136
        %v3138 = vshll.u32 %v3098, 8
        %v3139 = vand.u32 %v3138, 65535
        %v3140 = vshrl.u32 %v3138, 16
        %v3141 = vand.u32 %v3137, 65535
        %v3142 = vshrl.u32 %v3137, 16
        %v3143 = vmul.u32 %v3139, %v3141
        %v3144 = vmul.u32 %v3139, %v3142
        %v3145 = vmul.u32 %v3140, %v3141
        %v3146 = vmul.u32 %v3140, %v3142
        %v3147 = vshll.u32 %v3144, 16
        %v3148 = vshrl.u32 %v3144, 16
        %v3149 = vshll.u32 %v3145, 16
        %v3150 = vshrl.u32 %v3145, 16
        %vm3151 = vc.u32 %v3143, %v3147
        %v3152 = vsel %vm3151, 1, 0
        %v3153 = vadd.s32 %v3143, %v3147
        %v3154 = vadd.s32 %v3146, %v3152
        %vm3155 = vc.u32 %v3153, %v3149
        %v3156 = vsel %vm3155, 1, 0
        %v3157 = vadd.s32 %v3153, %v3149
        %v3158 = vadd.s32 %v3154, %v3156
        %v3159 = vadd.s32 %v3158, %v3148
        %v3160 = vadd.s32 %v3159, %v3150
        %v3161 = vand.u32 %v3138, 65535
        %v3162 = vshrl.u32 %v3138, 16
        %v3163 = vand.u32 %v3133, 65535
        %v3164 = vshrl.u32 %v3133, 16
        %v3165 = vmul.u32 %v3161, %v3163
        %v3166 = vmul.u32 %v3161, %v3164
        %v3167 = vmul.u32 %v3162, %v3163
        %v3168 = vmul.u32 %v3162, %v3164
        %v3169 = vshll.u32 %v3166, 16
        %v3170 = vshrl.u32 %v3166, 16
        %v3171 = vshll.u32 %v3167, 16
        %v3172 = vshrl.u32 %v3167, 16
        %vm3173 = vc.u32 %v3165, %v3169
        %v3174 = vsel %vm3173, 1, 0
        %v3175 = vadd.s32 %v3165, %v3169
        %v3176 = vadd.s32 %v3168, %v3174
        %vm3177 = vc.u32 %v3175, %v3171
        %v3178 = vsel %vm3177, 1, 0
        %v3179 = vadd.s32 %v3175, %v3171
        %v3180 = vadd.s32 %v3176, %v3178
        %v3181 = vadd.s32 %v3180, %v3170
        %v3182 = vadd.s32 %v3181, %v3172
        %v3183 = vmul.u32 %v3138, %v3129
        %v3184 = vadd.s32 %v3160, %v3179
        %vm3185 = vc.u32 %v3160, %v3179
        %v3186 = vadd.s32 %v3182, 1
        %v3187 = vsel %vm3185, %v3186, %v3182
        %v3188 = vadd.s32 %v3183, %v3187
        %v3189 = vadd.s32 %v3188, 536870912
        %v3190 = vshrl.u32 %v3189, 30
        %v3191 = vshll.u32 %v3190, 30
        %v3192 = vsub.s32 %v3188, %v3191
        %vm3193 = vcmp.lt.s32.totalorder %v3192, 0
        %v3194 = vsub.s32 0, %v3192
        %v3195 = vsel %vm3193, %v3194, %v3192
        %v3196 = vclz %v3195
        %v3197 = vsub.s32 %v3196, 2
        %vm3198 = vcmp.gt.s32.totalorder 0, %v3197
        %v3199 = vsel %vm3198, 0, %v3197
        %v3200 = vsub.s32 32, %v3199
        %v3201 = vshll.u32 %v3192, %v3199
        %v3202 = vshrl.u32 %v3184, %v3200
        %v3203 = vor.u32 %v3201, %v3202
        %v3204 = vsub.s32 4294967266, %v3199
        %v3205 = vadd.s32 %v3204, 127
        %v3206 = vshll.u32 %v3205, 23
        %v3207 = vor.u32 4788187, %v3206
        %v3208 = vand.u32 2147483647, %v3207
        %v3210 = vcvt.s32.f32 %v3203
        %v3211 = vmul.f32 %v3210, %v3208
        %v3212 = vxor.u32 %v3211, 2147483648
        %v3213 = vsel %vm3092, %v3212, %v3211
        %v3214 = vsub.s32 4, %v3190
        %v3215 = vsel %vm3092, %v3214, %v3190
        %v3216 = vsel %vm3091, %v2781, %v3213
        %v3217 = vsel %vm3091, 0, %v3215
        %v3218 = vmul.f32 %v3216, %v3216
        %v3219 = vmul.f32 %v3218, -0.001358992
        %v3220 = vadd.f32 %v3219, 0.041655596
        %v3221 = vmul.f32 %v3218, %v3220
        %v3222 = vadd.f32 %v3221, -0.4999988
        %v3223 = vmul.f32 %v3218, %v3222
        %v3224 = vadd.f32 1.0, %v3223
        %v3225 = vmul.f32 %v3216, %v3216
        %v3226 = vmul.f32 %v3225, -0.00019511016
        %v3227 = vadd.f32 %v3226, 0.008332121
        %v3228 = vmul.f32 %v3225, %v3227
        %v3229 = vadd.f32 %v3228, -0.16666654
        %v3230 = vmul.f32 %v3225, %v3229
        %v3231 = vadd.f32 %v3230, 1.0
        %v3232 = vmul.f32 %v3231, %v3216
        %vm3233 = vweird.f32 %v2781
        %v3234 = vand.u32 %v3217, 3
        %vm3235 = vcmp.lt.s32.totalorder %v3234, 2
        %vm3236 = vcmp.eq.s32.totalorder %v3234, 0
        %v3237 = vxor.u32 %v3232, 2147483648
        %v3238 = vsel %vm3236, %v3224, %v3237
        %vm3239 = vcmp.eq.s32.totalorder %v3234, 2
        %v3240 = vxor.u32 %v3224, 2147483648
        %v3241 = vsel %vm3239, %v3240, %v3232
        %v3242 = vsel %vm3235, %v3238, %v3241
        %v3243 = vsel %vm3233, nan, %v3242
        %v3244 = vmul.f32 %v2774, %v2935
        %v3245 = vmul.f32 %v2776, %v3089
        %v3246 = vmul.f32 %v2778, %v3243
        %v3247 = vand.u32 2147483647, %v2779
        %vm3248 = vcmp.le.f32.partialorder %v3247, 0.7853982
        %vm3249 = vcmp.lt.s32.totalorder %v2779, 0
        %v3250 = vand.u32 %v2779, 2139095040
        %v3251 = vshrl.u32 %v3250, 23
        %v3252 = vsub.s32 %v3251, 127
        %v3253 = vand.u32 2147483647, %v2779
        %v3254 = vand.u32 %v3253, 8388607
        %v3255 = vor.u32 %v3254, 8388608
        %v3256 = vsub.s32 0, %v3255
        %v3257 = vadd.s32 %v3252, 1
        %vm3258 = vcmp.gt.s32.totalorder %v3257, 0
        %v3259 = vsel %vm3258, %v3257, 0
        %v3260 = vshrl.u32 %v3259, 5
        %v3261 = vand.u32 %v3259, 31
        %v3262 = vsub.s32 32, %v3261
        %v3263 = vshrl.u32 683565275, %v3262
        %v3264 = vshll.u32 683565275, %v3261
        %v3265 = vshrl.u32 2475754826, %v3262
        %v3266 = vor.u32 %v3264, %v3265
        %v3267 = vshll.u32 2475754826, %v3261
        %v3268 = vshrl.u32 2131351028, %v3262
        %v3269 = vor.u32 %v3267, %v3268
        %v3270 = vshll.u32 2131351028, %v3261
        %v3271 = vshrl.u32 2102212464, %v3262
        %v3272 = vor.u32 %v3270, %v3271
        %v3273 = vshll.u32 2102212464, %v3261
        %v3274 = vshrl.u32 920167782, %v3262
        %v3275 = vor.u32 %v3273, %v3274
        %v3276 = vshll.u32 920167782, %v3261
        %v3277 = vshrl.u32 1326507024, %v3262
        %v3278 = vor.u32 %v3276, %v3277
        %vm3279 = vcmp.lt.s32.totalorder %v3260, 1
        %vm3280 = vcmp.lt.s32.totalorder %v3260, 2
        %vm3281 = vcmp.lt.s32.totalorder %v3260, 3
        %vm3282 = vcmp.lt.s32.totalorder %v3260, 4
        %v3283 = vsel %vm3279, %v3263, %v3266
        %v3284 = vsel %vm3282, %v3272, 2102212464
        %v3285 = vsel %vm3281, %v3269, %v3284
        %v3286 = vsel %vm3280, %v3283, %v3285
        %v3287 = vsel %vm3279, %v3266, %v3269
        %v3288 = vsel %vm3282, %v3275, 920167782
        %v3289 = vsel %vm3281, %v3272, %v3288
        %v3290 = vsel %vm3280, %v3287, %v3289
        %v3291 = vsel %vm3279, %v3269, %v3272
        %v3292 = vsel %vm3282, %v3278, 1326507024
        %v3293 = vsel %vm3281, %v3275, %v3292
        %v3294 = vsel %vm3280, %v3291, %v3293
        %v3295 = vshll.u32 %v3255, 8
        %v3296 = vand.u32 %v3295, 65535
        %v3297 = vshrl.u32 %v3295, 16
        %v3298 = vand.u32 %v3294, 65535
        %v3299 = vshrl.u32 %v3294, 16
        %v3300 = vmul.u32 %v3296, %v3298
        %v3301 = vmul.u32 %v3296, %v3299
        %v3302 = vmul.u32 %v3297, %v3298
        %v3303 = vmul.u32 %v3297, %v3299
        %v3304 = vshll.u32 %v3301, 16
        %v3305 = vshrl.u32 %v3301, 16
        %v3306 = vshll.u32 %v3302, 16
        %v3307 = vshrl.u32 %v3302, 16
        %vm3308 = vc.u32 %v3300, %v3304
        %v3309 = vsel %vm3308, 1, 0
        %v3310 = vadd.s32 %v3300, %v3304
        %v3311 = vadd.s32 %v3303, %v3309
        %vm3312 = vc.u32 %v3310, %v3306
        %v3313 = vsel %vm3312, 1, 0
        %v3314 = vadd.s32 %v3310, %v3306
        %v3315 = vadd.s32 %v3311, %v3313
        %v3316 = vadd.s32 %v3315, %v3305
        %v3317 = vadd.s32 %v3316, %v3307
        %v3318 = vand.u32 %v3295, 65535
        %v3319 = vshrl.u32 %v3295, 16
        %v3320 = vand.u32 %v3290, 65535
        %v3321 = vshrl.u32 %v3290, 16
        %v3322 = vmul.u32 %v3318, %v3320
        %v3323 = vmul.u32 %v3318, %v3321
        %v3324 = vmul.u32 %v3319, %v3320
        %v3325 = vmul.u32 %v3319, %v3321
        %v3326 = vshll.u32 %v3323, 16
        %v3327 = vshrl.u32 %v3323, 16
        %v3328 = vshll.u32 %v3324, 16
        %v3329 = vshrl.u32 %v3324, 16
        %vm3330 = vc.u32 %v3322, %v3326
        %v3331 = vsel %vm3330, 1, 0
        %v3332 = vadd.s32 %v3322, %v3326
        %v3333 = vadd.s32 %v3325, %v3331
        %vm3334 = vc.u32 %v3332, %v3328
        %v3335 = vsel %vm3334, 1, 0
        %v3336 = vadd.s32 %v3332, %v3328
        %v3337 = vadd.s32 %v3333, %v3335
        %v3338 = vadd.s32 %v3337, %v3327
        %v3339 = vadd.s32 %v3338, %v3329
        %v3340 = vmul.u32 %v3295, %v3286
        %v3341 = vadd.s32 %v3317, %v3336
        %vm3342 = vc.u32 %v3317, %v3336
        %v3343 = vadd.s32 %v3339, 1
        %v3344 = vsel %vm3342, %v3343, %v3339
        %v3345 = vadd.s32 %v3340, %v3344
        %v3346 = vadd.s32 %v3345, 536870912
        %v3347 = vshrl.u32 %v3346, 30
        %v3348 = vshll.u32 %v3347, 30
        %v3349 = vsub.s32 %v3345, %v3348
        %vm3350 = vcmp.lt.s32.totalorder %v3349, 0
        %v3351 = vsub.s32 0, %v3349
        %v3352 = vsel %vm3350, %v3351, %v3349
        %v3353 = vclz %v3352
        %v3354 = vsub.s32 %v3353, 2
        %vm3355 = vcmp.gt.s32.totalorder 0, %v3354
        %v3356 = vsel %vm3355, 0, %v3354
        %v3357 = vsub.s32 32, %v3356
        %v3358 = vshll.u32 %v3349, %v3356
        %v3359 = vshrl.u32 %v3341, %v3357
        %v3360 = vor.u32 %v3358, %v3359
        %v3361 = vsub.s32 4294967266, %v3356
        %v3362 = vadd.s32 %v3361, 127
        %v3363 = vshll.u32 %v3362, 23
        %v3364 = vor.u32 4788187, %v3363
        %v3365 = vand.u32 2147483647, %v3364
        %v3367 = vcvt.s32.f32 %v3360
        %v3368 = vmul.f32 %v3367, %v3365
        %v3369 = vxor.u32 %v3368, 2147483648
        %v3370 = vsel %vm3249, %v3369, %v3368
        %v3371 = vsub.s32 4, %v3347
        %v3372 = vsel %vm3249, %v3371, %v3347
        %v3373 = vsel %vm3248, %v2779, %v3370
        %v3374 = vsel %vm3248, 0, %v3372
        %v3375 = vmul.f32 %v3373, %v3373
        %v3376 = vmul.f32 %v3375, -0.001358992
        %v3377 = vadd.f32 %v3376, 0.041655596
        %v3378 = vmul.f32 %v3375, %v3377
        %v3379 = vadd.f32 %v3378, -0.4999988
        %v3380 = vmul.f32 %v3375, %v3379
        %v3381 = vadd.f32 1.0, %v3380
        %v3382 = vmul.f32 %v3373, %v3373
        %v3383 = vmul.f32 %v3382, -0.00019511016
        %v3384 = vadd.f32 %v3383, 0.008332121
        %v3385 = vmul.f32 %v3382, %v3384
        %v3386 = vadd.f32 %v3385, -0.16666654
        %v3387 = vmul.f32 %v3382, %v3386
        %v3388 = vadd.f32 %v3387, 1.0
        %v3389 = vmul.f32 %v3388, %v3373
        %vm3390 = vweird.f32 %v2779
        %v3391 = vadd.s32 %v3374, 3
        %v3392 = vand.u32 %v3391, 3
        %vm3393 = vcmp.lt.s32.totalorder %v3392, 2
        %vm3394 = vcmp.eq.s32.totalorder %v3392, 0
        %v3395 = vxor.u32 %v3389, 2147483648
        %v3396 = vsel %vm3394, %v3381, %v3395
        %vm3397 = vcmp.eq.s32.totalorder %v3392, 2
        %v3398 = vxor.u32 %v3381, 2147483648
        %v3399 = vsel %vm3397, %v3398, %v3389
        %v3400 = vsel %vm3393, %v3396, %v3399
        %v3401 = vsel %vm3390, nan, %v3400
        %v3402 = vand.u32 2147483647, %v2780
        %vm3403 = vcmp.le.f32.partialorder %v3402, 0.7853982
        %vm3404 = vcmp.lt.s32.totalorder %v2780, 0
        %v3405 = vand.u32 %v2780, 2139095040
        %v3406 = vshrl.u32 %v3405, 23
        %v3407 = vsub.s32 %v3406, 127
        %v3408 = vand.u32 2147483647, %v2780
        %v3409 = vand.u32 %v3408, 8388607
        %v3410 = vor.u32 %v3409, 8388608
        %v3411 = vsub.s32 0, %v3410
        %v3412 = vadd.s32 %v3407, 1
        %vm3413 = vcmp.gt.s32.totalorder %v3412, 0
        %v3414 = vsel %vm3413, %v3412, 0
        %v3415 = vshrl.u32 %v3414, 5
        %v3416 = vand.u32 %v3414, 31
        %v3417 = vsub.s32 32, %v3416
        %v3418 = vshrl.u32 683565275, %v3417
        %v3419 = vshll.u32 683565275, %v3416
        %v3420 = vshrl.u32 2475754826, %v3417
        %v3421 = vor.u32 %v3419, %v3420
        %v3422 = vshll.u32 2475754826, %v3416
        %v3423 = vshrl.u32 2131351028, %v3417
        %v3424 = vor.u32 %v3422, %v3423
        %v3425 = vshll.u32 2131351028, %v3416
        %v3426 = vshrl.u32 2102212464, %v3417
        %v3427 = vor.u32 %v3425, %v3426
        %v3428 = vshll.u32 2102212464, %v3416
        %v3429 = vshrl.u32 920167782, %v3417
        %v3430 = vor.u32 %v3428, %v3429
        %v3431 = vshll.u32 920167782, %v3416
        %v3432 = vshrl.u32 1326507024, %v3417
        %v3433 = vor.u32 %v3431, %v3432
        %vm3434 = vcmp.lt.s32.totalorder %v3415, 1
        %vm3435 = vcmp.lt.s32.totalorder %v3415, 2
        %vm3436 = vcmp.lt.s32.totalorder %v3415, 3
        %vm3437 = vcmp.lt.s32.totalorder %v3415, 4
        %v3438 = vsel %vm3434, %v3418, %v3421
        %v3439 = vsel %vm3437, %v3427, 2102212464
        %v3440 = vsel %vm3436, %v3424, %v3439
        %v3441 = vsel %vm3435, %v3438, %v3440
        %v3442 = vsel %vm3434, %v3421, %v3424
        %v3443 = vsel %vm3437, %v3430, 920167782
        %v3444 = vsel %vm3436, %v3427, %v3443
        %v3445 = vsel %vm3435, %v3442, %v3444
        %v3446 = vsel %vm3434, %v3424, %v3427
        %v3447 = vsel %vm3437, %v3433, 1326507024
        %v3448 = vsel %vm3436, %v3430, %v3447
        %v3449 = vsel %vm3435, %v3446, %v3448
        %v3450 = vshll.u32 %v3410, 8
        %v3451 = vand.u32 %v3450, 65535
        %v3452 = vshrl.u32 %v3450, 16
        %v3453 = vand.u32 %v3449, 65535
        %v3454 = vshrl.u32 %v3449, 16
        %v3455 = vmul.u32 %v3451, %v3453
        %v3456 = vmul.u32 %v3451, %v3454
        %v3457 = vmul.u32 %v3452, %v3453
        %v3458 = vmul.u32 %v3452, %v3454
        %v3459 = vshll.u32 %v3456, 16
        %v3460 = vshrl.u32 %v3456, 16
        %v3461 = vshll.u32 %v3457, 16
        %v3462 = vshrl.u32 %v3457, 16
        %vm3463 = vc.u32 %v3455, %v3459
        %v3464 = vsel %vm3463, 1, 0
        %v3465 = vadd.s32 %v3455, %v3459
        %v3466 = vadd.s32 %v3458, %v3464
        %vm3467 = vc.u32 %v3465, %v3461
        %v3468 = vsel %vm3467, 1, 0
        %v3469 = vadd.s32 %v3465, %v3461
        %v3470 = vadd.s32 %v3466, %v3468
        %v3471 = vadd.s32 %v3470, %v3460
        %v3472 = vadd.s32 %v3471, %v3462
        %v3473 = vand.u32 %v3450, 65535
        %v3474 = vshrl.u32 %v3450, 16
        %v3475 = vand.u32 %v3445, 65535
        %v3476 = vshrl.u32 %v3445, 16
        %v3477 = vmul.u32 %v3473, %v3475
        %v3478 = vmul.u32 %v3473, %v3476
        %v3479 = vmul.u32 %v3474, %v3475
        %v3480 = vmul.u32 %v3474, %v3476
        %v3481 = vshll.u32 %v3478, 16
        %v3482 = vshrl.u32 %v3478, 16
        %v3483 = vshll.u32 %v3479, 16
        %v3484 = vshrl.u32 %v3479, 16
        %vm3485 = vc.u32 %v3477, %v3481
        %v3486 = vsel %vm3485, 1, 0
        %v3487 = vadd.s32 %v3477, %v3481
        %v3488 = vadd.s32 %v3480, %v3486
        %vm3489 = vc.u32 %v3487, %v3483
        %v3490 = vsel %vm3489, 1, 0
        %v3491 = vadd.s32 %v3487, %v3483
        %v3492 = vadd.s32 %v3488, %v3490
        %v3493 = vadd.s32 %v3492, %v3482
        %v3494 = vadd.s32 %v3493, %v3484
        %v3495 = vmul.u32 %v3450, %v3441
        %v3496 = vadd.s32 %v3472, %v3491
        %vm3497 = vc.u32 %v3472, %v3491
        %v3498 = vadd.s32 %v3494, 1
        %v3499 = vsel %vm3497, %v3498, %v3494
        %v3500 = vadd.s32 %v3495, %v3499
        %v3501 = vadd.s32 %v3500, 536870912
        %v3502 = vshrl.u32 %v3501, 30
        %v3503 = vshll.u32 %v3502, 30
        %v3504 = vsub.s32 %v3500, %v3503
        %vm3505 = vcmp.lt.s32.totalorder %v3504, 0
        %v3506 = vsub.s32 0, %v3504
        %v3507 = vsel %vm3505, %v3506, %v3504
        %v3508 = vclz %v3507
        %v3509 = vsub.s32 %v3508, 2
        %vm3510 = vcmp.gt.s32.totalorder 0, %v3509
        %v3511 = vsel %vm3510, 0, %v3509
        %v3512 = vsub.s32 32, %v3511
        %v3513 = vshll.u32 %v3504, %v3511
        %v3514 = vshrl.u32 %v3496, %v3512
        %v3515 = vor.u32 %v3513, %v3514
        %v3516 = vsub.s32 4294967266, %v3511
        %v3517 = vadd.s32 %v3516, 127
        %v3518 = vshll.u32 %v3517, 23
        %v3519 = vor.u32 4788187, %v3518
        %v3520 = vand.u32 2147483647, %v3519
        %v3522 = vcvt.s32.f32 %v3515
        %v3523 = vmul.f32 %v3522, %v3520
        %v3524 = vxor.u32 %v3523, 2147483648
        %v3525 = vsel %vm3404, %v3524, %v3523
        %v3526 = vsub.s32 4, %v3502
        %v3527 = vsel %vm3404, %v3526, %v3502
        %v3528 = vsel %vm3403, %v2780, %v3525
        %v3529 = vsel %vm3403, 0, %v3527
        %v3530 = vmul.f32 %v3528, %v3528
        %v3531 = vmul.f32 %v3530, -0.001358992
        %v3532 = vadd.f32 %v3531, 0.041655596
        %v3533 = vmul.f32 %v3530, %v3532
        %v3534 = vadd.f32 %v3533, -0.4999988
        %v3535 = vmul.f32 %v3530, %v3534
        %v3536 = vadd.f32 1.0, %v3535
        %v3537 = vmul.f32 %v3528, %v3528
        %v3538 = vmul.f32 %v3537, -0.00019511016
        %v3539 = vadd.f32 %v3538, 0.008332121
        %v3540 = vmul.f32 %v3537, %v3539
        %v3541 = vadd.f32 %v3540, -0.16666654
        %v3542 = vmul.f32 %v3537, %v3541
        %v3543 = vadd.f32 %v3542, 1.0
        %v3544 = vmul.f32 %v3543, %v3528
        %vm3545 = vweird.f32 %v2780
        %v3546 = vadd.s32 %v3529, 3
        %v3547 = vand.u32 %v3546, 3
        %vm3548 = vcmp.lt.s32.totalorder %v3547, 2
        %vm3549 = vcmp.eq.s32.totalorder %v3547, 0
        %v3550 = vxor.u32 %v3544, 2147483648
        %v3551 = vsel %vm3549, %v3536, %v3550
        %vm3552 = vcmp.eq.s32.totalorder %v3547, 2
        %v3553 = vxor.u32 %v3536, 2147483648
        %v3554 = vsel %vm3552, %v3553, %v3544
        %v3555 = vsel %vm3548, %v3551, %v3554
        %v3556 = vsel %vm3545, nan, %v3555
        %v3557 = vand.u32 2147483647, %v2781
        %vm3558 = vcmp.le.f32.partialorder %v3557, 0.7853982
        %vm3559 = vcmp.lt.s32.totalorder %v2781, 0
        %v3560 = vand.u32 %v2781, 2139095040
        %v3561 = vshrl.u32 %v3560, 23
        %v3562 = vsub.s32 %v3561, 127
        %v3563 = vand.u32 2147483647, %v2781
        %v3564 = vand.u32 %v3563, 8388607
        %v3565 = vor.u32 %v3564, 8388608
        %v3566 = vsub.s32 0, %v3565
        %v3567 = vadd.s32 %v3562, 1
        %vm3568 = vcmp.gt.s32.totalorder %v3567, 0
        %v3569 = vsel %vm3568, %v3567, 0
        %v3570 = vshrl.u32 %v3569, 5
        %v3571 = vand.u32 %v3569, 31
        %v3572 = vsub.s32 32, %v3571
        %v3573 = vshrl.u32 683565275, %v3572
        %v3574 = vshll.u32 683565275, %v3571
        %v3575 = vshrl.u32 2475754826, %v3572
        %v3576 = vor.u32 %v3574, %v3575
        %v3577 = vshll.u32 2475754826, %v3571
        %v3578 = vshrl.u32 2131351028, %v3572
        %v3579 = vor.u32 %v3577, %v3578
        %v3580 = vshll.u32 2131351028, %v3571
        %v3581 = vshrl.u32 2102212464, %v3572
        %v3582 = vor.u32 %v3580, %v3581
        %v3583 = vshll.u32 2102212464, %v3571
        %v3584 = vshrl.u32 920167782, %v3572
        %v3585 = vor.u32 %v3583, %v3584
        %v3586 = vshll.u32 920167782, %v3571
        %v3587 = vshrl.u32 1326507024, %v3572
        %v3588 = vor.u32 %v3586, %v3587
        %vm3589 = vcmp.lt.s32.totalorder %v3570, 1
        %vm3590 = vcmp.lt.s32.totalorder %v3570, 2
        %vm3591 = vcmp.lt.s32.totalorder %v3570, 3
        %vm3592 = vcmp.lt.s32.totalorder %v3570, 4
        %v3593 = vsel %vm3589, %v3573, %v3576
        %v3594 = vsel %vm3592, %v3582, 2102212464
        %v3595 = vsel %vm3591, %v3579, %v3594
        %v3596 = vsel %vm3590, %v3593, %v3595
        %v3597 = vsel %vm3589, %v3576, %v3579
        %v3598 = vsel %vm3592, %v3585, 920167782
        %v3599 = vsel %vm3591, %v3582, %v3598
        %v3600 = vsel %vm3590, %v3597, %v3599
        %v3601 = vsel %vm3589, %v3579, %v3582
        %v3602 = vsel %vm3592, %v3588, 1326507024
        %v3603 = vsel %vm3591, %v3585, %v3602
        %v3604 = vsel %vm3590, %v3601, %v3603
        %v3605 = vshll.u32 %v3565, 8
        %v3606 = vand.u32 %v3605, 65535
        %v3607 = vshrl.u32 %v3605, 16
        %v3608 = vand.u32 %v3604, 65535
        %v3609 = vshrl.u32 %v3604, 16
        %v3610 = vmul.u32 %v3606, %v3608
        %v3611 = vmul.u32 %v3606, %v3609
        %v3612 = vmul.u32 %v3607, %v3608
        %v3613 = vmul.u32 %v3607, %v3609
        %v3614 = vshll.u32 %v3611, 16
        %v3615 = vshrl.u32 %v3611, 16
        %v3616 = vshll.u32 %v3612, 16
        %v3617 = vshrl.u32 %v3612, 16
        %vm3618 = vc.u32 %v3610, %v3614
        %v3619 = vsel %vm3618, 1, 0
        %v3620 = vadd.s32 %v3610, %v3614
        %v3621 = vadd.s32 %v3613, %v3619
        %vm3622 = vc.u32 %v3620, %v3616
        %v3623 = vsel %vm3622, 1, 0
        %v3624 = vadd.s32 %v3620, %v3616
        %v3625 = vadd.s32 %v3621, %v3623
        %v3626 = vadd.s32 %v3625, %v3615
        %v3627 = vadd.s32 %v3626, %v3617
        %v3628 = vand.u32 %v3605, 65535
        %v3629 = vshrl.u32 %v3605, 16
        %v3630 = vand.u32 %v3600, 65535
        %v3631 = vshrl.u32 %v3600, 16
        %v3632 = vmul.u32 %v3628, %v3630
        %v3633 = vmul.u32 %v3628, %v3631
        %v3634 = vmul.u32 %v3629, %v3630
        %v3635 = vmul.u32 %v3629, %v3631
        %v3636 = vshll.u32 %v3633, 16
        %v3637 = vshrl.u32 %v3633, 16
        %v3638 = vshll.u32 %v3634, 16
        %v3639 = vshrl.u32 %v3634, 16
        %vm3640 = vc.u32 %v3632, %v3636
        %v3641 = vsel %vm3640, 1, 0
        %v3642 = vadd.s32 %v3632, %v3636
        %v3643 = vadd.s32 %v3635, %v3641
        %vm3644 = vc.u32 %v3642, %v3638
        %v3645 = vsel %vm3644, 1, 0
        %v3646 = vadd.s32 %v3642, %v3638
        %v3647 = vadd.s32 %v3643, %v3645
        %v3648 = vadd.s32 %v3647, %v3637
        %v3649 = vadd.s32 %v3648, %v3639
        %v3650 = vmul.u32 %v3605, %v3596
        %v3651 = vadd.s32 %v3627, %v3646
        %vm3652 = vc.u32 %v3627, %v3646
        %v3653 = vadd.s32 %v3649, 1
        %v3654 = vsel %vm3652, %v3653, %v3649
        %v3655 = vadd.s32 %v3650, %v3654
        %v3656 = vadd.s32 %v3655, 536870912
        %v3657 = vshrl.u32 %v3656, 30
        %v3658 = vshll.u32 %v3657, 30
        %v3659 = vsub.s32 %v3655, %v3658
        %vm3660 = vcmp.lt.s32.totalorder %v3659, 0
        %v3661 = vsub.s32 0, %v3659
        %v3662 = vsel %vm3660, %v3661, %v3659
        %v3663 = vclz %v3662
        %v3664 = vsub.s32 %v3663, 2
        %vm3665 = vcmp.gt.s32.totalorder 0, %v3664
        %v3666 = vsel %vm3665, 0, %v3664
        %v3667 = vsub.s32 32, %v3666
        %v3668 = vshll.u32 %v3659, %v3666
        %v3669 = vshrl.u32 %v3651, %v3667
        %v3670 = vor.u32 %v3668, %v3669
        %v3671 = vsub.s32 4294967266, %v3666
        %v3672 = vadd.s32 %v3671, 127
        %v3673 = vshll.u32 %v3672, 23
        %v3674 = vor.u32 4788187, %v3673
        %v3675 = vand.u32 2147483647, %v3674
        %v3677 = vcvt.s32.f32 %v3670
        %v3678 = vmul.f32 %v3677, %v3675
        %v3679 = vxor.u32 %v3678, 2147483648
        %v3680 = vsel %vm3559, %v3679, %v3678
        %v3681 = vsub.s32 4, %v3657
        %v3682 = vsel %vm3559, %v3681, %v3657
        %v3683 = vsel %vm3558, %v2781, %v3680
        %v3684 = vsel %vm3558, 0, %v3682
        %v3685 = vmul.f32 %v3683, %v3683
        %v3686 = vmul.f32 %v3685, -0.001358992
        %v3687 = vadd.f32 %v3686, 0.041655596
        %v3688 = vmul.f32 %v3685, %v3687
        %v3689 = vadd.f32 %v3688, -0.4999988
        %v3690 = vmul.f32 %v3685, %v3689
        %v3691 = vadd.f32 1.0, %v3690
        %v3692 = vmul.f32 %v3683, %v3683
        %v3693 = vmul.f32 %v3692, -0.00019511016
        %v3694 = vadd.f32 %v3693, 0.008332121
        %v3695 = vmul.f32 %v3692, %v3694
        %v3696 = vadd.f32 %v3695, -0.16666654
        %v3697 = vmul.f32 %v3692, %v3696
        %v3698 = vadd.f32 %v3697, 1.0
        %v3699 = vmul.f32 %v3698, %v3683
        %vm3700 = vweird.f32 %v2781
        %v3701 = vadd.s32 %v3684, 3
        %v3702 = vand.u32 %v3701, 3
        %vm3703 = vcmp.lt.s32.totalorder %v3702, 2
        %vm3704 = vcmp.eq.s32.totalorder %v3702, 0
        %v3705 = vxor.u32 %v3699, 2147483648
        %v3706 = vsel %vm3704, %v3691, %v3705
        %vm3707 = vcmp.eq.s32.totalorder %v3702, 2
        %v3708 = vxor.u32 %v3691, 2147483648
        %v3709 = vsel %vm3707, %v3708, %v3699
        %v3710 = vsel %vm3703, %v3706, %v3709
        %v3711 = vsel %vm3700, nan, %v3710
        %v3712 = vmul.f32 %v2774, %v3401
        %v3713 = vmul.f32 %v2776, %v3556
        %v3714 = vmul.f32 %v2778, %v3711
        %v3715 = vld [vmem:[%s7] sm:$0x7]
        %v3716 = vld [vmem:[%s8] sm:$0x7]
        %v3718 = vsel %vm1437, %v3715, 0
        %v3721 = vsel %vm1447, %v3246, 0
        %3723 = vmatpush.msra.mxu0 0.0
        %3724 = vmatpush.msra.mxu0 0.0
        %3725 = vmatpush.msra.mxu0 0.0
        %3726 = vmatpush.msra.mxu0 0.0
        %3727 = vmatpush.msra.mxu0 0.0
        %3728 = vmatpush.msra.mxu0 0.0
        %3729 = vmatpush.msra.mxu0 0.0
        %3730 = vmatpush.msra.mxu0 0.0
        %3731 = vmatpush.msra.mxu0 0.0
        %3732 = vmatpush.msra.mxu0 0.0
        %3733 = vmatpush.msra.mxu0 0.0
        %3734 = vmatpush.msra.mxu0 0.0
        %3735 = vmatpush.msra.mxu0 0.0
        %3736 = vmatpush.msra.mxu0 %v3721
        %3737 = vmatpush.msra.mxu0 %v3245
        %3738 = vmatpush.msra.mxu0 %v3244
        %3739 = vmatmul.f32.gmra.mxu0 %v3718
        %v3740 = vpop.f32.mrf.mxu0
        %v3741 = vadd.f32 0.0, %v3740
        %3742 = vdwg.mxu0
        %v3744 = vsel %vm1437, %v3716, 0
        %v3747 = vsel %vm1447, %v3714, 0
        %3749 = vmatpush.msra.mxu0 0.0
        %3750 = vmatpush.msra.mxu0 0.0
        %3751 = vmatpush.msra.mxu0 0.0
        %3752 = vmatpush.msra.mxu0 0.0
        %3753 = vmatpush.msra.mxu0 0.0
        %3754 = vmatpush.msra.mxu0 0.0
        %3755 = vmatpush.msra.mxu0 0.0
        %3756 = vmatpush.msra.mxu0 0.0
        %3757 = vmatpush.msra.mxu0 0.0
        %3758 = vmatpush.msra.mxu0 0.0
        %3759 = vmatpush.msra.mxu0 0.0
        %3760 = vmatpush.msra.mxu0 0.0
        %3761 = vmatpush.msra.mxu0 0.0
        %3762 = vmatpush.msra.mxu0 %v3747
        %3763 = vmatpush.msra.mxu0 %v3713
        %3764 = vmatpush.msra.mxu0 %v3712
        %3765 = vmatmul.f32.gmra.mxu0 %v3744
        %v3766 = vpop.f32.mrf.mxu0
        %v3767 = vadd.f32 0.0, %v3766
        %3768 = vdwg.mxu0
        %v3769 = vsub.f32 %v3741, %v3767
        %v3770 = vld [vmem:[%s9] sm:$0x7]
        %3772 = vset.pattern.permute.xlu0 0
        %3773 = vperm.xlu0 %3772, %v3770
        %v3774 = vpop.permute.xlu0 %3773
        %v3776 = vadd.f32 %v3769, %v3774
        %3777 = vst [vmem:[%s408] sm:$0x7] %v3776
        %3778 = vmatpush.msra.mxu0 0.0
        %3779 = vmatpush.msra.mxu0 0.0
        %3780 = vmatpush.msra.mxu0 0.0
        %3781 = vmatpush.msra.mxu0 0.0
        %3782 = vmatpush.msra.mxu0 0.0
        %3783 = vmatpush.msra.mxu0 0.0
        %3784 = vmatpush.msra.mxu0 0.0
        %3785 = vmatpush.msra.mxu0 0.0
        %3786 = vmatpush.msra.mxu0 0.0
        %3787 = vmatpush.msra.mxu0 0.0
        %3788 = vmatpush.msra.mxu0 0.0
        %3789 = vmatpush.msra.mxu0 0.0
        %3790 = vmatpush.msra.mxu0 0.0
        %3791 = vmatpush.msra.mxu0 %v3721
        %3792 = vmatpush.msra.mxu0 %v3245
        %3793 = vmatpush.msra.mxu0 %v3244
        %3794 = vmatmul.f32.gmra.mxu0 %v3744
        %v3795 = vpop.f32.mrf.mxu0
        %v3796 = vadd.f32 0.0, %v3795
        %3797 = vdwg.mxu0
        %3798 = vmatpush.msra.mxu0 0.0
        %3799 = vmatpush.msra.mxu0 0.0
        %3800 = vmatpush.msra.mxu0 0.0
        %3801 = vmatpush.msra.mxu0 0.0
        %3802 = vmatpush.msra.mxu0 0.0
        %3803 = vmatpush.msra.mxu0 0.0
        %3804 = vmatpush.msra.mxu0 0.0
        %3805 = vmatpush.msra.mxu0 0.0
        %3806 = vmatpush.msra.mxu0 0.0
        %3807 = vmatpush.msra.mxu0 0.0
        %3808 = vmatpush.msra.mxu0 0.0
        %3809 = vmatpush.msra.mxu0 0.0
        %3810 = vmatpush.msra.mxu0 0.0
        %3811 = vmatpush.msra.mxu0 %v3747
        %3812 = vmatpush.msra.mxu0 %v3713
        %3813 = vmatpush.msra.mxu0 %v3712
        %3814 = vmatmul.f32.gmra.mxu0 %v3718
        %v3815 = vpop.f32.mrf.mxu0
        %v3816 = vadd.f32 %v3796, %v3815
        %3817 = vdwg.mxu0
        %v3818 = vld [vmem:[%s10] sm:$0x7]
        %3820 = vset.pattern.permute.xlu0 0
        %3821 = vperm.xlu0 %3820, %v3818
        %v3822 = vpop.permute.xlu0 %3821
        %v3824 = vadd.f32 %v3816, %v3822
        %3825 = vst [vmem:[%s415] sm:$0x7] %v3824
        %s3826 = sand.u32 %s274, 1
        %s3827 = scalar_lea.sflag [#allocation3], %s3826
        %s3828 = sand.u32 %s274, 1
        %s3829 = smul.addr %s3828, 4
        %s3830 = scalar_lea.vmem [#allocation2], %s3829
        %s3831 = sand.u32 %s300, 1
        %s3832 = scalar_lea.sflag [#allocation5], %s3831
        %s3833 = sand.u32 %s300, 1
        %s3834 = smul.addr %s3833, 4
        %s3835 = scalar_lea.vmem [#allocation4], %s3834
        // Predicated region
        $region65: #{tpu_custom_call.1} parent=63 // pred_check
          %p3836 = pneg %p284
        $region66: #{tpu_custom_call.1} parent=63 // pred_check_branch
          %3838 = sbr.rel (%p3836) target = $region68
        $region67: #{tpu_custom_call.1} parent=63 // pred_region
          %3840 = vsyncadd %s3827, 0
          %s3841 = smul.addr %s30, 4
          %s3842 = scalar_lea.hbm %s11, %s3841
          %s3844 = sshll.u32 %s3830, 4
          %s3845 = int_to_ptr.vmem [resolvable:$true] %s3844
          %s3846 = sshll.u32 %s3842, 4
          %s3847 = int_to_ptr.hbm [resolvable:$true] %s3846
          %3849 = dma.vmem_to_hbm [thread:$0]  %s3845, 64, %s3847, %s3827
        $region68: #{tpu_custom_call.1} parent=63 // pred_fallthru
          _
        // Predicated region
        $region69: #{tpu_custom_call.1} parent=63 // pred_check
          %p3850 = pneg %p310
        $region70: #{tpu_custom_call.1} parent=63 // pred_check_branch
          %3852 = sbr.rel (%p3850) target = $region72
        $region71: #{tpu_custom_call.1} parent=63 // pred_region
          %3854 = vsyncadd %s3832, 0
          %s3855 = smul.addr %s30, 4
          %s3856 = scalar_lea.hbm %s12, %s3855
          %s3858 = sshll.u32 %s3835, 4
          %s3859 = int_to_ptr.vmem [resolvable:$true] %s3858
          %s3860 = sshll.u32 %s3856, 4
          %s3861 = int_to_ptr.hbm [resolvable:$true] %s3860
          %3863 = dma.vmem_to_hbm [thread:$0]  %s3859, 64, %s3861, %s3832
        $region72: #{tpu_custom_call.1} parent=63 // pred_fallthru
          _
      $region64: #{tpu_custom_call.1} parent=5 // pred_fallthru
        _
      %p3864 = scmp.le.s32.totalorder 2, %s25
      // Predicated region
      $region73: #{tpu_custom_call.1} parent=5 // pred_check
        %p3865 = pneg %p3864
      $region74: #{tpu_custom_call.1} parent=5 // pred_check_branch
        %3867 = sbr.rel (%p3865) target = $region76
      $region75: #{tpu_custom_call.1} parent=5 // pred_region
        %s3868 = ssub.s32 %s25, 2
        // Predicated region
        $region77: #{tpu_custom_call.1} parent=75 // pred_check
          %p3869 = pneg %p290
        $region78: #{tpu_custom_call.1} parent=75 // pred_check_branch
          %3871 = sbr.rel (%p3869) target = $region80
        $region79: #{tpu_custom_call.1} parent=75 // pred_region
          %s3872 = sand.u32 %s275, 1
          %s3873 = scalar_lea.sflag [#allocation3], %s3872
          %s3874 = sand.u32 %s275, 1
          %s3875 = smul.addr %s3874, 4
          %s3876 = scalar_lea.vmem [#allocation2], %s3875
          %3878 = dma.done %s3873, 64
        $region80: #{tpu_custom_call.1} parent=75 // pred_fallthru
          _
        // Predicated region
        $region81: #{tpu_custom_call.1} parent=75 // pred_check
          %p3879 = pneg %p316
        $region82: #{tpu_custom_call.1} parent=75 // pred_check_branch
          %3881 = sbr.rel (%p3879) target = $region84
        $region83: #{tpu_custom_call.1} parent=75 // pred_region
          %s3882 = sand.u32 %s301, 1
          %s3883 = scalar_lea.sflag [#allocation5], %s3882
          %s3884 = sand.u32 %s301, 1
          %s3885 = smul.addr %s3884, 4
          %s3886 = scalar_lea.vmem [#allocation4], %s3885
          %3888 = dma.done %s3883, 64
        $region84: #{tpu_custom_call.1} parent=75 // pred_fallthru
          _
      $region76: #{tpu_custom_call.1} parent=5 // pred_fallthru
        _
    $region6: #{tpu_custom_call.1} parent=1 // loop_footer
      %s29 = sadd.s32 1, %s25
    $region7: #{tpu_custom_call.1} parent=1 // loop_footer_branch
      %24 = sbr.rel target = $region3
    $region8: #{tpu_custom_call.1} parent=1 // loop_exit
      _
    %3889 = vsyncpa [#allocation3], 1
    %s3890 = scalar_lea.sflag [#allocation3], 1
    %3891 = vsyncpa %s3890, 1
    %3892 = vsyncpa [#allocation5], 1
    %s3893 = scalar_lea.sflag [#allocation5], 1
    %3894 = vsyncpa %s3893, 1

</llo_original>
